<compile_context>
chip_gen: v5e
topology: v5e:2x2
jax: 0.10.0
libtpu: 0.0.40
codegen_flags: <defaults>
</compile_context>

<pallas_src>
import functools
import math

import jax
import jax.numpy as jnp
from jax.experimental import pallas as pl
from jax.experimental.pallas import tpu as pltpu


# ----------------------------------------------------------------------------
# Fused kernel: one grid step processes a (Bblk, N, d) batch tile through all
# ntdvp * nrep TDVP applications plus the global residual + L2-norm epilogue.
# ----------------------------------------------------------------------------
def _multi_tdvp_kernel(coef_ref, x_ref, a2_ref, a2t_ref, bl_ref, br_ref,
                       o_ref, *, ntdvp, nrep, N, d, D, scale, eps, activation,
                       residual, out_norm, global_residual):
    Bb = x_ref.shape[0]
    BN = Bb * N
    x0 = x_ref[...]                                   # (Bb, N, d) original inputs
    ident = jnp.eye(D, dtype=jnp.float32)
    ident_b1 = jnp.broadcast_to(ident, (Bb, 1, D, D))

    def bmm(a, b):                                    # batched (BN, D, D) matmul
        return jnp.einsum("bij,bjk->bik", a, b,
                          preferred_element_type=jnp.float32)

    x = x0
    for layer in range(ntdvp):                        # static unroll
        A2 = a2_ref[layer]                            # (d, D*D)
        A2T = a2t_ref[layer]                          # (D*D, d)
        bl_col = bl_ref[layer][None, None]            # (1, 1, D, 1)
        br_row = br_ref[layer][None, None]            # (1, 1, 1, D)
        for _ in range(nrep):                         # static unroll
            # Site transfer matrices M[b,n] = sum_i x[b,n,i] * A[i]
            M = jnp.dot(x.reshape(BN, d), A2,
                        preferred_element_type=jnp.float32)
            M = M.reshape(Bb, N, D, D)

            # Exclusive prefix products P[:,n] = M[:,0] @ ... @ M[:,n-1]
            # and suffix products       S[:,n] = M[:,n+1] @ ... @ M[:,N-1]
            # via log-depth doubling scans (critical path O(log N)).
            if N > 1:
                P = jnp.concatenate([ident_b1, M[:, :N - 1]], axis=1)
                S = jnp.concatenate([M[:, 1:], ident_b1], axis=1)
            else:
                P = ident_b1
                S = ident_b1
            off = 1
            while off < N:
                pad = jnp.broadcast_to(ident, (Bb, off, D, D))
                sh_p = jnp.concatenate([pad, P[:, :N - off]], axis=1)
                P = bmm(sh_p.reshape(BN, D, D),
                        P.reshape(BN, D, D)).reshape(Bb, N, D, D)
                sh_s = jnp.concatenate([S[:, off:], pad], axis=1)
                S = bmm(S.reshape(BN, D, D),
                        sh_s.reshape(BN, D, D)).reshape(Bb, N, D, D)
                off *= 2

            # L[b,n,:] = bl @ P[b,n]     (contract the sublane axis)
            # R[b,n,:] = S[b,n] @ br^T   (contract the lane axis)
            L = jnp.sum(bl_col * P, axis=2)           # (Bb, N, D)
            R = jnp.sum(S * br_row, axis=3)           # (Bb, N, D)

            # Single-site effective output: y[b,n,i] = L[b,n]^T A[i] R[b,n]
            T = L[:, :, :, None] * R[:, :, None, :]   # (Bb, N, D, D)
            y = jnp.dot(T.reshape(BN, D * D), A2T,
                        preferred_element_type=jnp.float32)
            y = y.reshape(Bb, N, d)

            if scale != 1.0:
                y = y * scale
            if activation == "relu":
                y = jnp.maximum(y, 0.0)
            elif activation == "tanh":
                y = jnp.tanh(y)
            if residual:
                y = y + x
            if out_norm:
                y = y * jax.lax.rsqrt(
                    jnp.sum(y * y, axis=-1, keepdims=True) + eps)
            x = y

    if global_residual:
        x = x + x0 * coef_ref[0]
        # Matches torch: divide by the exact L2 norm over dim=2 (no eps).
        x = x * jax.lax.rsqrt(jnp.sum(x * x, axis=-1, keepdims=True))

    o_ref[...] = x


def _pick_batch_tiling(B, bblk_cap=256):
    """Batch-tile size and #grid steps.  >= 2 steps (when B >= 2) keeps both
    v7x TensorCores busy via the 'parallel' grid axis; the cap keeps each
    step's working set comfortably under v7x's 64 MiB VMEM at scaled shapes."""
    if B <= 1:
        return max(B, 1), 1
    n_tiles = max(2, -(-B // bblk_cap))
    bblk = -(-B // n_tiles)
    n_tiles = -(-B // bblk)
    return bblk, n_tiles


# ----------------------------------------------------------------------------
# MultiTDVP wrapper: stacks per-layer params, picks the batch tiling, and
# issues a single pallas_call for the whole forward pass.
# ----------------------------------------------------------------------------
def multi_tdvp_forward(inputs, params, cfg):
    B, N, d = inputs.shape
    D = cfg["Dtdvp"]
    ntdvp, nrep = cfg["ntdvp"], cfg["nrep"]

    # Precompute flattened cores once (outside the kernel), stacked per layer.
    A2 = jnp.stack([A.reshape(d, D * D) for (A, _, _) in params["tdvps"]])
    A2T = jnp.stack([A.reshape(d, D * D).T for (A, _, _) in params["tdvps"]])
    BL = jnp.stack([bl.reshape(D, 1) for (_, bl, _) in params["tdvps"]])
    BR = jnp.stack([br.reshape(1, D) for (_, _, br) in params["tdvps"]])
    coef = params["global_res_coef"].reshape(1).astype(jnp.float32)

    bblk, n_tiles = _pick_batch_tiling(B)
    Bpad = bblk * n_tiles
    x = inputs
    if Bpad != B:
        x = jnp.pad(inputs, ((0, Bpad - B), (0, 0), (0, 0)))

    global_residual = bool(cfg["residual"]) and (ntdvp * nrep > 1)
    kernel = functools.partial(
        _multi_tdvp_kernel,
        ntdvp=ntdvp, nrep=nrep, N=N, d=d, D=D,
        scale=float(cfg["scale"]), eps=float(cfg["eps_tdvp"]),
        activation=cfg["activation"], residual=bool(cfg["residual"]),
        out_norm=bool(cfg["out_norm"]), global_residual=global_residual)

    out = pl.pallas_call(
        kernel,
        out_shape=jax.ShapeDtypeStruct((Bpad, N, d), jnp.float32),
        grid_spec=pltpu.PrefetchScalarGridSpec(
            num_scalar_prefetch=0,
            grid=(n_tiles,),
            in_specs=[
                pl.BlockSpec(memory_space=pltpu.MemorySpace.SMEM),      # coef
                pl.BlockSpec((bblk, N, d), lambda b: (b, 0, 0)),        # x
                pl.BlockSpec((ntdvp, d, D * D), lambda b: (0, 0, 0)),   # A2
                pl.BlockSpec((ntdvp, D * D, d), lambda b: (0, 0, 0)),   # A2^T
                pl.BlockSpec((ntdvp, D, 1), lambda b: (0, 0, 0)),       # bl
                pl.BlockSpec((ntdvp, 1, D), lambda b: (0, 0, 0)),       # br
            ],
            out_specs=pl.BlockSpec((bblk, N, d), lambda b: (b, 0, 0)),
        ),
        compiler_params=pltpu.CompilerParams(
            dimension_semantics=("parallel",)),
    )(coef, x, A2, A2T, BL, BR)
    return out[:B]


def init_params(key, cfg):
    d, D = cfg["feature_dim"], cfg["Dtdvp"]
    tdvps = []
    # mirrors `for i in range(ntdvp, 0, -1)` -- identical config per layer
    for i in range(cfg["ntdvp"], 0, -1):
        key, k1 = jax.random.split(key)
        # near-identity MPS core keeps the environment chain well conditioned
        A = (jnp.tile(jnp.eye(D, dtype=jnp.float32)[None], (d, 1, 1))
             + cfg["cinit"] * jax.random.normal(k1, (d, D, D), jnp.float32))
        bl = jnp.full((1, D), 1.0 / math.sqrt(D), jnp.float32)
        br = jnp.full((1, D), 1.0 / math.sqrt(D), jnp.float32)
        tdvps.append((A, bl, br))
    params = {"tdvps": tdvps,
              "global_res_coef": jnp.array([1.0], jnp.float32)}
    return params


if __name__ == "__main__":
    cfg = dict(
        ti=True, ntdvp=2, nrep=2, mask_off=False, residual=True, ka=1.0,
        remove_trace=False, scale=1.0, cyclic=False,
        input_dim=8, feature_dim=4, Dtdvp=8,
        out_norm=True, activation="relu", mode="single", eps_tdvp=1e-6,
        trainable_boundary=False, cinit=0.1, cuda=False,
    )

    key = jax.random.PRNGKey(0)
    key, kx = jax.random.split(key)
    B, N, d = 2, cfg["input_dim"], cfg["feature_dim"]
    x = jax.random.normal(kx, (B, N, d), jnp.float32)

    params = init_params(key, cfg)

    out = multi_tdvp_forward(x, params, cfg)
    out = jax.block_until_ready(out)
    assert out.shape == (B, N, d)
    assert bool(jnp.all(jnp.isfinite(out)))
    print("KERNEL_OK")
</pallas_src>

<mosaic_0001>
module attributes {stable_mosaic.version = 11 : i64} {
  func.func @_multi_tdvp_kernel(%arg0: i32, %arg1: memref<1xf32, #tpu.memory_space<smem>>, %arg2: memref<1x8x4xf32, #tpu.memory_space<vmem>>, %arg3: memref<2x4x64xf32, #tpu.memory_space<vmem>>, %arg4: memref<2x64x4xf32, #tpu.memory_space<vmem>>, %arg5: memref<2x8x1xf32, #tpu.memory_space<vmem>>, %arg6: memref<2x1x8xf32, #tpu.memory_space<vmem>>, %arg7: memref<1x8x4xf32, #tpu.memory_space<vmem>>) attributes {dimension_semantics = [#tpu.dimension_semantics<parallel>], iteration_bounds = array<i64: 2>, scalar_prefetch = 0 : i64, scratch_operands = 0 : i64, tpu.core_type = #tpu.core_type<tc>, window_params = [{transform_indices = @transform_0, window_bounds = array<i64: 1>}, {transform_indices = @transform_1, window_bounds = array<i64: 1, 8, 4>}, {pipeline_mode = #tpu.pipeline_mode<synchronous>, transform_indices = @transform_2, window_bounds = array<i64: 2, 4, 64>}, {pipeline_mode = #tpu.pipeline_mode<synchronous>, transform_indices = @transform_3, window_bounds = array<i64: 2, 64, 4>}, {pipeline_mode = #tpu.pipeline_mode<synchronous>, transform_indices = @transform_4, window_bounds = array<i64: 2, 8, 1>}, {pipeline_mode = #tpu.pipeline_mode<synchronous>, transform_indices = @transform_5, window_bounds = array<i64: 2, 1, 8>}, {transform_indices = @transform_6, window_bounds = array<i64: 1, 8, 4>}]} {
    %c0 = arith.constant 0 : index
    %c0_0 = arith.constant 0 : index
    %c0_1 = arith.constant 0 : index
    %0 = vector.load %arg2[%c0, %c0_0, %c0_1] : memref<1x8x4xf32, #tpu.memory_space<vmem>>, vector<1x8x4xf32>
    %1 = tpu.iota {dimensions = array<i32: 0>} : vector<8x8xi32>
    %2 = tpu.iota {dimensions = array<i32: 1>} : vector<8x8xi32>
    %c0_i32 = arith.constant 0 : i32
    %3 = vector.broadcast %c0_i32 : i32 to vector<8x8xi32>
    %4 = arith.addi %1, %3 : vector<8x8xi32>
    %5 = arith.cmpi eq, %4, %2 : vector<8x8xi32>
    %6 = arith.extui %5 : vector<8x8xi1> to vector<8x8xi32>
    %7 = arith.sitofp %6 : vector<8x8xi32> to vector<8x8xf32>
    %8 = vector.shape_cast %7 : vector<8x8xf32> to vector<1x1x8x8xf32>
    %c0_2 = arith.constant 0 : index
    %c0_3 = arith.constant 0 : index
    %c0_4 = arith.constant 0 : index
    %9 = vector.load %arg3[%c0_2, %c0_3, %c0_4] : memref<2x4x64xf32, #tpu.memory_space<vmem>>, vector<1x4x64xf32>
    %10 = vector.shape_cast %9 : vector<1x4x64xf32> to vector<4x64xf32>
    %c0_5 = arith.constant 0 : index
    %c0_6 = arith.constant 0 : index
    %c0_7 = arith.constant 0 : index
    %11 = vector.load %arg4[%c0_5, %c0_6, %c0_7] : memref<2x64x4xf32, #tpu.memory_space<vmem>>, vector<1x64x4xf32>
    %12 = vector.shape_cast %11 : vector<1x64x4xf32> to vector<64x4xf32>
    %c0_8 = arith.constant 0 : index
    %c0_9 = arith.constant 0 : index
    %c0_10 = arith.constant 0 : index
    %13 = vector.load %arg5[%c0_8, %c0_9, %c0_10] : memref<2x8x1xf32, #tpu.memory_space<vmem>>, vector<1x8x1xf32>
    %14 = vector.shape_cast %13 : vector<1x8x1xf32> to vector<8x1xf32>
    %15 = vector.shape_cast %14 : vector<8x1xf32> to vector<1x1x8x1xf32>
    %c0_11 = arith.constant 0 : index
    %c0_12 = arith.constant 0 : index
    %c0_13 = arith.constant 0 : index
    %16 = vector.load %arg6[%c0_11, %c0_12, %c0_13] : memref<2x1x8xf32, #tpu.memory_space<vmem>>, vector<1x1x8xf32>
    %17 = vector.shape_cast %16 : vector<1x1x8xf32> to vector<1x8xf32>
    %18 = vector.shape_cast %17 : vector<1x8xf32> to vector<1x1x1x8xf32>
    %19 = vector.shape_cast %0 : vector<1x8x4xf32> to vector<8x4xf32>
    %cst = arith.constant dense<0.000000e+00> : vector<8x64xf32>
    %20 = tpu.matmul %19, %10, %cst {dimension_numbers = #tpu.dot_dimension_numbers<[1], [0], [0], [1], [0, 0, 1, 1], [], []>} : vector<8x4xf32>, vector<4x64xf32>, vector<8x64xf32> -> vector<8x64xf32>
    %21 = vector.shape_cast %20 : vector<8x64xf32> to vector<1x8x8x8xf32>
    %22 = vector.extract_strided_slice %21 {offsets = [0, 0, 0, 0], sizes = [1, 7, 8, 8], strides = [1, 1, 1, 1]} : vector<1x8x8x8xf32> to vector<1x7x8x8xf32>
    %23 = tpu.concatenate %8, %22 in 1 : vector<1x1x8x8xf32>, vector<1x7x8x8xf32> -> vector<1x8x8x8xf32>
    %24 = vector.extract_strided_slice %21 {offsets = [0, 1, 0, 0], sizes = [1, 7, 8, 8], strides = [1, 1, 1, 1]} : vector<1x8x8x8xf32> to vector<1x7x8x8xf32>
    %25 = tpu.concatenate %24, %8 in 1 : vector<1x7x8x8xf32>, vector<1x1x8x8xf32> -> vector<1x8x8x8xf32>
    %26 = vector.shape_cast %7 : vector<8x8xf32> to vector<1x1x8x8xf32>
    %27 = vector.extract_strided_slice %23 {offsets = [0, 0, 0, 0], sizes = [1, 7, 8, 8], strides = [1, 1, 1, 1]} : vector<1x8x8x8xf32> to vector<1x7x8x8xf32>
    %28 = tpu.concatenate %26, %27 in 1 : vector<1x1x8x8xf32>, vector<1x7x8x8xf32> -> vector<1x8x8x8xf32>
    %29 = vector.shape_cast %28 : vector<1x8x8x8xf32> to vector<8x8x8xf32>
    %30 = vector.shape_cast %23 : vector<1x8x8x8xf32> to vector<8x8x8xf32>
    "tpu.trace_start"() <{level = 10 : i32, message = "bij,bjk->bik"}> : () -> ()
    %cst_14 = arith.constant dense<0.000000e+00> : vector<8x8x8xf32>
    %31 = tpu.matmul %29, %30, %cst_14 {dimension_numbers = #tpu.dot_dimension_numbers<[2], [1], [1], [2], [0, 0, 0, 1, 1, 2], [0], [0]>} : vector<8x8x8xf32>, vector<8x8x8xf32>, vector<8x8x8xf32> -> vector<8x8x8xf32>
    "tpu.trace_stop"() : () -> ()
    %32 = vector.shape_cast %31 : vector<8x8x8xf32> to vector<1x8x8x8xf32>
    %33 = vector.extract_strided_slice %25 {offsets = [0, 1, 0, 0], sizes = [1, 7, 8, 8], strides = [1, 1, 1, 1]} : vector<1x8x8x8xf32> to vector<1x7x8x8xf32>
    %34 = tpu.concatenate %33, %26 in 1 : vector<1x7x8x8xf32>, vector<1x1x8x8xf32> -> vector<1x8x8x8xf32>
    %35 = vector.shape_cast %25 : vector<1x8x8x8xf32> to vector<8x8x8xf32>
    %36 = vector.shape_cast %34 : vector<1x8x8x8xf32> to vector<8x8x8xf32>
    "tpu.trace_start"() <{level = 10 : i32, message = "bij,bjk->bik"}> : () -> ()
    %cst_15 = arith.constant dense<0.000000e+00> : vector<8x8x8xf32>
    %37 = tpu.matmul %35, %36, %cst_15 {dimension_numbers = #tpu.dot_dimension_numbers<[2], [1], [1], [2], [0, 0, 0, 1, 1, 2], [0], [0]>} : vector<8x8x8xf32>, vector<8x8x8xf32>, vector<8x8x8xf32> -> vector<8x8x8xf32>
    "tpu.trace_stop"() : () -> ()
    %38 = vector.shape_cast %37 : vector<8x8x8xf32> to vector<1x8x8x8xf32>
    %39 = vector.shape_cast %7 : vector<8x8xf32> to vector<1x1x8x8xf32>
    %40 = vector.broadcast %39 : vector<1x1x8x8xf32> to vector<1x2x8x8xf32>
    %41 = vector.extract_strided_slice %32 {offsets = [0, 0, 0, 0], sizes = [1, 6, 8, 8], strides = [1, 1, 1, 1]} : vector<1x8x8x8xf32> to vector<1x6x8x8xf32>
    %42 = tpu.concatenate %40, %41 in 1 : vector<1x2x8x8xf32>, vector<1x6x8x8xf32> -> vector<1x8x8x8xf32>
    %43 = vector.shape_cast %42 : vector<1x8x8x8xf32> to vector<8x8x8xf32>
    %44 = vector.shape_cast %32 : vector<1x8x8x8xf32> to vector<8x8x8xf32>
    "tpu.trace_start"() <{level = 10 : i32, message = "bij,bjk->bik"}> : () -> ()
    %cst_16 = arith.constant dense<0.000000e+00> : vector<8x8x8xf32>
    %45 = tpu.matmul %43, %44, %cst_16 {dimension_numbers = #tpu.dot_dimension_numbers<[2], [1], [1], [2], [0, 0, 0, 1, 1, 2], [0], [0]>} : vector<8x8x8xf32>, vector<8x8x8xf32>, vector<8x8x8xf32> -> vector<8x8x8xf32>
    "tpu.trace_stop"() : () -> ()
    %46 = vector.shape_cast %45 : vector<8x8x8xf32> to vector<1x8x8x8xf32>
    %47 = vector.extract_strided_slice %38 {offsets = [0, 2, 0, 0], sizes = [1, 6, 8, 8], strides = [1, 1, 1, 1]} : vector<1x8x8x8xf32> to vector<1x6x8x8xf32>
    %48 = tpu.concatenate %47, %40 in 1 : vector<1x6x8x8xf32>, vector<1x2x8x8xf32> -> vector<1x8x8x8xf32>
    %49 = vector.shape_cast %38 : vector<1x8x8x8xf32> to vector<8x8x8xf32>
    %50 = vector.shape_cast %48 : vector<1x8x8x8xf32> to vector<8x8x8xf32>
    "tpu.trace_start"() <{level = 10 : i32, message = "bij,bjk->bik"}> : () -> ()
    %cst_17 = arith.constant dense<0.000000e+00> : vector<8x8x8xf32>
    %51 = tpu.matmul %49, %50, %cst_17 {dimension_numbers = #tpu.dot_dimension_numbers<[2], [1], [1], [2], [0, 0, 0, 1, 1, 2], [0], [0]>} : vector<8x8x8xf32>, vector<8x8x8xf32>, vector<8x8x8xf32> -> vector<8x8x8xf32>
    "tpu.trace_stop"() : () -> ()
    %52 = vector.shape_cast %51 : vector<8x8x8xf32> to vector<1x8x8x8xf32>
    %53 = vector.shape_cast %7 : vector<8x8xf32> to vector<1x1x8x8xf32>
    %54 = vector.broadcast %53 : vector<1x1x8x8xf32> to vector<1x4x8x8xf32>
    %55 = vector.extract_strided_slice %46 {offsets = [0, 0, 0, 0], sizes = [1, 4, 8, 8], strides = [1, 1, 1, 1]} : vector<1x8x8x8xf32> to vector<1x4x8x8xf32>
    %56 = tpu.concatenate %54, %55 in 1 : vector<1x4x8x8xf32>, vector<1x4x8x8xf32> -> vector<1x8x8x8xf32>
    %57 = vector.shape_cast %56 : vector<1x8x8x8xf32> to vector<8x8x8xf32>
    %58 = vector.shape_cast %46 : vector<1x8x8x8xf32> to vector<8x8x8xf32>
    "tpu.trace_start"() <{level = 10 : i32, message = "bij,bjk->bik"}> : () -> ()
    %cst_18 = arith.constant dense<0.000000e+00> : vector<8x8x8xf32>
    %59 = tpu.matmul %57, %58, %cst_18 {dimension_numbers = #tpu.dot_dimension_numbers<[2], [1], [1], [2], [0, 0, 0, 1, 1, 2], [0], [0]>} : vector<8x8x8xf32>, vector<8x8x8xf32>, vector<8x8x8xf32> -> vector<8x8x8xf32>
    "tpu.trace_stop"() : () -> ()
    %60 = vector.shape_cast %59 : vector<8x8x8xf32> to vector<1x8x8x8xf32>
    %61 = vector.extract_strided_slice %52 {offsets = [0, 4, 0, 0], sizes = [1, 4, 8, 8], strides = [1, 1, 1, 1]} : vector<1x8x8x8xf32> to vector<1x4x8x8xf32>
    %62 = tpu.concatenate %61, %54 in 1 : vector<1x4x8x8xf32>, vector<1x4x8x8xf32> -> vector<1x8x8x8xf32>
    %63 = vector.shape_cast %52 : vector<1x8x8x8xf32> to vector<8x8x8xf32>
    %64 = vector.shape_cast %62 : vector<1x8x8x8xf32> to vector<8x8x8xf32>
    "tpu.trace_start"() <{level = 10 : i32, message = "bij,bjk->bik"}> : () -> ()
    %cst_19 = arith.constant dense<0.000000e+00> : vector<8x8x8xf32>
    %65 = tpu.matmul %63, %64, %cst_19 {dimension_numbers = #tpu.dot_dimension_numbers<[2], [1], [1], [2], [0, 0, 0, 1, 1, 2], [0], [0]>} : vector<8x8x8xf32>, vector<8x8x8xf32>, vector<8x8x8xf32> -> vector<8x8x8xf32>
    "tpu.trace_stop"() : () -> ()
    %66 = vector.shape_cast %65 : vector<8x8x8xf32> to vector<1x8x8x8xf32>
    %67 = vector.broadcast %15 : vector<1x1x8x1xf32> to vector<1x8x8x8xf32>
    %68 = arith.mulf %67, %60 : vector<1x8x8x8xf32>
    %cst_20 = arith.constant dense<0.000000e+00> : vector<1x8x8xf32>
    %69 = vector.multi_reduction <add>, %68, %cst_20 [2] : vector<1x8x8x8xf32> to vector<1x8x8xf32>
    %70 = vector.broadcast %18 : vector<1x1x1x8xf32> to vector<1x8x8x8xf32>
    %71 = arith.mulf %66, %70 : vector<1x8x8x8xf32>
    %cst_21 = arith.constant dense<0.000000e+00> : vector<1x8x8xf32>
    %72 = vector.multi_reduction <add>, %71, %cst_21 [3] : vector<1x8x8x8xf32> to vector<1x8x8xf32>
    %73 = vector.shape_cast %69 : vector<1x8x8xf32> to vector<1x8x8x1xf32>
    %74 = vector.shape_cast %72 : vector<1x8x8xf32> to vector<1x8x1x8xf32>
    %75 = vector.broadcast %73 : vector<1x8x8x1xf32> to vector<1x8x8x8xf32>
    %76 = vector.broadcast %74 : vector<1x8x1x8xf32> to vector<1x8x8x8xf32>
    %77 = arith.mulf %75, %76 : vector<1x8x8x8xf32>
    %78 = vector.shape_cast %77 : vector<1x8x8x8xf32> to vector<8x64xf32>
    %cst_22 = arith.constant dense<0.000000e+00> : vector<8x4xf32>
    %79 = tpu.matmul %78, %12, %cst_22 {dimension_numbers = #tpu.dot_dimension_numbers<[1], [0], [0], [1], [0, 0, 1, 1], [], []>} : vector<8x64xf32>, vector<64x4xf32>, vector<8x4xf32> -> vector<8x4xf32>
    %80 = vector.shape_cast %79 : vector<8x4xf32> to vector<1x8x4xf32>
    %cst_23 = arith.constant 0.000000e+00 : f32
    %81 = vector.broadcast %cst_23 : f32 to vector<1x8x4xf32>
    %82 = arith.maximumf %80, %81 : vector<1x8x4xf32>
    %83 = arith.addf %82, %0 : vector<1x8x4xf32>
    %84 = arith.mulf %83, %83 : vector<1x8x4xf32>
    %cst_24 = arith.constant dense<0.000000e+00> : vector<1x8xf32>
    %85 = vector.multi_reduction <add>, %84, %cst_24 [2] : vector<1x8x4xf32> to vector<1x8xf32>
    %86 = vector.shape_cast %85 : vector<1x8xf32> to vector<1x8x1xf32>
    %cst_25 = arith.constant 9.99999997E-7 : f32
    %87 = vector.broadcast %cst_25 : f32 to vector<1x8x1xf32>
    %88 = arith.addf %86, %87 : vector<1x8x1xf32>
    %89 = math.rsqrt %88 : vector<1x8x1xf32>
    %90 = vector.broadcast %89 : vector<1x8x1xf32> to vector<1x8x4xf32>
    %91 = arith.mulf %83, %90 : vector<1x8x4xf32>
    %92 = vector.shape_cast %91 : vector<1x8x4xf32> to vector<8x4xf32>
    %cst_26 = arith.constant dense<0.000000e+00> : vector<8x64xf32>
    %93 = tpu.matmul %92, %10, %cst_26 {dimension_numbers = #tpu.dot_dimension_numbers<[1], [0], [0], [1], [0, 0, 1, 1], [], []>} : vector<8x4xf32>, vector<4x64xf32>, vector<8x64xf32> -> vector<8x64xf32>
    %94 = vector.shape_cast %93 : vector<8x64xf32> to vector<1x8x8x8xf32>
    %95 = vector.extract_strided_slice %94 {offsets = [0, 0, 0, 0], sizes = [1, 7, 8, 8], strides = [1, 1, 1, 1]} : vector<1x8x8x8xf32> to vector<1x7x8x8xf32>
    %96 = tpu.concatenate %8, %95 in 1 : vector<1x1x8x8xf32>, vector<1x7x8x8xf32> -> vector<1x8x8x8xf32>
    %97 = vector.extract_strided_slice %94 {offsets = [0, 1, 0, 0], sizes = [1, 7, 8, 8], strides = [1, 1, 1, 1]} : vector<1x8x8x8xf32> to vector<1x7x8x8xf32>
    %98 = tpu.concatenate %97, %8 in 1 : vector<1x7x8x8xf32>, vector<1x1x8x8xf32> -> vector<1x8x8x8xf32>
    %99 = vector.shape_cast %7 : vector<8x8xf32> to vector<1x1x8x8xf32>
    %100 = vector.extract_strided_slice %96 {offsets = [0, 0, 0, 0], sizes = [1, 7, 8, 8], strides = [1, 1, 1, 1]} : vector<1x8x8x8xf32> to vector<1x7x8x8xf32>
    %101 = tpu.concatenate %99, %100 in 1 : vector<1x1x8x8xf32>, vector<1x7x8x8xf32> -> vector<1x8x8x8xf32>
    %102 = vector.shape_cast %101 : vector<1x8x8x8xf32> to vector<8x8x8xf32>
    %103 = vector.shape_cast %96 : vector<1x8x8x8xf32> to vector<8x8x8xf32>
    "tpu.trace_start"() <{level = 10 : i32, message = "bij,bjk->bik"}> : () -> ()
    %cst_27 = arith.constant dense<0.000000e+00> : vector<8x8x8xf32>
    %104 = tpu.matmul %102, %103, %cst_27 {dimension_numbers = #tpu.dot_dimension_numbers<[2], [1], [1], [2], [0, 0, 0, 1, 1, 2], [0], [0]>} : vector<8x8x8xf32>, vector<8x8x8xf32>, vector<8x8x8xf32> -> vector<8x8x8xf32>
    "tpu.trace_stop"() : () -> ()
    %105 = vector.shape_cast %104 : vector<8x8x8xf32> to vector<1x8x8x8xf32>
    %106 = vector.extract_strided_slice %98 {offsets = [0, 1, 0, 0], sizes = [1, 7, 8, 8], strides = [1, 1, 1, 1]} : vector<1x8x8x8xf32> to vector<1x7x8x8xf32>
    %107 = tpu.concatenate %106, %99 in 1 : vector<1x7x8x8xf32>, vector<1x1x8x8xf32> -> vector<1x8x8x8xf32>
    %108 = vector.shape_cast %98 : vector<1x8x8x8xf32> to vector<8x8x8xf32>
    %109 = vector.shape_cast %107 : vector<1x8x8x8xf32> to vector<8x8x8xf32>
    "tpu.trace_start"() <{level = 10 : i32, message = "bij,bjk->bik"}> : () -> ()
    %cst_28 = arith.constant dense<0.000000e+00> : vector<8x8x8xf32>
    %110 = tpu.matmul %108, %109, %cst_28 {dimension_numbers = #tpu.dot_dimension_numbers<[2], [1], [1], [2], [0, 0, 0, 1, 1, 2], [0], [0]>} : vector<8x8x8xf32>, vector<8x8x8xf32>, vector<8x8x8xf32> -> vector<8x8x8xf32>
    "tpu.trace_stop"() : () -> ()
    %111 = vector.shape_cast %110 : vector<8x8x8xf32> to vector<1x8x8x8xf32>
    %112 = vector.shape_cast %7 : vector<8x8xf32> to vector<1x1x8x8xf32>
    %113 = vector.broadcast %112 : vector<1x1x8x8xf32> to vector<1x2x8x8xf32>
    %114 = vector.extract_strided_slice %105 {offsets = [0, 0, 0, 0], sizes = [1, 6, 8, 8], strides = [1, 1, 1, 1]} : vector<1x8x8x8xf32> to vector<1x6x8x8xf32>
    %115 = tpu.concatenate %113, %114 in 1 : vector<1x2x8x8xf32>, vector<1x6x8x8xf32> -> vector<1x8x8x8xf32>
    %116 = vector.shape_cast %115 : vector<1x8x8x8xf32> to vector<8x8x8xf32>
    %117 = vector.shape_cast %105 : vector<1x8x8x8xf32> to vector<8x8x8xf32>
    "tpu.trace_start"() <{level = 10 : i32, message = "bij,bjk->bik"}> : () -> ()
    %cst_29 = arith.constant dense<0.000000e+00> : vector<8x8x8xf32>
    %118 = tpu.matmul %116, %117, %cst_29 {dimension_numbers = #tpu.dot_dimension_numbers<[2], [1], [1], [2], [0, 0, 0, 1, 1, 2], [0], [0]>} : vector<8x8x8xf32>, vector<8x8x8xf32>, vector<8x8x8xf32> -> vector<8x8x8xf32>
    "tpu.trace_stop"() : () -> ()
    %119 = vector.shape_cast %118 : vector<8x8x8xf32> to vector<1x8x8x8xf32>
    %120 = vector.extract_strided_slice %111 {offsets = [0, 2, 0, 0], sizes = [1, 6, 8, 8], strides = [1, 1, 1, 1]} : vector<1x8x8x8xf32> to vector<1x6x8x8xf32>
    %121 = tpu.concatenate %120, %113 in 1 : vector<1x6x8x8xf32>, vector<1x2x8x8xf32> -> vector<1x8x8x8xf32>
    %122 = vector.shape_cast %111 : vector<1x8x8x8xf32> to vector<8x8x8xf32>
    %123 = vector.shape_cast %121 : vector<1x8x8x8xf32> to vector<8x8x8xf32>
    "tpu.trace_start"() <{level = 10 : i32, message = "bij,bjk->bik"}> : () -> ()
    %cst_30 = arith.constant dense<0.000000e+00> : vector<8x8x8xf32>
    %124 = tpu.matmul %122, %123, %cst_30 {dimension_numbers = #tpu.dot_dimension_numbers<[2], [1], [1], [2], [0, 0, 0, 1, 1, 2], [0], [0]>} : vector<8x8x8xf32>, vector<8x8x8xf32>, vector<8x8x8xf32> -> vector<8x8x8xf32>
    "tpu.trace_stop"() : () -> ()
    %125 = vector.shape_cast %124 : vector<8x8x8xf32> to vector<1x8x8x8xf32>
    %126 = vector.shape_cast %7 : vector<8x8xf32> to vector<1x1x8x8xf32>
    %127 = vector.broadcast %126 : vector<1x1x8x8xf32> to vector<1x4x8x8xf32>
    %128 = vector.extract_strided_slice %119 {offsets = [0, 0, 0, 0], sizes = [1, 4, 8, 8], strides = [1, 1, 1, 1]} : vector<1x8x8x8xf32> to vector<1x4x8x8xf32>
    %129 = tpu.concatenate %127, %128 in 1 : vector<1x4x8x8xf32>, vector<1x4x8x8xf32> -> vector<1x8x8x8xf32>
    %130 = vector.shape_cast %129 : vector<1x8x8x8xf32> to vector<8x8x8xf32>
    %131 = vector.shape_cast %119 : vector<1x8x8x8xf32> to vector<8x8x8xf32>
    "tpu.trace_start"() <{level = 10 : i32, message = "bij,bjk->bik"}> : () -> ()
    %cst_31 = arith.constant dense<0.000000e+00> : vector<8x8x8xf32>
    %132 = tpu.matmul %130, %131, %cst_31 {dimension_numbers = #tpu.dot_dimension_numbers<[2], [1], [1], [2], [0, 0, 0, 1, 1, 2], [0], [0]>} : vector<8x8x8xf32>, vector<8x8x8xf32>, vector<8x8x8xf32> -> vector<8x8x8xf32>
    "tpu.trace_stop"() : () -> ()
    %133 = vector.shape_cast %132 : vector<8x8x8xf32> to vector<1x8x8x8xf32>
    %134 = vector.extract_strided_slice %125 {offsets = [0, 4, 0, 0], sizes = [1, 4, 8, 8], strides = [1, 1, 1, 1]} : vector<1x8x8x8xf32> to vector<1x4x8x8xf32>
    %135 = tpu.concatenate %134, %127 in 1 : vector<1x4x8x8xf32>, vector<1x4x8x8xf32> -> vector<1x8x8x8xf32>
    %136 = vector.shape_cast %125 : vector<1x8x8x8xf32> to vector<8x8x8xf32>
    %137 = vector.shape_cast %135 : vector<1x8x8x8xf32> to vector<8x8x8xf32>
    "tpu.trace_start"() <{level = 10 : i32, message = "bij,bjk->bik"}> : () -> ()
    %cst_32 = arith.constant dense<0.000000e+00> : vector<8x8x8xf32>
    %138 = tpu.matmul %136, %137, %cst_32 {dimension_numbers = #tpu.dot_dimension_numbers<[2], [1], [1], [2], [0, 0, 0, 1, 1, 2], [0], [0]>} : vector<8x8x8xf32>, vector<8x8x8xf32>, vector<8x8x8xf32> -> vector<8x8x8xf32>
    "tpu.trace_stop"() : () -> ()
    %139 = vector.shape_cast %138 : vector<8x8x8xf32> to vector<1x8x8x8xf32>
    %140 = vector.broadcast %15 : vector<1x1x8x1xf32> to vector<1x8x8x8xf32>
    %141 = arith.mulf %140, %133 : vector<1x8x8x8xf32>
    %cst_33 = arith.constant dense<0.000000e+00> : vector<1x8x8xf32>
    %142 = vector.multi_reduction <add>, %141, %cst_33 [2] : vector<1x8x8x8xf32> to vector<1x8x8xf32>
    %143 = vector.broadcast %18 : vector<1x1x1x8xf32> to vector<1x8x8x8xf32>
    %144 = arith.mulf %139, %143 : vector<1x8x8x8xf32>
    %cst_34 = arith.constant dense<0.000000e+00> : vector<1x8x8xf32>
    %145 = vector.multi_reduction <add>, %144, %cst_34 [3] : vector<1x8x8x8xf32> to vector<1x8x8xf32>
    %146 = vector.shape_cast %142 : vector<1x8x8xf32> to vector<1x8x8x1xf32>
    %147 = vector.shape_cast %145 : vector<1x8x8xf32> to vector<1x8x1x8xf32>
    %148 = vector.broadcast %146 : vector<1x8x8x1xf32> to vector<1x8x8x8xf32>
    %149 = vector.broadcast %147 : vector<1x8x1x8xf32> to vector<1x8x8x8xf32>
    %150 = arith.mulf %148, %149 : vector<1x8x8x8xf32>
    %151 = vector.shape_cast %150 : vector<1x8x8x8xf32> to vector<8x64xf32>
    %cst_35 = arith.constant dense<0.000000e+00> : vector<8x4xf32>
    %152 = tpu.matmul %151, %12, %cst_35 {dimension_numbers = #tpu.dot_dimension_numbers<[1], [0], [0], [1], [0, 0, 1, 1], [], []>} : vector<8x64xf32>, vector<64x4xf32>, vector<8x4xf32> -> vector<8x4xf32>
    %153 = vector.shape_cast %152 : vector<8x4xf32> to vector<1x8x4xf32>
    %cst_36 = arith.constant 0.000000e+00 : f32
    %154 = vector.broadcast %cst_36 : f32 to vector<1x8x4xf32>
    %155 = arith.maximumf %153, %154 : vector<1x8x4xf32>
    %156 = arith.addf %155, %91 : vector<1x8x4xf32>
    %157 = arith.mulf %156, %156 : vector<1x8x4xf32>
    %cst_37 = arith.constant dense<0.000000e+00> : vector<1x8xf32>
    %158 = vector.multi_reduction <add>, %157, %cst_37 [2] : vector<1x8x4xf32> to vector<1x8xf32>
    %159 = vector.shape_cast %158 : vector<1x8xf32> to vector<1x8x1xf32>
    %cst_38 = arith.constant 9.99999997E-7 : f32
    %160 = vector.broadcast %cst_38 : f32 to vector<1x8x1xf32>
    %161 = arith.addf %159, %160 : vector<1x8x1xf32>
    %162 = math.rsqrt %161 : vector<1x8x1xf32>
    %163 = vector.broadcast %162 : vector<1x8x1xf32> to vector<1x8x4xf32>
    %164 = arith.mulf %156, %163 : vector<1x8x4xf32>
    %c1 = arith.constant 1 : index
    %c0_39 = arith.constant 0 : index
    %c0_40 = arith.constant 0 : index
    %165 = vector.load %arg3[%c1, %c0_39, %c0_40] : memref<2x4x64xf32, #tpu.memory_space<vmem>>, vector<1x4x64xf32>
    %166 = vector.shape_cast %165 : vector<1x4x64xf32> to vector<4x64xf32>
    %c1_41 = arith.constant 1 : index
    %c0_42 = arith.constant 0 : index
    %c0_43 = arith.constant 0 : index
    %167 = vector.load %arg4[%c1_41, %c0_42, %c0_43] : memref<2x64x4xf32, #tpu.memory_space<vmem>>, vector<1x64x4xf32>
    %168 = vector.shape_cast %167 : vector<1x64x4xf32> to vector<64x4xf32>
    %c1_44 = arith.constant 1 : index
    %c0_45 = arith.constant 0 : index
    %c0_46 = arith.constant 0 : index
    %169 = vector.load %arg5[%c1_44, %c0_45, %c0_46] : memref<2x8x1xf32, #tpu.memory_space<vmem>>, vector<1x8x1xf32>
    %170 = vector.shape_cast %169 : vector<1x8x1xf32> to vector<8x1xf32>
    %171 = vector.shape_cast %170 : vector<8x1xf32> to vector<1x1x8x1xf32>
    %c1_47 = arith.constant 1 : index
    %c0_48 = arith.constant 0 : index
    %c0_49 = arith.constant 0 : index
    %172 = vector.load %arg6[%c1_47, %c0_48, %c0_49] : memref<2x1x8xf32, #tpu.memory_space<vmem>>, vector<1x1x8xf32>
    %173 = vector.shape_cast %172 : vector<1x1x8xf32> to vector<1x8xf32>
    %174 = vector.shape_cast %173 : vector<1x8xf32> to vector<1x1x1x8xf32>
    %175 = vector.shape_cast %164 : vector<1x8x4xf32> to vector<8x4xf32>
    %cst_50 = arith.constant dense<0.000000e+00> : vector<8x64xf32>
    %176 = tpu.matmul %175, %166, %cst_50 {dimension_numbers = #tpu.dot_dimension_numbers<[1], [0], [0], [1], [0, 0, 1, 1], [], []>} : vector<8x4xf32>, vector<4x64xf32>, vector<8x64xf32> -> vector<8x64xf32>
    %177 = vector.shape_cast %176 : vector<8x64xf32> to vector<1x8x8x8xf32>
    %178 = vector.extract_strided_slice %177 {offsets = [0, 0, 0, 0], sizes = [1, 7, 8, 8], strides = [1, 1, 1, 1]} : vector<1x8x8x8xf32> to vector<1x7x8x8xf32>
    %179 = tpu.concatenate %8, %178 in 1 : vector<1x1x8x8xf32>, vector<1x7x8x8xf32> -> vector<1x8x8x8xf32>
    %180 = vector.extract_strided_slice %177 {offsets = [0, 1, 0, 0], sizes = [1, 7, 8, 8], strides = [1, 1, 1, 1]} : vector<1x8x8x8xf32> to vector<1x7x8x8xf32>
    %181 = tpu.concatenate %180, %8 in 1 : vector<1x7x8x8xf32>, vector<1x1x8x8xf32> -> vector<1x8x8x8xf32>
    %182 = vector.shape_cast %7 : vector<8x8xf32> to vector<1x1x8x8xf32>
    %183 = vector.extract_strided_slice %179 {offsets = [0, 0, 0, 0], sizes = [1, 7, 8, 8], strides = [1, 1, 1, 1]} : vector<1x8x8x8xf32> to vector<1x7x8x8xf32>
    %184 = tpu.concatenate %182, %183 in 1 : vector<1x1x8x8xf32>, vector<1x7x8x8xf32> -> vector<1x8x8x8xf32>
    %185 = vector.shape_cast %184 : vector<1x8x8x8xf32> to vector<8x8x8xf32>
    %186 = vector.shape_cast %179 : vector<1x8x8x8xf32> to vector<8x8x8xf32>
    "tpu.trace_start"() <{level = 10 : i32, message = "bij,bjk->bik"}> : () -> ()
    %cst_51 = arith.constant dense<0.000000e+00> : vector<8x8x8xf32>
    %187 = tpu.matmul %185, %186, %cst_51 {dimension_numbers = #tpu.dot_dimension_numbers<[2], [1], [1], [2], [0, 0, 0, 1, 1, 2], [0], [0]>} : vector<8x8x8xf32>, vector<8x8x8xf32>, vector<8x8x8xf32> -> vector<8x8x8xf32>
    "tpu.trace_stop"() : () -> ()
    %188 = vector.shape_cast %187 : vector<8x8x8xf32> to vector<1x8x8x8xf32>
    %189 = vector.extract_strided_slice %181 {offsets = [0, 1, 0, 0], sizes = [1, 7, 8, 8], strides = [1, 1, 1, 1]} : vector<1x8x8x8xf32> to vector<1x7x8x8xf32>
    %190 = tpu.concatenate %189, %182 in 1 : vector<1x7x8x8xf32>, vector<1x1x8x8xf32> -> vector<1x8x8x8xf32>
    %191 = vector.shape_cast %181 : vector<1x8x8x8xf32> to vector<8x8x8xf32>
    %192 = vector.shape_cast %190 : vector<1x8x8x8xf32> to vector<8x8x8xf32>
    "tpu.trace_start"() <{level = 10 : i32, message = "bij,bjk->bik"}> : () -> ()
    %cst_52 = arith.constant dense<0.000000e+00> : vector<8x8x8xf32>
    %193 = tpu.matmul %191, %192, %cst_52 {dimension_numbers = #tpu.dot_dimension_numbers<[2], [1], [1], [2], [0, 0, 0, 1, 1, 2], [0], [0]>} : vector<8x8x8xf32>, vector<8x8x8xf32>, vector<8x8x8xf32> -> vector<8x8x8xf32>
    "tpu.trace_stop"() : () -> ()
    %194 = vector.shape_cast %193 : vector<8x8x8xf32> to vector<1x8x8x8xf32>
    %195 = vector.shape_cast %7 : vector<8x8xf32> to vector<1x1x8x8xf32>
    %196 = vector.broadcast %195 : vector<1x1x8x8xf32> to vector<1x2x8x8xf32>
    %197 = vector.extract_strided_slice %188 {offsets = [0, 0, 0, 0], sizes = [1, 6, 8, 8], strides = [1, 1, 1, 1]} : vector<1x8x8x8xf32> to vector<1x6x8x8xf32>
    %198 = tpu.concatenate %196, %197 in 1 : vector<1x2x8x8xf32>, vector<1x6x8x8xf32> -> vector<1x8x8x8xf32>
    %199 = vector.shape_cast %198 : vector<1x8x8x8xf32> to vector<8x8x8xf32>
    %200 = vector.shape_cast %188 : vector<1x8x8x8xf32> to vector<8x8x8xf32>
    "tpu.trace_start"() <{level = 10 : i32, message = "bij,bjk->bik"}> : () -> ()
    %cst_53 = arith.constant dense<0.000000e+00> : vector<8x8x8xf32>
    %201 = tpu.matmul %199, %200, %cst_53 {dimension_numbers = #tpu.dot_dimension_numbers<[2], [1], [1], [2], [0, 0, 0, 1, 1, 2], [0], [0]>} : vector<8x8x8xf32>, vector<8x8x8xf32>, vector<8x8x8xf32> -> vector<8x8x8xf32>
    "tpu.trace_stop"() : () -> ()
    %202 = vector.shape_cast %201 : vector<8x8x8xf32> to vector<1x8x8x8xf32>
    %203 = vector.extract_strided_slice %194 {offsets = [0, 2, 0, 0], sizes = [1, 6, 8, 8], strides = [1, 1, 1, 1]} : vector<1x8x8x8xf32> to vector<1x6x8x8xf32>
    %204 = tpu.concatenate %203, %196 in 1 : vector<1x6x8x8xf32>, vector<1x2x8x8xf32> -> vector<1x8x8x8xf32>
    %205 = vector.shape_cast %194 : vector<1x8x8x8xf32> to vector<8x8x8xf32>
    %206 = vector.shape_cast %204 : vector<1x8x8x8xf32> to vector<8x8x8xf32>
    "tpu.trace_start"() <{level = 10 : i32, message = "bij,bjk->bik"}> : () -> ()
    %cst_54 = arith.constant dense<0.000000e+00> : vector<8x8x8xf32>
    %207 = tpu.matmul %205, %206, %cst_54 {dimension_numbers = #tpu.dot_dimension_numbers<[2], [1], [1], [2], [0, 0, 0, 1, 1, 2], [0], [0]>} : vector<8x8x8xf32>, vector<8x8x8xf32>, vector<8x8x8xf32> -> vector<8x8x8xf32>
    "tpu.trace_stop"() : () -> ()
    %208 = vector.shape_cast %207 : vector<8x8x8xf32> to vector<1x8x8x8xf32>
    %209 = vector.shape_cast %7 : vector<8x8xf32> to vector<1x1x8x8xf32>
    %210 = vector.broadcast %209 : vector<1x1x8x8xf32> to vector<1x4x8x8xf32>
    %211 = vector.extract_strided_slice %202 {offsets = [0, 0, 0, 0], sizes = [1, 4, 8, 8], strides = [1, 1, 1, 1]} : vector<1x8x8x8xf32> to vector<1x4x8x8xf32>
    %212 = tpu.concatenate %210, %211 in 1 : vector<1x4x8x8xf32>, vector<1x4x8x8xf32> -> vector<1x8x8x8xf32>
    %213 = vector.shape_cast %212 : vector<1x8x8x8xf32> to vector<8x8x8xf32>
    %214 = vector.shape_cast %202 : vector<1x8x8x8xf32> to vector<8x8x8xf32>
    "tpu.trace_start"() <{level = 10 : i32, message = "bij,bjk->bik"}> : () -> ()
    %cst_55 = arith.constant dense<0.000000e+00> : vector<8x8x8xf32>
    %215 = tpu.matmul %213, %214, %cst_55 {dimension_numbers = #tpu.dot_dimension_numbers<[2], [1], [1], [2], [0, 0, 0, 1, 1, 2], [0], [0]>} : vector<8x8x8xf32>, vector<8x8x8xf32>, vector<8x8x8xf32> -> vector<8x8x8xf32>
    "tpu.trace_stop"() : () -> ()
    %216 = vector.shape_cast %215 : vector<8x8x8xf32> to vector<1x8x8x8xf32>
    %217 = vector.extract_strided_slice %208 {offsets = [0, 4, 0, 0], sizes = [1, 4, 8, 8], strides = [1, 1, 1, 1]} : vector<1x8x8x8xf32> to vector<1x4x8x8xf32>
    %218 = tpu.concatenate %217, %210 in 1 : vector<1x4x8x8xf32>, vector<1x4x8x8xf32> -> vector<1x8x8x8xf32>
    %219 = vector.shape_cast %208 : vector<1x8x8x8xf32> to vector<8x8x8xf32>
    %220 = vector.shape_cast %218 : vector<1x8x8x8xf32> to vector<8x8x8xf32>
    "tpu.trace_start"() <{level = 10 : i32, message = "bij,bjk->bik"}> : () -> ()
    %cst_56 = arith.constant dense<0.000000e+00> : vector<8x8x8xf32>
    %221 = tpu.matmul %219, %220, %cst_56 {dimension_numbers = #tpu.dot_dimension_numbers<[2], [1], [1], [2], [0, 0, 0, 1, 1, 2], [0], [0]>} : vector<8x8x8xf32>, vector<8x8x8xf32>, vector<8x8x8xf32> -> vector<8x8x8xf32>
    "tpu.trace_stop"() : () -> ()
    %222 = vector.shape_cast %221 : vector<8x8x8xf32> to vector<1x8x8x8xf32>
    %223 = vector.broadcast %171 : vector<1x1x8x1xf32> to vector<1x8x8x8xf32>
    %224 = arith.mulf %223, %216 : vector<1x8x8x8xf32>
    %cst_57 = arith.constant dense<0.000000e+00> : vector<1x8x8xf32>
    %225 = vector.multi_reduction <add>, %224, %cst_57 [2] : vector<1x8x8x8xf32> to vector<1x8x8xf32>
    %226 = vector.broadcast %174 : vector<1x1x1x8xf32> to vector<1x8x8x8xf32>
    %227 = arith.mulf %222, %226 : vector<1x8x8x8xf32>
    %cst_58 = arith.constant dense<0.000000e+00> : vector<1x8x8xf32>
    %228 = vector.multi_reduction <add>, %227, %cst_58 [3] : vector<1x8x8x8xf32> to vector<1x8x8xf32>
    %229 = vector.shape_cast %225 : vector<1x8x8xf32> to vector<1x8x8x1xf32>
    %230 = vector.shape_cast %228 : vector<1x8x8xf32> to vector<1x8x1x8xf32>
    %231 = vector.broadcast %229 : vector<1x8x8x1xf32> to vector<1x8x8x8xf32>
    %232 = vector.broadcast %230 : vector<1x8x1x8xf32> to vector<1x8x8x8xf32>
    %233 = arith.mulf %231, %232 : vector<1x8x8x8xf32>
    %234 = vector.shape_cast %233 : vector<1x8x8x8xf32> to vector<8x64xf32>
    %cst_59 = arith.constant dense<0.000000e+00> : vector<8x4xf32>
    %235 = tpu.matmul %234, %168, %cst_59 {dimension_numbers = #tpu.dot_dimension_numbers<[1], [0], [0], [1], [0, 0, 1, 1], [], []>} : vector<8x64xf32>, vector<64x4xf32>, vector<8x4xf32> -> vector<8x4xf32>
    %236 = vector.shape_cast %235 : vector<8x4xf32> to vector<1x8x4xf32>
    %cst_60 = arith.constant 0.000000e+00 : f32
    %237 = vector.broadcast %cst_60 : f32 to vector<1x8x4xf32>
    %238 = arith.maximumf %236, %237 : vector<1x8x4xf32>
    %239 = arith.addf %238, %164 : vector<1x8x4xf32>
    %240 = arith.mulf %239, %239 : vector<1x8x4xf32>
    %cst_61 = arith.constant dense<0.000000e+00> : vector<1x8xf32>
    %241 = vector.multi_reduction <add>, %240, %cst_61 [2] : vector<1x8x4xf32> to vector<1x8xf32>
    %242 = vector.shape_cast %241 : vector<1x8xf32> to vector<1x8x1xf32>
    %cst_62 = arith.constant 9.99999997E-7 : f32
    %243 = vector.broadcast %cst_62 : f32 to vector<1x8x1xf32>
    %244 = arith.addf %242, %243 : vector<1x8x1xf32>
    %245 = math.rsqrt %244 : vector<1x8x1xf32>
    %246 = vector.broadcast %245 : vector<1x8x1xf32> to vector<1x8x4xf32>
    %247 = arith.mulf %239, %246 : vector<1x8x4xf32>
    %248 = vector.shape_cast %247 : vector<1x8x4xf32> to vector<8x4xf32>
    %cst_63 = arith.constant dense<0.000000e+00> : vector<8x64xf32>
    %249 = tpu.matmul %248, %166, %cst_63 {dimension_numbers = #tpu.dot_dimension_numbers<[1], [0], [0], [1], [0, 0, 1, 1], [], []>} : vector<8x4xf32>, vector<4x64xf32>, vector<8x64xf32> -> vector<8x64xf32>
    %250 = vector.shape_cast %249 : vector<8x64xf32> to vector<1x8x8x8xf32>
    %251 = vector.extract_strided_slice %250 {offsets = [0, 0, 0, 0], sizes = [1, 7, 8, 8], strides = [1, 1, 1, 1]} : vector<1x8x8x8xf32> to vector<1x7x8x8xf32>
    %252 = tpu.concatenate %8, %251 in 1 : vector<1x1x8x8xf32>, vector<1x7x8x8xf32> -> vector<1x8x8x8xf32>
    %253 = vector.extract_strided_slice %250 {offsets = [0, 1, 0, 0], sizes = [1, 7, 8, 8], strides = [1, 1, 1, 1]} : vector<1x8x8x8xf32> to vector<1x7x8x8xf32>
    %254 = tpu.concatenate %253, %8 in 1 : vector<1x7x8x8xf32>, vector<1x1x8x8xf32> -> vector<1x8x8x8xf32>
    %255 = vector.shape_cast %7 : vector<8x8xf32> to vector<1x1x8x8xf32>
    %256 = vector.extract_strided_slice %252 {offsets = [0, 0, 0, 0], sizes = [1, 7, 8, 8], strides = [1, 1, 1, 1]} : vector<1x8x8x8xf32> to vector<1x7x8x8xf32>
    %257 = tpu.concatenate %255, %256 in 1 : vector<1x1x8x8xf32>, vector<1x7x8x8xf32> -> vector<1x8x8x8xf32>
    %258 = vector.shape_cast %257 : vector<1x8x8x8xf32> to vector<8x8x8xf32>
    %259 = vector.shape_cast %252 : vector<1x8x8x8xf32> to vector<8x8x8xf32>
    "tpu.trace_start"() <{level = 10 : i32, message = "bij,bjk->bik"}> : () -> ()
    %cst_64 = arith.constant dense<0.000000e+00> : vector<8x8x8xf32>
    %260 = tpu.matmul %258, %259, %cst_64 {dimension_numbers = #tpu.dot_dimension_numbers<[2], [1], [1], [2], [0, 0, 0, 1, 1, 2], [0], [0]>} : vector<8x8x8xf32>, vector<8x8x8xf32>, vector<8x8x8xf32> -> vector<8x8x8xf32>
    "tpu.trace_stop"() : () -> ()
    %261 = vector.shape_cast %260 : vector<8x8x8xf32> to vector<1x8x8x8xf32>
    %262 = vector.extract_strided_slice %254 {offsets = [0, 1, 0, 0], sizes = [1, 7, 8, 8], strides = [1, 1, 1, 1]} : vector<1x8x8x8xf32> to vector<1x7x8x8xf32>
    %263 = tpu.concatenate %262, %255 in 1 : vector<1x7x8x8xf32>, vector<1x1x8x8xf32> -> vector<1x8x8x8xf32>
    %264 = vector.shape_cast %254 : vector<1x8x8x8xf32> to vector<8x8x8xf32>
    %265 = vector.shape_cast %263 : vector<1x8x8x8xf32> to vector<8x8x8xf32>
    "tpu.trace_start"() <{level = 10 : i32, message = "bij,bjk->bik"}> : () -> ()
    %cst_65 = arith.constant dense<0.000000e+00> : vector<8x8x8xf32>
    %266 = tpu.matmul %264, %265, %cst_65 {dimension_numbers = #tpu.dot_dimension_numbers<[2], [1], [1], [2], [0, 0, 0, 1, 1, 2], [0], [0]>} : vector<8x8x8xf32>, vector<8x8x8xf32>, vector<8x8x8xf32> -> vector<8x8x8xf32>
    "tpu.trace_stop"() : () -> ()
    %267 = vector.shape_cast %266 : vector<8x8x8xf32> to vector<1x8x8x8xf32>
    %268 = vector.shape_cast %7 : vector<8x8xf32> to vector<1x1x8x8xf32>
    %269 = vector.broadcast %268 : vector<1x1x8x8xf32> to vector<1x2x8x8xf32>
    %270 = vector.extract_strided_slice %261 {offsets = [0, 0, 0, 0], sizes = [1, 6, 8, 8], strides = [1, 1, 1, 1]} : vector<1x8x8x8xf32> to vector<1x6x8x8xf32>
    %271 = tpu.concatenate %269, %270 in 1 : vector<1x2x8x8xf32>, vector<1x6x8x8xf32> -> vector<1x8x8x8xf32>
    %272 = vector.shape_cast %271 : vector<1x8x8x8xf32> to vector<8x8x8xf32>
    %273 = vector.shape_cast %261 : vector<1x8x8x8xf32> to vector<8x8x8xf32>
    "tpu.trace_start"() <{level = 10 : i32, message = "bij,bjk->bik"}> : () -> ()
    %cst_66 = arith.constant dense<0.000000e+00> : vector<8x8x8xf32>
    %274 = tpu.matmul %272, %273, %cst_66 {dimension_numbers = #tpu.dot_dimension_numbers<[2], [1], [1], [2], [0, 0, 0, 1, 1, 2], [0], [0]>} : vector<8x8x8xf32>, vector<8x8x8xf32>, vector<8x8x8xf32> -> vector<8x8x8xf32>
    "tpu.trace_stop"() : () -> ()
    %275 = vector.shape_cast %274 : vector<8x8x8xf32> to vector<1x8x8x8xf32>
    %276 = vector.extract_strided_slice %267 {offsets = [0, 2, 0, 0], sizes = [1, 6, 8, 8], strides = [1, 1, 1, 1]} : vector<1x8x8x8xf32> to vector<1x6x8x8xf32>
    %277 = tpu.concatenate %276, %269 in 1 : vector<1x6x8x8xf32>, vector<1x2x8x8xf32> -> vector<1x8x8x8xf32>
    %278 = vector.shape_cast %267 : vector<1x8x8x8xf32> to vector<8x8x8xf32>
    %279 = vector.shape_cast %277 : vector<1x8x8x8xf32> to vector<8x8x8xf32>
    "tpu.trace_start"() <{level = 10 : i32, message = "bij,bjk->bik"}> : () -> ()
    %cst_67 = arith.constant dense<0.000000e+00> : vector<8x8x8xf32>
    %280 = tpu.matmul %278, %279, %cst_67 {dimension_numbers = #tpu.dot_dimension_numbers<[2], [1], [1], [2], [0, 0, 0, 1, 1, 2], [0], [0]>} : vector<8x8x8xf32>, vector<8x8x8xf32>, vector<8x8x8xf32> -> vector<8x8x8xf32>
    "tpu.trace_stop"() : () -> ()
    %281 = vector.shape_cast %280 : vector<8x8x8xf32> to vector<1x8x8x8xf32>
    %282 = vector.shape_cast %7 : vector<8x8xf32> to vector<1x1x8x8xf32>
    %283 = vector.broadcast %282 : vector<1x1x8x8xf32> to vector<1x4x8x8xf32>
    %284 = vector.extract_strided_slice %275 {offsets = [0, 0, 0, 0], sizes = [1, 4, 8, 8], strides = [1, 1, 1, 1]} : vector<1x8x8x8xf32> to vector<1x4x8x8xf32>
    %285 = tpu.concatenate %283, %284 in 1 : vector<1x4x8x8xf32>, vector<1x4x8x8xf32> -> vector<1x8x8x8xf32>
    %286 = vector.shape_cast %285 : vector<1x8x8x8xf32> to vector<8x8x8xf32>
    %287 = vector.shape_cast %275 : vector<1x8x8x8xf32> to vector<8x8x8xf32>
    "tpu.trace_start"() <{level = 10 : i32, message = "bij,bjk->bik"}> : () -> ()
    %cst_68 = arith.constant dense<0.000000e+00> : vector<8x8x8xf32>
    %288 = tpu.matmul %286, %287, %cst_68 {dimension_numbers = #tpu.dot_dimension_numbers<[2], [1], [1], [2], [0, 0, 0, 1, 1, 2], [0], [0]>} : vector<8x8x8xf32>, vector<8x8x8xf32>, vector<8x8x8xf32> -> vector<8x8x8xf32>
    "tpu.trace_stop"() : () -> ()
    %289 = vector.shape_cast %288 : vector<8x8x8xf32> to vector<1x8x8x8xf32>
    %290 = vector.extract_strided_slice %281 {offsets = [0, 4, 0, 0], sizes = [1, 4, 8, 8], strides = [1, 1, 1, 1]} : vector<1x8x8x8xf32> to vector<1x4x8x8xf32>
    %291 = tpu.concatenate %290, %283 in 1 : vector<1x4x8x8xf32>, vector<1x4x8x8xf32> -> vector<1x8x8x8xf32>
    %292 = vector.shape_cast %281 : vector<1x8x8x8xf32> to vector<8x8x8xf32>
    %293 = vector.shape_cast %291 : vector<1x8x8x8xf32> to vector<8x8x8xf32>
    "tpu.trace_start"() <{level = 10 : i32, message = "bij,bjk->bik"}> : () -> ()
    %cst_69 = arith.constant dense<0.000000e+00> : vector<8x8x8xf32>
    %294 = tpu.matmul %292, %293, %cst_69 {dimension_numbers = #tpu.dot_dimension_numbers<[2], [1], [1], [2], [0, 0, 0, 1, 1, 2], [0], [0]>} : vector<8x8x8xf32>, vector<8x8x8xf32>, vector<8x8x8xf32> -> vector<8x8x8xf32>
    "tpu.trace_stop"() : () -> ()
    %295 = vector.shape_cast %294 : vector<8x8x8xf32> to vector<1x8x8x8xf32>
    %296 = vector.broadcast %171 : vector<1x1x8x1xf32> to vector<1x8x8x8xf32>
    %297 = arith.mulf %296, %289 : vector<1x8x8x8xf32>
    %cst_70 = arith.constant dense<0.000000e+00> : vector<1x8x8xf32>
    %298 = vector.multi_reduction <add>, %297, %cst_70 [2] : vector<1x8x8x8xf32> to vector<1x8x8xf32>
    %299 = vector.broadcast %174 : vector<1x1x1x8xf32> to vector<1x8x8x8xf32>
    %300 = arith.mulf %295, %299 : vector<1x8x8x8xf32>
    %cst_71 = arith.constant dense<0.000000e+00> : vector<1x8x8xf32>
    %301 = vector.multi_reduction <add>, %300, %cst_71 [3] : vector<1x8x8x8xf32> to vector<1x8x8xf32>
    %302 = vector.shape_cast %298 : vector<1x8x8xf32> to vector<1x8x8x1xf32>
    %303 = vector.shape_cast %301 : vector<1x8x8xf32> to vector<1x8x1x8xf32>
    %304 = vector.broadcast %302 : vector<1x8x8x1xf32> to vector<1x8x8x8xf32>
    %305 = vector.broadcast %303 : vector<1x8x1x8xf32> to vector<1x8x8x8xf32>
    %306 = arith.mulf %304, %305 : vector<1x8x8x8xf32>
    %307 = vector.shape_cast %306 : vector<1x8x8x8xf32> to vector<8x64xf32>
    %cst_72 = arith.constant dense<0.000000e+00> : vector<8x4xf32>
    %308 = tpu.matmul %307, %168, %cst_72 {dimension_numbers = #tpu.dot_dimension_numbers<[1], [0], [0], [1], [0, 0, 1, 1], [], []>} : vector<8x64xf32>, vector<64x4xf32>, vector<8x4xf32> -> vector<8x4xf32>
    %309 = vector.shape_cast %308 : vector<8x4xf32> to vector<1x8x4xf32>
    %cst_73 = arith.constant 0.000000e+00 : f32
    %310 = vector.broadcast %cst_73 : f32 to vector<1x8x4xf32>
    %311 = arith.maximumf %309, %310 : vector<1x8x4xf32>
    %312 = arith.addf %311, %247 : vector<1x8x4xf32>
    %313 = arith.mulf %312, %312 : vector<1x8x4xf32>
    %cst_74 = arith.constant dense<0.000000e+00> : vector<1x8xf32>
    %314 = vector.multi_reduction <add>, %313, %cst_74 [2] : vector<1x8x4xf32> to vector<1x8xf32>
    %315 = vector.shape_cast %314 : vector<1x8xf32> to vector<1x8x1xf32>
    %cst_75 = arith.constant 9.99999997E-7 : f32
    %316 = vector.broadcast %cst_75 : f32 to vector<1x8x1xf32>
    %317 = arith.addf %315, %316 : vector<1x8x1xf32>
    %318 = math.rsqrt %317 : vector<1x8x1xf32>
    %319 = vector.broadcast %318 : vector<1x8x1xf32> to vector<1x8x4xf32>
    %320 = arith.mulf %312, %319 : vector<1x8x4xf32>
    %c0_76 = arith.constant 0 : index
    %321 = memref.load %arg1[%c0_76] : memref<1xf32, #tpu.memory_space<smem>>
    %322 = vector.broadcast %321 : f32 to vector<1x8x4xf32>
    %323 = arith.mulf %0, %322 : vector<1x8x4xf32>
    %324 = arith.addf %320, %323 : vector<1x8x4xf32>
    %325 = arith.mulf %324, %324 : vector<1x8x4xf32>
    %cst_77 = arith.constant dense<0.000000e+00> : vector<1x8xf32>
    %326 = vector.multi_reduction <add>, %325, %cst_77 [2] : vector<1x8x4xf32> to vector<1x8xf32>
    %327 = vector.shape_cast %326 : vector<1x8xf32> to vector<1x8x1xf32>
    %328 = math.rsqrt %327 : vector<1x8x1xf32>
    %329 = vector.broadcast %328 : vector<1x8x1xf32> to vector<1x8x4xf32>
    %330 = arith.mulf %324, %329 : vector<1x8x4xf32>
    %c0_78 = arith.constant 0 : index
    %c0_79 = arith.constant 0 : index
    %c0_80 = arith.constant 0 : index
    %331 = vector.load %arg7[%c0_78, %c0_79, %c0_80] : memref<1x8x4xf32, #tpu.memory_space<vmem>>, vector<1x8x4xf32>
    tpu.vector_store %arg7[%c0_78, %c0_79, %c0_80], %330 {strides = array<i32>} : memref<1x8x4xf32, #tpu.memory_space<vmem>>, vector<1x8x4xf32>,
    return
  }
  func.func @transform_0(%arg0: i32) -> i32 {
    %c0_i32 = arith.constant 0 : i32
    %c0_i32_0 = arith.constant 0 : i32
    return %c0_i32 : i32
  }
  func.func @transform_1(%arg0: i32) -> (i32, i32, i32) {
    %c0_i32 = arith.constant 0 : i32
    %c0_i32_0 = arith.constant 0 : i32
    %c0_i32_1 = arith.constant 0 : i32
    return %arg0, %c0_i32, %c0_i32_0 : i32, i32, i32
  }
  func.func @transform_2(%arg0: i32) -> (i32, i32, i32) {
    %c0_i32 = arith.constant 0 : i32
    %c0_i32_0 = arith.constant 0 : i32
    %c0_i32_1 = arith.constant 0 : i32
    %c0_i32_2 = arith.constant 0 : i32
    return %c0_i32, %c0_i32_0, %c0_i32_1 : i32, i32, i32
  }
  func.func @transform_3(%arg0: i32) -> (i32, i32, i32) {
    %c0_i32 = arith.constant 0 : i32
    %c0_i32_0 = arith.constant 0 : i32
    %c0_i32_1 = arith.constant 0 : i32
    %c0_i32_2 = arith.constant 0 : i32
    return %c0_i32, %c0_i32_0, %c0_i32_1 : i32, i32, i32
  }
  func.func @transform_4(%arg0: i32) -> (i32, i32, i32) {
    %c0_i32 = arith.constant 0 : i32
    %c0_i32_0 = arith.constant 0 : i32
    %c0_i32_1 = arith.constant 0 : i32
    %c0_i32_2 = arith.constant 0 : i32
    return %c0_i32, %c0_i32_0, %c0_i32_1 : i32, i32, i32
  }
  func.func @transform_5(%arg0: i32) -> (i32, i32, i32) {
    %c0_i32 = arith.constant 0 : i32
    %c0_i32_0 = arith.constant 0 : i32
    %c0_i32_1 = arith.constant 0 : i32
    %c0_i32_2 = arith.constant 0 : i32
    return %c0_i32, %c0_i32_0, %c0_i32_1 : i32, i32, i32
  }
  func.func @transform_6(%arg0: i32) -> (i32, i32, i32) {
    %c0_i32 = arith.constant 0 : i32
    %c0_i32_0 = arith.constant 0 : i32
    %c0_i32_1 = arith.constant 0 : i32
    return %arg0, %c0_i32, %c0_i32_0 : i32, i32, i32
  }
}

</mosaic_0001>

<llo_original>
// kernel: tpu_custom_call.1
$region0: #{tpu_custom_call.1}
  #allocation0 [shape = 'u32[]', space=smem, size = 0x4, offset = 0x4, fixed_abs, tag = 'smem constant byte address 0x4 - core index']
  #allocation1 [shape = 'u32[72,128]{1,0:T(1,128)}', space=vmem, size = 0x9000, scoped, tag = 'internal scratch']
  #allocation2 [shape = 'f32[1]{0:T(128)S(6)}', space=smem, size = 0x200, scoped, tag = 'scoped memory for tpu_custom_call.1']
  %s0 = inlined_call_operand.<no memory space> [shape: f32[1], index: 0, kind: input, shape index: {}]
  %s1 = inlined_call_operand.vmem [shape: f32[2,8,4], index: 1, kind: input, shape index: {}]
  %s2 = inlined_call_operand.vmem [shape: f32[2,4,64], index: 2, kind: input, shape index: {}]
  %s3 = inlined_call_operand.vmem [shape: f32[2,64,4], index: 3, kind: input, shape index: {}]
  %s4 = inlined_call_operand.vmem [shape: f32[2,8,1], index: 4, kind: input, shape index: {}]
  %s5 = inlined_call_operand.vmem [shape: f32[2,1,8], index: 5, kind: input, shape index: {}]
  %s6 = inlined_call_operand.vmem [shape: f32[2,8,4], index: 6, kind: output, shape index: {}]
  %s7 = sld [smem:[#allocation0]]
  $region57: #{tpu_custom_call.1} parent=0
    _
  %s9 = ssub.s32 1, %s7
  %s10 = scalar_select 0, %s9, %s7
  %11 = sst [smem:[#allocation2]] %s0
  loop: start=0, step=1, limit=4
  $region2: #{tpu_custom_call.1} parent=0 // loop_pre_header
    _
  $region3: #{tpu_custom_call.1} parent=0 // loop_header
    %s13 = sphi 0, %s17
    %p14 = scmp.ge.s32.totalorder %s13, 4
    %s21 = sphi 0, %s21
    %s23 = sphi 0, %s21
    %s24 = sphi 0, %s23
    %s38 = sphi 0, %s24
    %s44 = sphi 0, %s46
    %s47 = sphi 0, %s44
    %s48 = sphi 0, %s47
    %s64 = sphi 0, %s48
    %s68 = sphi 0, %s68
    %s70 = sphi 0, %s68
    %s71 = sphi 0, %s70
    %s85 = sphi 0, %s71
    %s89 = sphi 0, %s89
    %s91 = sphi 0, %s89
    %s92 = sphi 0, %s91
    %s106 = sphi 0, %s92
    %s110 = sphi 0, %s110
    %s112 = sphi 0, %s110
    %s113 = sphi 0, %s112
    %s127 = sphi 0, %s113
    %s131 = sphi 0, %s131
    %s133 = sphi 0, %s131
    %s134 = sphi 0, %s133
    %s148 = sphi 0, %s134
    %s154 = sphi 0, %s156
    %s157 = sphi 0, %s154
    %s158 = sphi 0, %s157
    %s174 = sphi 0, %s158
  $region4: #{tpu_custom_call.1} parent=0 // loop_header_branch
    %16 = sbr.rel (%p14) target = $region8
  $region5: #{tpu_custom_call.1} parent=0 // loop_body
    %s18 = ssub.s32 %s13, 1
    %s19 = ssub.s32 %s13, 2
    %s20 = sadd.s32 %s13, 1
    %s22 = sadd.s32 %s21, 1
    %p25 = scmp.eq.s32.totalorder %s13, 1
    %p26 = scmp.ne.s32.totalorder %s21, %s23
    %p27 = scmp.eq.s32.totalorder %s13, 0
    %p28 = por %p26, %p27
    %p29 = scmp.ne.s32.totalorder %s21, %s23
    %p30 = scmp.eq.s32.totalorder %s18, 1
    %p31 = por %p29, %p30
    %p32 = scmp.ne.s32.totalorder %s23, %s24
    %p33 = scmp.eq.s32.totalorder %s18, 0
    %p34 = por %p32, %p33
    %p35 = scmp.ne.s32.totalorder %s23, %s24
    %p36 = scmp.eq.s32.totalorder %s19, 1
    %p37 = por %p35, %p36
    %p39 = scmp.ne.s32.totalorder %s24, %s38
    %p40 = scmp.eq.s32.totalorder %s19, 0
    %p41 = por %p39, %p40
    %s42 = ssub.s32 %s13, %s20
    %p43 = scmp.eq.s32.totalorder %s42, 0
    %s45 = sadd.s32 %s44, 1
    %s46 = scalar_select %p43, %s44, %s45
    %p49 = pneg %p43
    %p50 = scmp.eq.s32.totalorder %s13, 1
    %p51 = por %p49, %p50
    %p52 = scmp.ne.s32.totalorder %s44, %s47
    %p53 = scmp.eq.s32.totalorder %s13, 0
    %p54 = por %p52, %p53
    %p55 = scmp.ne.s32.totalorder %s44, %s47
    %p56 = scmp.eq.s32.totalorder %s18, 1
    %p57 = por %p55, %p56
    %p58 = scmp.ne.s32.totalorder %s47, %s48
    %p59 = scmp.eq.s32.totalorder %s18, 0
    %p60 = por %p58, %p59
    %p61 = scmp.ne.s32.totalorder %s47, %s48
    %p62 = scmp.eq.s32.totalorder %s19, 1
    %p63 = por %p61, %p62
    %p65 = scmp.ne.s32.totalorder %s48, %s64
    %p66 = scmp.eq.s32.totalorder %s19, 0
    %p67 = por %p65, %p66
    %s69 = sadd.s32 %s68, 1
    %p72 = scmp.eq.s32.totalorder %s13, 1
    %p73 = scmp.ne.s32.totalorder %s68, %s70
    %p74 = scmp.eq.s32.totalorder %s13, 0
    %p75 = por %p73, %p74
    %p76 = scmp.ne.s32.totalorder %s68, %s70
    %p77 = scmp.eq.s32.totalorder %s18, 1
    %p78 = por %p76, %p77
    %p79 = scmp.ne.s32.totalorder %s70, %s71
    %p80 = scmp.eq.s32.totalorder %s18, 0
    %p81 = por %p79, %p80
    %p82 = scmp.ne.s32.totalorder %s70, %s71
    %p83 = scmp.eq.s32.totalorder %s19, 1
    %p84 = por %p82, %p83
    %p86 = scmp.ne.s32.totalorder %s71, %s85
    %p87 = scmp.eq.s32.totalorder %s19, 0
    %p88 = por %p86, %p87
    %s90 = sadd.s32 %s89, 1
    %p93 = scmp.eq.s32.totalorder %s13, 1
    %p94 = scmp.ne.s32.totalorder %s89, %s91
    %p95 = scmp.eq.s32.totalorder %s13, 0
    %p96 = por %p94, %p95
    %p97 = scmp.ne.s32.totalorder %s89, %s91
    %p98 = scmp.eq.s32.totalorder %s18, 1
    %p99 = por %p97, %p98
    %p100 = scmp.ne.s32.totalorder %s91, %s92
    %p101 = scmp.eq.s32.totalorder %s18, 0
    %p102 = por %p100, %p101
    %p103 = scmp.ne.s32.totalorder %s91, %s92
    %p104 = scmp.eq.s32.totalorder %s19, 1
    %p105 = por %p103, %p104
    %p107 = scmp.ne.s32.totalorder %s92, %s106
    %p108 = scmp.eq.s32.totalorder %s19, 0
    %p109 = por %p107, %p108
    %s111 = sadd.s32 %s110, 1
    %p114 = scmp.eq.s32.totalorder %s13, 1
    %p115 = scmp.ne.s32.totalorder %s110, %s112
    %p116 = scmp.eq.s32.totalorder %s13, 0
    %p117 = por %p115, %p116
    %p118 = scmp.ne.s32.totalorder %s110, %s112
    %p119 = scmp.eq.s32.totalorder %s18, 1
    %p120 = por %p118, %p119
    %p121 = scmp.ne.s32.totalorder %s112, %s113
    %p122 = scmp.eq.s32.totalorder %s18, 0
    %p123 = por %p121, %p122
    %p124 = scmp.ne.s32.totalorder %s112, %s113
    %p125 = scmp.eq.s32.totalorder %s19, 1
    %p126 = por %p124, %p125
    %p128 = scmp.ne.s32.totalorder %s113, %s127
    %p129 = scmp.eq.s32.totalorder %s19, 0
    %p130 = por %p128, %p129
    %s132 = sadd.s32 %s131, 1
    %p135 = scmp.eq.s32.totalorder %s13, 1
    %p136 = scmp.ne.s32.totalorder %s131, %s133
    %p137 = scmp.eq.s32.totalorder %s13, 0
    %p138 = por %p136, %p137
    %p139 = scmp.ne.s32.totalorder %s131, %s133
    %p140 = scmp.eq.s32.totalorder %s18, 1
    %p141 = por %p139, %p140
    %p142 = scmp.ne.s32.totalorder %s133, %s134
    %p143 = scmp.eq.s32.totalorder %s18, 0
    %p144 = por %p142, %p143
    %p145 = scmp.ne.s32.totalorder %s133, %s134
    %p146 = scmp.eq.s32.totalorder %s19, 1
    %p147 = por %p145, %p146
    %p149 = scmp.ne.s32.totalorder %s134, %s148
    %p150 = scmp.eq.s32.totalorder %s19, 0
    %p151 = por %p149, %p150
    %s152 = ssub.s32 %s13, %s20
    %p153 = scmp.eq.s32.totalorder %s152, 0
    %s155 = sadd.s32 %s154, 1
    %s156 = scalar_select %p153, %s154, %s155
    %p159 = pneg %p153
    %p160 = scmp.eq.s32.totalorder %s13, 1
    %p161 = por %p159, %p160
    %p162 = scmp.ne.s32.totalorder %s154, %s157
    %p163 = scmp.eq.s32.totalorder %s13, 0
    %p164 = por %p162, %p163
    %p165 = scmp.ne.s32.totalorder %s154, %s157
    %p166 = scmp.eq.s32.totalorder %s18, 1
    %p167 = por %p165, %p166
    %p168 = scmp.ne.s32.totalorder %s157, %s158
    %p169 = scmp.eq.s32.totalorder %s18, 0
    %p170 = por %p168, %p169
    %p171 = scmp.ne.s32.totalorder %s157, %s158
    %p172 = scmp.eq.s32.totalorder %s19, 1
    %p173 = por %p171, %p172
    %p175 = scmp.ne.s32.totalorder %s158, %s174
    %p176 = scmp.eq.s32.totalorder %s19, 0
    %p177 = por %p175, %p176
    %p178 = scmp.le.s32.totalorder 1, %s13
    %p179 = scmp.lt.s32.totalorder %s13, 3
    %p180 = pnand %p178, %p179
    %p181 = pneg %p180
    // Predicated region
    $region9: #{tpu_custom_call.1} parent=5 // pred_check
      _
    $region10: #{tpu_custom_call.1} parent=5 // pred_check_branch
      %183 = sbr.rel (%p180) target = $region12
    $region11: #{tpu_custom_call.1} parent=5 // pred_region
      %s184 = ssub.s32 %s13, 1
      // Predicated region
      $region13: #{tpu_custom_call.1} parent=11 // pred_check
        %p185 = pneg %p34
      $region14: #{tpu_custom_call.1} parent=11 // pred_check_branch
        %187 = sbr.rel (%p185) target = $region16
      $region15: #{tpu_custom_call.1} parent=11 // pred_region
        _
      $region16: #{tpu_custom_call.1} parent=11 // pred_fallthru
        _
      // Predicated region
      $region17: #{tpu_custom_call.1} parent=11 // pred_check
        %p188 = pneg %p81
      $region18: #{tpu_custom_call.1} parent=11 // pred_check_branch
        %190 = sbr.rel (%p188) target = $region20
      $region19: #{tpu_custom_call.1} parent=11 // pred_region
        _
      $region20: #{tpu_custom_call.1} parent=11 // pred_fallthru
        _
      // Predicated region
      $region21: #{tpu_custom_call.1} parent=11 // pred_check
        %p191 = pneg %p102
      $region22: #{tpu_custom_call.1} parent=11 // pred_check_branch
        %193 = sbr.rel (%p191) target = $region24
      $region23: #{tpu_custom_call.1} parent=11 // pred_region
        _
      $region24: #{tpu_custom_call.1} parent=11 // pred_fallthru
        _
      // Predicated region
      $region25: #{tpu_custom_call.1} parent=11 // pred_check
        %p194 = pneg %p123
      $region26: #{tpu_custom_call.1} parent=11 // pred_check_branch
        %196 = sbr.rel (%p194) target = $region28
      $region27: #{tpu_custom_call.1} parent=11 // pred_region
        _
      $region28: #{tpu_custom_call.1} parent=11 // pred_fallthru
        _
      // Predicated region
      $region29: #{tpu_custom_call.1} parent=11 // pred_check
        %p197 = pneg %p144
      $region30: #{tpu_custom_call.1} parent=11 // pred_check_branch
        %199 = sbr.rel (%p197) target = $region32
      $region31: #{tpu_custom_call.1} parent=11 // pred_region
        _
      $region32: #{tpu_custom_call.1} parent=11 // pred_fallthru
        _
    $region12: #{tpu_custom_call.1} parent=5 // pred_fallthru
      _
    %p200 = scmp.lt.s32.totalorder %s13, 2
    // Predicated region
    $region33: #{tpu_custom_call.1} parent=5 // pred_check
      %p201 = pneg %p200
    $region34: #{tpu_custom_call.1} parent=5 // pred_check_branch
      %203 = sbr.rel (%p201) target = $region36
    $region35: #{tpu_custom_call.1} parent=5 // pred_region
      // Predicated region
      $region37: #{tpu_custom_call.1} parent=35 // pred_check
        %p204 = pneg %p54
      $region38: #{tpu_custom_call.1} parent=35 // pred_check_branch
        %206 = sbr.rel (%p204) target = $region40
      $region39: #{tpu_custom_call.1} parent=35 // pred_region
        %p207 = scmp.lt.s32.totalorder %s13, 1
        %s208 = scalar_select %p207, %s13, 1
        %s209 = smul.addr %s208, 8
        %s210 = scalar_lea.vmem %s1, %s209
      $region40: #{tpu_custom_call.1} parent=35 // pred_fallthru
        _
    $region36: #{tpu_custom_call.1} parent=5 // pred_fallthru
      _
    %p211 = scmp.le.s32.totalorder 1, %s13
    %p212 = scmp.lt.s32.totalorder %s13, 3
    %p213 = pnand %p211, %p212
    %p214 = pneg %p213
    // Predicated region
    $region41: #{tpu_custom_call.1} parent=5 // pred_check
      _
    $region42: #{tpu_custom_call.1} parent=5 // pred_check_branch
      %216 = sbr.rel (%p213) target = $region44
    $region43: #{tpu_custom_call.1} parent=5 // pred_region
      %s217 = ssub.s32 %s13, 1
      %p218 = pneg %p34
      %p219 = pneg %p31
      %p220 = scmp.lt.s32.totalorder %s18, 1
      %s221 = scalar_select %p220, %s18, 1
      %s222 = smul.addr %s221, 8
      %s223 = scalar_lea.vmem %s1, %s222
      %p224 = pneg %p60
      %p225 = pneg %p57
      %p226 = pneg %p81
      %p227 = pneg %p78
      %p228 = pneg %p102
      %p229 = pneg %p99
      %p230 = pneg %p123
      %p231 = pneg %p120
      %p232 = pneg %p144
      %p233 = pneg %p141
      %p234 = pneg %p170
      %p235 = pneg %p167
      %p236 = scmp.lt.s32.totalorder %s18, 1
      %s237 = scalar_select %p236, %s18, 1
      %s238 = smul.addr %s237, 8
      %s239 = scalar_lea.vmem %s6, %s238
      %p240 = scmp.lt.s32.totalorder %s18, 1
      %s241 = scalar_select %p240, %s18, 1
      %s242 = smul.addr %s241, 8
      %s243 = scalar_lea.vmem %s1, %s242
      %p244 = scmp.lt.s32.totalorder %s18, 1
      %s245 = scalar_select %p244, %s18, 1
      %s246 = smul.addr %s245, 8
      %s247 = scalar_lea.vmem %s6, %s246
      %v248 = vld [vmem:[%s243] sm:$0xff]
      %v249 = vlaneseq
      %v250 = vshrl.u32 %v249, 7
      %v251 = vlaneseq
      %v252 = vand.u32 %v251, 127
      %vm253 = vcmp.eq.s32.totalorder %v250, %v252
      %v254 = vsel %vm253, 1, 0
      %v255 = vcvt.s32.f32 %v254
      %v256 = vld [vmem:[%s2] sm:$0xf]
      %v257 = vld [vmem:[%s3] sm:$0xff]
      %v258 = vld [vmem:[%s3 + $0x8] sm:$0xff]
      %v259 = vld [vmem:[%s3 + $0x10] sm:$0xff]
      %v260 = vld [vmem:[%s3 + $0x18] sm:$0xff]
      %v261 = vld [vmem:[%s3 + $0x20] sm:$0xff]
      %v262 = vld [vmem:[%s3 + $0x28] sm:$0xff]
      %v263 = vld [vmem:[%s3 + $0x30] sm:$0xff]
      %v264 = vld [vmem:[%s3 + $0x38] sm:$0xff]
      %v265 = vld [vmem:[%s4] sm:$0xff]
      %v266 = vld [vmem:[%s5] sm:$0x1]
      %vm267 = vcmask 31744
      %v269 = vsel %vm267, %v248, 0
      %vm271 = vcmask 1043456
      %v273 = vsel %vm271, %v256, 0
      %275 = vmatpush.msra.mxu0 0.0
      %276 = vmatpush.msra.mxu0 0.0
      %277 = vmatpush.msra.mxu0 0.0
      %278 = vmatpush.msra.mxu0 0.0
      %279 = vmatpush.msra.mxu0 0.0
      %280 = vmatpush.msra.mxu0 0.0
      %281 = vmatpush.msra.mxu0 0.0
      %282 = vmatpush.msra.mxu0 0.0
      %283 = vmatpush.msra.mxu0 0.0
      %284 = vmatpush.msra.mxu0 0.0
      %285 = vmatpush.msra.mxu0 0.0
      %286 = vmatpush.msra.mxu0 0.0
      %287 = vmatpush.msra.mxu0 0.0
      %288 = vmatpush.msra.mxu0 0.0
      %289 = vmatpush.msra.mxu0 0.0
      %290 = vmatpush.msra.mxu0 %v273
      %291 = vmatmul.f32.gmra.mxu0 %v269
      %v292 = vpop.f32.mrf.mxu0
      %v293 = vadd.f32 0.0, %v292
      %294 = vdwg.mxu0
      %296 = vrot.lane.b32.xlu0 %v293, 120
      %v297 = vpop.permute.xlu0 %296
      %299 = vrot.lane.b32.xlu0 %v293, 112
      %v300 = vpop.permute.xlu0 %299
      %302 = vrot.lane.b32.xlu0 %v293, 104
      %v303 = vpop.permute.xlu0 %302
      %305 = vrot.lane.b32.xlu0 %v293, 96
      %v306 = vpop.permute.xlu0 %305
      %308 = vrot.lane.b32.xlu0 %v293, 88
      %v309 = vpop.permute.xlu0 %308
      %311 = vrot.lane.b32.xlu0 %v293, 80
      %v312 = vpop.permute.xlu0 %311
      %314 = vrot.lane.b32.xlu0 %v293, 72
      %v315 = vpop.permute.xlu0 %314
      %v317 = vrot.slane %v300, 4
      %vm318 = vcmask 1047556
      %v319 = vsel %vm318, %v317, %v293
      %v320 = vrot.slane %v293, 4
      %v321 = vsel %vm318, %v300, %v320
      %v323 = vunpack.c.l.s4 1983009808
      %v324 = vunpack.c.0.s8 %v323
      %v325 = vperm.slane %v319, %v324
      %v327 = vunpack.c.l.s4 1983009808
      %v328 = vunpack.c.0.s8 %v327
      %v329 = vperm.slane %v321, %v328
      %v330 = vrot.slane %v303, 4
      %v331 = vsel %vm318, %v330, %v297
      %v332 = vrot.slane %v297, 4
      %v333 = vsel %vm318, %v303, %v332
      %v335 = vunpack.c.l.s4 1983009808
      %v336 = vunpack.c.0.s8 %v335
      %v337 = vperm.slane %v331, %v336
      %v339 = vunpack.c.l.s4 1983009808
      %v340 = vunpack.c.0.s8 %v339
      %v341 = vperm.slane %v333, %v340
      %v342 = vrot.slane %v312, 4
      %v343 = vsel %vm318, %v342, %v306
      %v344 = vrot.slane %v306, 4
      %v345 = vsel %vm318, %v312, %v344
      %v347 = vunpack.c.l.s4 1983009808
      %v348 = vunpack.c.0.s8 %v347
      %v349 = vperm.slane %v343, %v348
      %v351 = vunpack.c.l.s4 1983009808
      %v352 = vunpack.c.0.s8 %v351
      %v353 = vperm.slane %v345, %v352
      %v354 = vrot.slane %v315, 4
      %v355 = vsel %vm318, %v354, %v309
      %v356 = vrot.slane %v309, 4
      %v357 = vsel %vm318, %v315, %v356
      %v359 = vunpack.c.l.s4 1983009808
      %v360 = vunpack.c.0.s8 %v359
      %v361 = vperm.slane %v355, %v360
      %v363 = vunpack.c.l.s4 1983009808
      %v364 = vunpack.c.0.s8 %v363
      %v365 = vperm.slane %v357, %v364
      %v366 = vrot.slane %v337, 4
      %v367 = vsel %vm318, %v366, %v325
      %v368 = vrot.slane %v325, 4
      %v369 = vsel %vm318, %v337, %v368
      %v371 = vunpack.c.l.s4 1934713408
      %v372 = vunpack.c.0.s8 %v371
      %v373 = vperm.slane %v367, %v372
      %v375 = vunpack.c.l.s4 1934713408
      %v376 = vunpack.c.0.s8 %v375
      %v377 = vperm.slane %v369, %v376
      %v378 = vrot.slane %v341, 4
      %v379 = vsel %vm318, %v378, %v329
      %v380 = vrot.slane %v329, 4
      %v381 = vsel %vm318, %v341, %v380
      %v383 = vunpack.c.l.s4 1934713408
      %v384 = vunpack.c.0.s8 %v383
      %v385 = vperm.slane %v379, %v384
      %v387 = vunpack.c.l.s4 1934713408
      %v388 = vunpack.c.0.s8 %v387
      %v389 = vperm.slane %v381, %v388
      %v390 = vrot.slane %v361, 4
      %v391 = vsel %vm318, %v390, %v349
      %v392 = vrot.slane %v349, 4
      %v393 = vsel %vm318, %v361, %v392
      %v395 = vunpack.c.l.s4 1934713408
      %v396 = vunpack.c.0.s8 %v395
      %v397 = vperm.slane %v391, %v396
      %v399 = vunpack.c.l.s4 1934713408
      %v400 = vunpack.c.0.s8 %v399
      %v401 = vperm.slane %v393, %v400
      %v402 = vrot.slane %v365, 4
      %v403 = vsel %vm318, %v402, %v353
      %v404 = vrot.slane %v353, 4
      %v405 = vsel %vm318, %v365, %v404
      %v407 = vunpack.c.l.s4 1934713408
      %v408 = vunpack.c.0.s8 %v407
      %v409 = vperm.slane %v403, %v408
      %v411 = vunpack.c.l.s4 1934713408
      %v412 = vunpack.c.0.s8 %v411
      %v413 = vperm.slane %v405, %v412
      %v414 = vrot.slane %v397, 4
      %v415 = vsel %vm318, %v414, %v373
      %v416 = vrot.slane %v373, 4
      %v417 = vsel %vm318, %v397, %v416
      %v418 = vrot.slane %v401, 4
      %v419 = vsel %vm318, %v418, %v377
      %v420 = vrot.slane %v377, 4
      %v421 = vsel %vm318, %v401, %v420
      %v422 = vrot.slane %v409, 4
      %v423 = vsel %vm318, %v422, %v385
      %v424 = vrot.slane %v385, 4
      %v425 = vsel %vm318, %v409, %v424
      %v426 = vrot.slane %v413, 4
      %v427 = vsel %vm318, %v426, %v389
      %v428 = vrot.slane %v389, 4
      %v429 = vsel %vm318, %v413, %v428
      %vm430 = vcmask 64512
      %v432 = vsel %vm430, %v255, 0
      %434 = vmatpush.msra.mxu0 0.0
      %435 = vmatpush.msra.mxu0 0.0
      %436 = vmatpush.msra.mxu0 0.0
      %437 = vmatpush.msra.mxu0 0.0
      %438 = vmatpush.msra.mxu0 0.0
      %439 = vmatpush.msra.mxu0 0.0
      %440 = vmatpush.msra.mxu0 0.0
      %441 = vmatpush.msra.mxu0 0.0
      %442 = vmatpush.msra.mxu0 0.0
      %443 = vmatpush.msra.mxu0 0.0
      %444 = vmatpush.msra.mxu0 0.0
      %445 = vmatpush.msra.mxu0 0.0
      %446 = vmatpush.msra.mxu0 0.0
      %447 = vmatpush.msra.mxu0 0.0
      %448 = vmatpush.msra.mxu0 0.0
      %449 = vmatpush.msra.mxu0 %v255
      %450 = vmatmul.f32.gmra.mxu0 %v432
      %v451 = vpop.f32.mrf.mxu0
      %v452 = vadd.f32 0.0, %v451
      %453 = vdwg.mxu0
      %454 = vmatpush.msra.mxu0 0.0
      %455 = vmatpush.msra.mxu0 0.0
      %456 = vmatpush.msra.mxu0 0.0
      %457 = vmatpush.msra.mxu0 0.0
      %458 = vmatpush.msra.mxu0 0.0
      %459 = vmatpush.msra.mxu0 0.0
      %460 = vmatpush.msra.mxu0 0.0
      %461 = vmatpush.msra.mxu0 0.0
      %462 = vmatpush.msra.mxu0 0.0
      %463 = vmatpush.msra.mxu0 0.0
      %464 = vmatpush.msra.mxu0 0.0
      %465 = vmatpush.msra.mxu0 0.0
      %466 = vmatpush.msra.mxu0 0.0
      %467 = vmatpush.msra.mxu0 0.0
      %468 = vmatpush.msra.mxu0 0.0
      %469 = vmatpush.msra.mxu0 %v415
      %470 = vmatmul.f32.gmra.mxu0 %v432
      %v471 = vpop.f32.mrf.mxu0
      %v472 = vadd.f32 0.0, %v471
      %473 = vdwg.mxu0
      %v475 = vsel %vm430, %v415, 0
      %477 = vmatpush.msra.mxu0 0.0
      %478 = vmatpush.msra.mxu0 0.0
      %479 = vmatpush.msra.mxu0 0.0
      %480 = vmatpush.msra.mxu0 0.0
      %481 = vmatpush.msra.mxu0 0.0
      %482 = vmatpush.msra.mxu0 0.0
      %483 = vmatpush.msra.mxu0 0.0
      %484 = vmatpush.msra.mxu0 0.0
      %485 = vmatpush.msra.mxu0 0.0
      %486 = vmatpush.msra.mxu0 0.0
      %487 = vmatpush.msra.mxu0 0.0
      %488 = vmatpush.msra.mxu0 0.0
      %489 = vmatpush.msra.mxu0 0.0
      %490 = vmatpush.msra.mxu0 0.0
      %491 = vmatpush.msra.mxu0 0.0
      %492 = vmatpush.msra.mxu0 %v417
      %493 = vmatmul.f32.gmra.mxu0 %v475
      %v494 = vpop.f32.mrf.mxu0
      %v495 = vadd.f32 0.0, %v494
      %496 = vdwg.mxu0
      %v498 = vsel %vm430, %v417, 0
      %500 = vmatpush.msra.mxu0 0.0
      %501 = vmatpush.msra.mxu0 0.0
      %502 = vmatpush.msra.mxu0 0.0
      %503 = vmatpush.msra.mxu0 0.0
      %504 = vmatpush.msra.mxu0 0.0
      %505 = vmatpush.msra.mxu0 0.0
      %506 = vmatpush.msra.mxu0 0.0
      %507 = vmatpush.msra.mxu0 0.0
      %508 = vmatpush.msra.mxu0 0.0
      %509 = vmatpush.msra.mxu0 0.0
      %510 = vmatpush.msra.mxu0 0.0
      %511 = vmatpush.msra.mxu0 0.0
      %512 = vmatpush.msra.mxu0 0.0
      %513 = vmatpush.msra.mxu0 0.0
      %514 = vmatpush.msra.mxu0 0.0
      %515 = vmatpush.msra.mxu0 %v419
      %516 = vmatmul.f32.gmra.mxu0 %v498
      %v517 = vpop.f32.mrf.mxu0
      %v518 = vadd.f32 0.0, %v517
      %519 = vdwg.mxu0
      %v521 = vsel %vm430, %v419, 0
      %523 = vmatpush.msra.mxu0 0.0
      %524 = vmatpush.msra.mxu0 0.0
      %525 = vmatpush.msra.mxu0 0.0
      %526 = vmatpush.msra.mxu0 0.0
      %527 = vmatpush.msra.mxu0 0.0
      %528 = vmatpush.msra.mxu0 0.0
      %529 = vmatpush.msra.mxu0 0.0
      %530 = vmatpush.msra.mxu0 0.0
      %531 = vmatpush.msra.mxu0 0.0
      %532 = vmatpush.msra.mxu0 0.0
      %533 = vmatpush.msra.mxu0 0.0
      %534 = vmatpush.msra.mxu0 0.0
      %535 = vmatpush.msra.mxu0 0.0
      %536 = vmatpush.msra.mxu0 0.0
      %537 = vmatpush.msra.mxu0 0.0
      %538 = vmatpush.msra.mxu0 %v421
      %539 = vmatmul.f32.gmra.mxu0 %v521
      %v540 = vpop.f32.mrf.mxu0
      %v541 = vadd.f32 0.0, %v540
      %542 = vdwg.mxu0
      %v544 = vsel %vm430, %v421, 0
      %546 = vmatpush.msra.mxu0 0.0
      %547 = vmatpush.msra.mxu0 0.0
      %548 = vmatpush.msra.mxu0 0.0
      %549 = vmatpush.msra.mxu0 0.0
      %550 = vmatpush.msra.mxu0 0.0
      %551 = vmatpush.msra.mxu0 0.0
      %552 = vmatpush.msra.mxu0 0.0
      %553 = vmatpush.msra.mxu0 0.0
      %554 = vmatpush.msra.mxu0 0.0
      %555 = vmatpush.msra.mxu0 0.0
      %556 = vmatpush.msra.mxu0 0.0
      %557 = vmatpush.msra.mxu0 0.0
      %558 = vmatpush.msra.mxu0 0.0
      %559 = vmatpush.msra.mxu0 0.0
      %560 = vmatpush.msra.mxu0 0.0
      %561 = vmatpush.msra.mxu0 %v423
      %562 = vmatmul.f32.gmra.mxu0 %v544
      %v563 = vpop.f32.mrf.mxu0
      %v564 = vadd.f32 0.0, %v563
      %565 = vdwg.mxu0
      %v567 = vsel %vm430, %v423, 0
      %569 = vmatpush.msra.mxu0 0.0
      %570 = vmatpush.msra.mxu0 0.0
      %571 = vmatpush.msra.mxu0 0.0
      %572 = vmatpush.msra.mxu0 0.0
      %573 = vmatpush.msra.mxu0 0.0
      %574 = vmatpush.msra.mxu0 0.0
      %575 = vmatpush.msra.mxu0 0.0
      %576 = vmatpush.msra.mxu0 0.0
      %577 = vmatpush.msra.mxu0 0.0
      %578 = vmatpush.msra.mxu0 0.0
      %579 = vmatpush.msra.mxu0 0.0
      %580 = vmatpush.msra.mxu0 0.0
      %581 = vmatpush.msra.mxu0 0.0
      %582 = vmatpush.msra.mxu0 0.0
      %583 = vmatpush.msra.mxu0 0.0
      %584 = vmatpush.msra.mxu0 %v425
      %585 = vmatmul.f32.gmra.mxu0 %v567
      %v586 = vpop.f32.mrf.mxu0
      %v587 = vadd.f32 0.0, %v586
      %588 = vdwg.mxu0
      %v590 = vsel %vm430, %v425, 0
      %592 = vmatpush.msra.mxu0 0.0
      %593 = vmatpush.msra.mxu0 0.0
      %594 = vmatpush.msra.mxu0 0.0
      %595 = vmatpush.msra.mxu0 0.0
      %596 = vmatpush.msra.mxu0 0.0
      %597 = vmatpush.msra.mxu0 0.0
      %598 = vmatpush.msra.mxu0 0.0
      %599 = vmatpush.msra.mxu0 0.0
      %600 = vmatpush.msra.mxu0 0.0
      %601 = vmatpush.msra.mxu0 0.0
      %602 = vmatpush.msra.mxu0 0.0
      %603 = vmatpush.msra.mxu0 0.0
      %604 = vmatpush.msra.mxu0 0.0
      %605 = vmatpush.msra.mxu0 0.0
      %606 = vmatpush.msra.mxu0 0.0
      %607 = vmatpush.msra.mxu0 %v427
      %608 = vmatmul.f32.gmra.mxu0 %v590
      %v609 = vpop.f32.mrf.mxu0
      %v610 = vadd.f32 0.0, %v609
      %611 = vdwg.mxu0
      %v613 = vsel %vm430, %v427, 0
      %615 = vmatpush.msra.mxu0 0.0
      %616 = vmatpush.msra.mxu0 0.0
      %617 = vmatpush.msra.mxu0 0.0
      %618 = vmatpush.msra.mxu0 0.0
      %619 = vmatpush.msra.mxu0 0.0
      %620 = vmatpush.msra.mxu0 0.0
      %621 = vmatpush.msra.mxu0 0.0
      %622 = vmatpush.msra.mxu0 0.0
      %623 = vmatpush.msra.mxu0 0.0
      %624 = vmatpush.msra.mxu0 0.0
      %625 = vmatpush.msra.mxu0 0.0
      %626 = vmatpush.msra.mxu0 0.0
      %627 = vmatpush.msra.mxu0 0.0
      %628 = vmatpush.msra.mxu0 0.0
      %629 = vmatpush.msra.mxu0 0.0
      %630 = vmatpush.msra.mxu0 %v429
      %631 = vmatmul.f32.gmra.mxu0 %v613
      %v632 = vpop.f32.mrf.mxu0
      %v633 = vadd.f32 0.0, %v632
      %634 = vdwg.mxu0
      %v636 = vsel %vm430, %v429, 0
      %638 = vmatpush.msra.mxu0 0.0
      %639 = vmatpush.msra.mxu0 0.0
      %640 = vmatpush.msra.mxu0 0.0
      %641 = vmatpush.msra.mxu0 0.0
      %642 = vmatpush.msra.mxu0 0.0
      %643 = vmatpush.msra.mxu0 0.0
      %644 = vmatpush.msra.mxu0 0.0
      %645 = vmatpush.msra.mxu0 0.0
      %646 = vmatpush.msra.mxu0 0.0
      %647 = vmatpush.msra.mxu0 0.0
      %648 = vmatpush.msra.mxu0 0.0
      %649 = vmatpush.msra.mxu0 0.0
      %650 = vmatpush.msra.mxu0 0.0
      %651 = vmatpush.msra.mxu0 0.0
      %652 = vmatpush.msra.mxu0 0.0
      %653 = vmatpush.msra.mxu0 %v255
      %654 = vmatmul.f32.gmra.mxu0 %v636
      %v655 = vpop.f32.mrf.mxu0
      %v656 = vadd.f32 0.0, %v655
      %657 = vdwg.mxu0
      %658 = vmatpush.msra.mxu0 0.0
      %659 = vmatpush.msra.mxu0 0.0
      %660 = vmatpush.msra.mxu0 0.0
      %661 = vmatpush.msra.mxu0 0.0
      %662 = vmatpush.msra.mxu0 0.0
      %663 = vmatpush.msra.mxu0 0.0
      %664 = vmatpush.msra.mxu0 0.0
      %665 = vmatpush.msra.mxu0 0.0
      %666 = vmatpush.msra.mxu0 0.0
      %667 = vmatpush.msra.mxu0 0.0
      %668 = vmatpush.msra.mxu0 0.0
      %669 = vmatpush.msra.mxu0 0.0
      %670 = vmatpush.msra.mxu0 0.0
      %671 = vmatpush.msra.mxu0 0.0
      %672 = vmatpush.msra.mxu0 0.0
      %673 = vmatpush.msra.mxu0 %v452
      %674 = vmatmul.f32.gmra.mxu0 %v432
      %v675 = vpop.f32.mrf.mxu0
      %v676 = vadd.f32 0.0, %v675
      %677 = vdwg.mxu0
      %678 = vmatpush.msra.mxu0 0.0
      %679 = vmatpush.msra.mxu0 0.0
      %680 = vmatpush.msra.mxu0 0.0
      %681 = vmatpush.msra.mxu0 0.0
      %682 = vmatpush.msra.mxu0 0.0
      %683 = vmatpush.msra.mxu0 0.0
      %684 = vmatpush.msra.mxu0 0.0
      %685 = vmatpush.msra.mxu0 0.0
      %686 = vmatpush.msra.mxu0 0.0
      %687 = vmatpush.msra.mxu0 0.0
      %688 = vmatpush.msra.mxu0 0.0
      %689 = vmatpush.msra.mxu0 0.0
      %690 = vmatpush.msra.mxu0 0.0
      %691 = vmatpush.msra.mxu0 0.0
      %692 = vmatpush.msra.mxu0 0.0
      %693 = vmatpush.msra.mxu0 %v472
      %694 = vmatmul.f32.gmra.mxu0 %v432
      %v695 = vpop.f32.mrf.mxu0
      %v696 = vadd.f32 0.0, %v695
      %697 = vdwg.mxu0
      %v699 = vsel %vm430, %v452, 0
      %701 = vmatpush.msra.mxu0 0.0
      %702 = vmatpush.msra.mxu0 0.0
      %703 = vmatpush.msra.mxu0 0.0
      %704 = vmatpush.msra.mxu0 0.0
      %705 = vmatpush.msra.mxu0 0.0
      %706 = vmatpush.msra.mxu0 0.0
      %707 = vmatpush.msra.mxu0 0.0
      %708 = vmatpush.msra.mxu0 0.0
      %709 = vmatpush.msra.mxu0 0.0
      %710 = vmatpush.msra.mxu0 0.0
      %711 = vmatpush.msra.mxu0 0.0
      %712 = vmatpush.msra.mxu0 0.0
      %713 = vmatpush.msra.mxu0 0.0
      %714 = vmatpush.msra.mxu0 0.0
      %715 = vmatpush.msra.mxu0 0.0
      %716 = vmatpush.msra.mxu0 %v495
      %717 = vmatmul.f32.gmra.mxu0 %v699
      %v718 = vpop.f32.mrf.mxu0
      %v719 = vadd.f32 0.0, %v718
      %720 = vdwg.mxu0
      %v722 = vsel %vm430, %v472, 0
      %724 = vmatpush.msra.mxu0 0.0
      %725 = vmatpush.msra.mxu0 0.0
      %726 = vmatpush.msra.mxu0 0.0
      %727 = vmatpush.msra.mxu0 0.0
      %728 = vmatpush.msra.mxu0 0.0
      %729 = vmatpush.msra.mxu0 0.0
      %730 = vmatpush.msra.mxu0 0.0
      %731 = vmatpush.msra.mxu0 0.0
      %732 = vmatpush.msra.mxu0 0.0
      %733 = vmatpush.msra.mxu0 0.0
      %734 = vmatpush.msra.mxu0 0.0
      %735 = vmatpush.msra.mxu0 0.0
      %736 = vmatpush.msra.mxu0 0.0
      %737 = vmatpush.msra.mxu0 0.0
      %738 = vmatpush.msra.mxu0 0.0
      %739 = vmatpush.msra.mxu0 %v518
      %740 = vmatmul.f32.gmra.mxu0 %v722
      %v741 = vpop.f32.mrf.mxu0
      %v742 = vadd.f32 0.0, %v741
      %743 = vdwg.mxu0
      %v745 = vsel %vm430, %v495, 0
      %747 = vmatpush.msra.mxu0 0.0
      %748 = vmatpush.msra.mxu0 0.0
      %749 = vmatpush.msra.mxu0 0.0
      %750 = vmatpush.msra.mxu0 0.0
      %751 = vmatpush.msra.mxu0 0.0
      %752 = vmatpush.msra.mxu0 0.0
      %753 = vmatpush.msra.mxu0 0.0
      %754 = vmatpush.msra.mxu0 0.0
      %755 = vmatpush.msra.mxu0 0.0
      %756 = vmatpush.msra.mxu0 0.0
      %757 = vmatpush.msra.mxu0 0.0
      %758 = vmatpush.msra.mxu0 0.0
      %759 = vmatpush.msra.mxu0 0.0
      %760 = vmatpush.msra.mxu0 0.0
      %761 = vmatpush.msra.mxu0 0.0
      %762 = vmatpush.msra.mxu0 %v541
      %763 = vmatmul.f32.gmra.mxu0 %v745
      %v764 = vpop.f32.mrf.mxu0
      %v765 = vadd.f32 0.0, %v764
      %766 = vdwg.mxu0
      %v768 = vsel %vm430, %v518, 0
      %770 = vmatpush.msra.mxu0 0.0
      %771 = vmatpush.msra.mxu0 0.0
      %772 = vmatpush.msra.mxu0 0.0
      %773 = vmatpush.msra.mxu0 0.0
      %774 = vmatpush.msra.mxu0 0.0
      %775 = vmatpush.msra.mxu0 0.0
      %776 = vmatpush.msra.mxu0 0.0
      %777 = vmatpush.msra.mxu0 0.0
      %778 = vmatpush.msra.mxu0 0.0
      %779 = vmatpush.msra.mxu0 0.0
      %780 = vmatpush.msra.mxu0 0.0
      %781 = vmatpush.msra.mxu0 0.0
      %782 = vmatpush.msra.mxu0 0.0
      %783 = vmatpush.msra.mxu0 0.0
      %784 = vmatpush.msra.mxu0 0.0
      %785 = vmatpush.msra.mxu0 %v564
      %786 = vmatmul.f32.gmra.mxu0 %v768
      %v787 = vpop.f32.mrf.mxu0
      %v788 = vadd.f32 0.0, %v787
      %789 = vdwg.mxu0
      %v791 = vsel %vm430, %v541, 0
      %793 = vmatpush.msra.mxu0 0.0
      %794 = vmatpush.msra.mxu0 0.0
      %795 = vmatpush.msra.mxu0 0.0
      %796 = vmatpush.msra.mxu0 0.0
      %797 = vmatpush.msra.mxu0 0.0
      %798 = vmatpush.msra.mxu0 0.0
      %799 = vmatpush.msra.mxu0 0.0
      %800 = vmatpush.msra.mxu0 0.0
      %801 = vmatpush.msra.mxu0 0.0
      %802 = vmatpush.msra.mxu0 0.0
      %803 = vmatpush.msra.mxu0 0.0
      %804 = vmatpush.msra.mxu0 0.0
      %805 = vmatpush.msra.mxu0 0.0
      %806 = vmatpush.msra.mxu0 0.0
      %807 = vmatpush.msra.mxu0 0.0
      %808 = vmatpush.msra.mxu0 %v587
      %809 = vmatmul.f32.gmra.mxu0 %v791
      %v810 = vpop.f32.mrf.mxu0
      %v811 = vadd.f32 0.0, %v810
      %812 = vdwg.mxu0
      %v814 = vsel %vm430, %v564, 0
      %816 = vmatpush.msra.mxu0 0.0
      %817 = vmatpush.msra.mxu0 0.0
      %818 = vmatpush.msra.mxu0 0.0
      %819 = vmatpush.msra.mxu0 0.0
      %820 = vmatpush.msra.mxu0 0.0
      %821 = vmatpush.msra.mxu0 0.0
      %822 = vmatpush.msra.mxu0 0.0
      %823 = vmatpush.msra.mxu0 0.0
      %824 = vmatpush.msra.mxu0 0.0
      %825 = vmatpush.msra.mxu0 0.0
      %826 = vmatpush.msra.mxu0 0.0
      %827 = vmatpush.msra.mxu0 0.0
      %828 = vmatpush.msra.mxu0 0.0
      %829 = vmatpush.msra.mxu0 0.0
      %830 = vmatpush.msra.mxu0 0.0
      %831 = vmatpush.msra.mxu0 %v610
      %832 = vmatmul.f32.gmra.mxu0 %v814
      %v833 = vpop.f32.mrf.mxu0
      %v834 = vadd.f32 0.0, %v833
      %835 = vdwg.mxu0
      %v837 = vsel %vm430, %v587, 0
      %839 = vmatpush.msra.mxu0 0.0
      %840 = vmatpush.msra.mxu0 0.0
      %841 = vmatpush.msra.mxu0 0.0
      %842 = vmatpush.msra.mxu0 0.0
      %843 = vmatpush.msra.mxu0 0.0
      %844 = vmatpush.msra.mxu0 0.0
      %845 = vmatpush.msra.mxu0 0.0
      %846 = vmatpush.msra.mxu0 0.0
      %847 = vmatpush.msra.mxu0 0.0
      %848 = vmatpush.msra.mxu0 0.0
      %849 = vmatpush.msra.mxu0 0.0
      %850 = vmatpush.msra.mxu0 0.0
      %851 = vmatpush.msra.mxu0 0.0
      %852 = vmatpush.msra.mxu0 0.0
      %853 = vmatpush.msra.mxu0 0.0
      %854 = vmatpush.msra.mxu0 %v633
      %855 = vmatmul.f32.gmra.mxu0 %v837
      %v856 = vpop.f32.mrf.mxu0
      %v857 = vadd.f32 0.0, %v856
      %858 = vdwg.mxu0
      %v860 = vsel %vm430, %v610, 0
      %862 = vmatpush.msra.mxu0 0.0
      %863 = vmatpush.msra.mxu0 0.0
      %864 = vmatpush.msra.mxu0 0.0
      %865 = vmatpush.msra.mxu0 0.0
      %866 = vmatpush.msra.mxu0 0.0
      %867 = vmatpush.msra.mxu0 0.0
      %868 = vmatpush.msra.mxu0 0.0
      %869 = vmatpush.msra.mxu0 0.0
      %870 = vmatpush.msra.mxu0 0.0
      %871 = vmatpush.msra.mxu0 0.0
      %872 = vmatpush.msra.mxu0 0.0
      %873 = vmatpush.msra.mxu0 0.0
      %874 = vmatpush.msra.mxu0 0.0
      %875 = vmatpush.msra.mxu0 0.0
      %876 = vmatpush.msra.mxu0 0.0
      %877 = vmatpush.msra.mxu0 %v656
      %878 = vmatmul.f32.gmra.mxu0 %v860
      %v879 = vpop.f32.mrf.mxu0
      %v880 = vadd.f32 0.0, %v879
      %881 = vdwg.mxu0
      %v883 = vsel %vm430, %v633, 0
      %885 = vmatpush.msra.mxu0 0.0
      %886 = vmatpush.msra.mxu0 0.0
      %887 = vmatpush.msra.mxu0 0.0
      %888 = vmatpush.msra.mxu0 0.0
      %889 = vmatpush.msra.mxu0 0.0
      %890 = vmatpush.msra.mxu0 0.0
      %891 = vmatpush.msra.mxu0 0.0
      %892 = vmatpush.msra.mxu0 0.0
      %893 = vmatpush.msra.mxu0 0.0
      %894 = vmatpush.msra.mxu0 0.0
      %895 = vmatpush.msra.mxu0 0.0
      %896 = vmatpush.msra.mxu0 0.0
      %897 = vmatpush.msra.mxu0 0.0
      %898 = vmatpush.msra.mxu0 0.0
      %899 = vmatpush.msra.mxu0 0.0
      %900 = vmatpush.msra.mxu0 %v452
      %901 = vmatmul.f32.gmra.mxu0 %v883
      %v902 = vpop.f32.mrf.mxu0
      %v903 = vadd.f32 0.0, %v902
      %904 = vdwg.mxu0
      %v906 = vsel %vm430, %v656, 0
      %908 = vmatpush.msra.mxu0 0.0
      %909 = vmatpush.msra.mxu0 0.0
      %910 = vmatpush.msra.mxu0 0.0
      %911 = vmatpush.msra.mxu0 0.0
      %912 = vmatpush.msra.mxu0 0.0
      %913 = vmatpush.msra.mxu0 0.0
      %914 = vmatpush.msra.mxu0 0.0
      %915 = vmatpush.msra.mxu0 0.0
      %916 = vmatpush.msra.mxu0 0.0
      %917 = vmatpush.msra.mxu0 0.0
      %918 = vmatpush.msra.mxu0 0.0
      %919 = vmatpush.msra.mxu0 0.0
      %920 = vmatpush.msra.mxu0 0.0
      %921 = vmatpush.msra.mxu0 0.0
      %922 = vmatpush.msra.mxu0 0.0
      %923 = vmatpush.msra.mxu0 %v255
      %924 = vmatmul.f32.gmra.mxu0 %v906
      %v925 = vpop.f32.mrf.mxu0
      %v926 = vadd.f32 0.0, %v925
      %927 = vdwg.mxu0
      %928 = vmatpush.msra.mxu0 0.0
      %929 = vmatpush.msra.mxu0 0.0
      %930 = vmatpush.msra.mxu0 0.0
      %931 = vmatpush.msra.mxu0 0.0
      %932 = vmatpush.msra.mxu0 0.0
      %933 = vmatpush.msra.mxu0 0.0
      %934 = vmatpush.msra.mxu0 0.0
      %935 = vmatpush.msra.mxu0 0.0
      %936 = vmatpush.msra.mxu0 0.0
      %937 = vmatpush.msra.mxu0 0.0
      %938 = vmatpush.msra.mxu0 0.0
      %939 = vmatpush.msra.mxu0 0.0
      %940 = vmatpush.msra.mxu0 0.0
      %941 = vmatpush.msra.mxu0 0.0
      %942 = vmatpush.msra.mxu0 0.0
      %943 = vmatpush.msra.mxu0 %v255
      %944 = vmatmul.f32.gmra.mxu0 %v699
      %v945 = vpop.f32.mrf.mxu0
      %v946 = vadd.f32 0.0, %v945
      %947 = vdwg.mxu0
      %948 = vmatpush.msra.mxu0 0.0
      %949 = vmatpush.msra.mxu0 0.0
      %950 = vmatpush.msra.mxu0 0.0
      %951 = vmatpush.msra.mxu0 0.0
      %952 = vmatpush.msra.mxu0 0.0
      %953 = vmatpush.msra.mxu0 0.0
      %954 = vmatpush.msra.mxu0 0.0
      %955 = vmatpush.msra.mxu0 0.0
      %956 = vmatpush.msra.mxu0 0.0
      %957 = vmatpush.msra.mxu0 0.0
      %958 = vmatpush.msra.mxu0 0.0
      %959 = vmatpush.msra.mxu0 0.0
      %960 = vmatpush.msra.mxu0 0.0
      %961 = vmatpush.msra.mxu0 0.0
      %962 = vmatpush.msra.mxu0 0.0
      %963 = vmatpush.msra.mxu0 %v676
      %964 = vmatmul.f32.gmra.mxu0 %v432
      %v965 = vpop.f32.mrf.mxu0
      %v966 = vadd.f32 0.0, %v965
      %967 = vdwg.mxu0
      %968 = vmatpush.msra.mxu0 0.0
      %969 = vmatpush.msra.mxu0 0.0
      %970 = vmatpush.msra.mxu0 0.0
      %971 = vmatpush.msra.mxu0 0.0
      %972 = vmatpush.msra.mxu0 0.0
      %973 = vmatpush.msra.mxu0 0.0
      %974 = vmatpush.msra.mxu0 0.0
      %975 = vmatpush.msra.mxu0 0.0
      %976 = vmatpush.msra.mxu0 0.0
      %977 = vmatpush.msra.mxu0 0.0
      %978 = vmatpush.msra.mxu0 0.0
      %979 = vmatpush.msra.mxu0 0.0
      %980 = vmatpush.msra.mxu0 0.0
      %981 = vmatpush.msra.mxu0 0.0
      %982 = vmatpush.msra.mxu0 0.0
      %983 = vmatpush.msra.mxu0 %v696
      %984 = vmatmul.f32.gmra.mxu0 %v432
      %v985 = vpop.f32.mrf.mxu0
      %v986 = vadd.f32 0.0, %v985
      %987 = vdwg.mxu0
      %988 = vmatpush.msra.mxu0 0.0
      %989 = vmatpush.msra.mxu0 0.0
      %990 = vmatpush.msra.mxu0 0.0
      %991 = vmatpush.msra.mxu0 0.0
      %992 = vmatpush.msra.mxu0 0.0
      %993 = vmatpush.msra.mxu0 0.0
      %994 = vmatpush.msra.mxu0 0.0
      %995 = vmatpush.msra.mxu0 0.0
      %996 = vmatpush.msra.mxu0 0.0
      %997 = vmatpush.msra.mxu0 0.0
      %998 = vmatpush.msra.mxu0 0.0
      %999 = vmatpush.msra.mxu0 0.0
      %1000 = vmatpush.msra.mxu0 0.0
      %1001 = vmatpush.msra.mxu0 0.0
      %1002 = vmatpush.msra.mxu0 0.0
      %1003 = vmatpush.msra.mxu0 %v719
      %1004 = vmatmul.f32.gmra.mxu0 %v432
      %v1005 = vpop.f32.mrf.mxu0
      %v1006 = vadd.f32 0.0, %v1005
      %1007 = vdwg.mxu0
      %1008 = vmatpush.msra.mxu0 0.0
      %1009 = vmatpush.msra.mxu0 0.0
      %1010 = vmatpush.msra.mxu0 0.0
      %1011 = vmatpush.msra.mxu0 0.0
      %1012 = vmatpush.msra.mxu0 0.0
      %1013 = vmatpush.msra.mxu0 0.0
      %1014 = vmatpush.msra.mxu0 0.0
      %1015 = vmatpush.msra.mxu0 0.0
      %1016 = vmatpush.msra.mxu0 0.0
      %1017 = vmatpush.msra.mxu0 0.0
      %1018 = vmatpush.msra.mxu0 0.0
      %1019 = vmatpush.msra.mxu0 0.0
      %1020 = vmatpush.msra.mxu0 0.0
      %1021 = vmatpush.msra.mxu0 0.0
      %1022 = vmatpush.msra.mxu0 0.0
      %1023 = vmatpush.msra.mxu0 %v742
      %1024 = vmatmul.f32.gmra.mxu0 %v432
      %v1025 = vpop.f32.mrf.mxu0
      %v1026 = vadd.f32 0.0, %v1025
      %1027 = vdwg.mxu0
      %v1029 = vsel %vm430, %v676, 0
      %1031 = vmatpush.msra.mxu0 0.0
      %1032 = vmatpush.msra.mxu0 0.0
      %1033 = vmatpush.msra.mxu0 0.0
      %1034 = vmatpush.msra.mxu0 0.0
      %1035 = vmatpush.msra.mxu0 0.0
      %1036 = vmatpush.msra.mxu0 0.0
      %1037 = vmatpush.msra.mxu0 0.0
      %1038 = vmatpush.msra.mxu0 0.0
      %1039 = vmatpush.msra.mxu0 0.0
      %1040 = vmatpush.msra.mxu0 0.0
      %1041 = vmatpush.msra.mxu0 0.0
      %1042 = vmatpush.msra.mxu0 0.0
      %1043 = vmatpush.msra.mxu0 0.0
      %1044 = vmatpush.msra.mxu0 0.0
      %1045 = vmatpush.msra.mxu0 0.0
      %1046 = vmatpush.msra.mxu0 %v765
      %1047 = vmatmul.f32.gmra.mxu0 %v1029
      %v1048 = vpop.f32.mrf.mxu0
      %v1049 = vadd.f32 0.0, %v1048
      %1050 = vdwg.mxu0
      %v1052 = vsel %vm430, %v696, 0
      %1054 = vmatpush.msra.mxu0 0.0
      %1055 = vmatpush.msra.mxu0 0.0
      %1056 = vmatpush.msra.mxu0 0.0
      %1057 = vmatpush.msra.mxu0 0.0
      %1058 = vmatpush.msra.mxu0 0.0
      %1059 = vmatpush.msra.mxu0 0.0
      %1060 = vmatpush.msra.mxu0 0.0
      %1061 = vmatpush.msra.mxu0 0.0
      %1062 = vmatpush.msra.mxu0 0.0
      %1063 = vmatpush.msra.mxu0 0.0
      %1064 = vmatpush.msra.mxu0 0.0
      %1065 = vmatpush.msra.mxu0 0.0
      %1066 = vmatpush.msra.mxu0 0.0
      %1067 = vmatpush.msra.mxu0 0.0
      %1068 = vmatpush.msra.mxu0 0.0
      %1069 = vmatpush.msra.mxu0 %v788
      %1070 = vmatmul.f32.gmra.mxu0 %v1052
      %v1071 = vpop.f32.mrf.mxu0
      %v1072 = vadd.f32 0.0, %v1071
      %1073 = vdwg.mxu0
      %v1075 = vsel %vm430, %v719, 0
      %1077 = vmatpush.msra.mxu0 0.0
      %1078 = vmatpush.msra.mxu0 0.0
      %1079 = vmatpush.msra.mxu0 0.0
      %1080 = vmatpush.msra.mxu0 0.0
      %1081 = vmatpush.msra.mxu0 0.0
      %1082 = vmatpush.msra.mxu0 0.0
      %1083 = vmatpush.msra.mxu0 0.0
      %1084 = vmatpush.msra.mxu0 0.0
      %1085 = vmatpush.msra.mxu0 0.0
      %1086 = vmatpush.msra.mxu0 0.0
      %1087 = vmatpush.msra.mxu0 0.0
      %1088 = vmatpush.msra.mxu0 0.0
      %1089 = vmatpush.msra.mxu0 0.0
      %1090 = vmatpush.msra.mxu0 0.0
      %1091 = vmatpush.msra.mxu0 0.0
      %1092 = vmatpush.msra.mxu0 %v811
      %1093 = vmatmul.f32.gmra.mxu0 %v1075
      %v1094 = vpop.f32.mrf.mxu0
      %v1095 = vadd.f32 0.0, %v1094
      %1096 = vdwg.mxu0
      %v1098 = vsel %vm430, %v742, 0
      %1100 = vmatpush.msra.mxu0 0.0
      %1101 = vmatpush.msra.mxu0 0.0
      %1102 = vmatpush.msra.mxu0 0.0
      %1103 = vmatpush.msra.mxu0 0.0
      %1104 = vmatpush.msra.mxu0 0.0
      %1105 = vmatpush.msra.mxu0 0.0
      %1106 = vmatpush.msra.mxu0 0.0
      %1107 = vmatpush.msra.mxu0 0.0
      %1108 = vmatpush.msra.mxu0 0.0
      %1109 = vmatpush.msra.mxu0 0.0
      %1110 = vmatpush.msra.mxu0 0.0
      %1111 = vmatpush.msra.mxu0 0.0
      %1112 = vmatpush.msra.mxu0 0.0
      %1113 = vmatpush.msra.mxu0 0.0
      %1114 = vmatpush.msra.mxu0 0.0
      %1115 = vmatpush.msra.mxu0 %v834
      %1116 = vmatmul.f32.gmra.mxu0 %v1098
      %v1117 = vpop.f32.mrf.mxu0
      %v1118 = vadd.f32 0.0, %v1117
      %1119 = vdwg.mxu0
      %v1121 = vsel %vm430, %v788, 0
      %1123 = vmatpush.msra.mxu0 0.0
      %1124 = vmatpush.msra.mxu0 0.0
      %1125 = vmatpush.msra.mxu0 0.0
      %1126 = vmatpush.msra.mxu0 0.0
      %1127 = vmatpush.msra.mxu0 0.0
      %1128 = vmatpush.msra.mxu0 0.0
      %1129 = vmatpush.msra.mxu0 0.0
      %1130 = vmatpush.msra.mxu0 0.0
      %1131 = vmatpush.msra.mxu0 0.0
      %1132 = vmatpush.msra.mxu0 0.0
      %1133 = vmatpush.msra.mxu0 0.0
      %1134 = vmatpush.msra.mxu0 0.0
      %1135 = vmatpush.msra.mxu0 0.0
      %1136 = vmatpush.msra.mxu0 0.0
      %1137 = vmatpush.msra.mxu0 0.0
      %1138 = vmatpush.msra.mxu0 %v880
      %1139 = vmatmul.f32.gmra.mxu0 %v1121
      %v1140 = vpop.f32.mrf.mxu0
      %v1141 = vadd.f32 0.0, %v1140
      %1142 = vdwg.mxu0
      %v1144 = vsel %vm430, %v811, 0
      %1146 = vmatpush.msra.mxu0 0.0
      %1147 = vmatpush.msra.mxu0 0.0
      %1148 = vmatpush.msra.mxu0 0.0
      %1149 = vmatpush.msra.mxu0 0.0
      %1150 = vmatpush.msra.mxu0 0.0
      %1151 = vmatpush.msra.mxu0 0.0
      %1152 = vmatpush.msra.mxu0 0.0
      %1153 = vmatpush.msra.mxu0 0.0
      %1154 = vmatpush.msra.mxu0 0.0
      %1155 = vmatpush.msra.mxu0 0.0
      %1156 = vmatpush.msra.mxu0 0.0
      %1157 = vmatpush.msra.mxu0 0.0
      %1158 = vmatpush.msra.mxu0 0.0
      %1159 = vmatpush.msra.mxu0 0.0
      %1160 = vmatpush.msra.mxu0 0.0
      %1161 = vmatpush.msra.mxu0 %v903
      %1162 = vmatmul.f32.gmra.mxu0 %v1144
      %v1163 = vpop.f32.mrf.mxu0
      %v1164 = vadd.f32 0.0, %v1163
      %1165 = vdwg.mxu0
      %v1167 = vsel %vm430, %v834, 0
      %1169 = vmatpush.msra.mxu0 0.0
      %1170 = vmatpush.msra.mxu0 0.0
      %1171 = vmatpush.msra.mxu0 0.0
      %1172 = vmatpush.msra.mxu0 0.0
      %1173 = vmatpush.msra.mxu0 0.0
      %1174 = vmatpush.msra.mxu0 0.0
      %1175 = vmatpush.msra.mxu0 0.0
      %1176 = vmatpush.msra.mxu0 0.0
      %1177 = vmatpush.msra.mxu0 0.0
      %1178 = vmatpush.msra.mxu0 0.0
      %1179 = vmatpush.msra.mxu0 0.0
      %1180 = vmatpush.msra.mxu0 0.0
      %1181 = vmatpush.msra.mxu0 0.0
      %1182 = vmatpush.msra.mxu0 0.0
      %1183 = vmatpush.msra.mxu0 0.0
      %1184 = vmatpush.msra.mxu0 %v926
      %1185 = vmatmul.f32.gmra.mxu0 %v1167
      %v1186 = vpop.f32.mrf.mxu0
      %v1187 = vadd.f32 0.0, %v1186
      %1188 = vdwg.mxu0
      %v1190 = vsel %vm430, %v857, 0
      %1192 = vmatpush.msra.mxu0 0.0
      %1193 = vmatpush.msra.mxu0 0.0
      %1194 = vmatpush.msra.mxu0 0.0
      %1195 = vmatpush.msra.mxu0 0.0
      %1196 = vmatpush.msra.mxu0 0.0
      %1197 = vmatpush.msra.mxu0 0.0
      %1198 = vmatpush.msra.mxu0 0.0
      %1199 = vmatpush.msra.mxu0 0.0
      %1200 = vmatpush.msra.mxu0 0.0
      %1201 = vmatpush.msra.mxu0 0.0
      %1202 = vmatpush.msra.mxu0 0.0
      %1203 = vmatpush.msra.mxu0 0.0
      %1204 = vmatpush.msra.mxu0 0.0
      %1205 = vmatpush.msra.mxu0 0.0
      %1206 = vmatpush.msra.mxu0 0.0
      %1207 = vmatpush.msra.mxu0 %v946
      %1208 = vmatmul.f32.gmra.mxu0 %v1190
      %v1209 = vpop.f32.mrf.mxu0
      %v1210 = vadd.f32 0.0, %v1209
      %1211 = vdwg.mxu0
      %v1213 = vsel %vm430, %v880, 0
      %1215 = vmatpush.msra.mxu0 0.0
      %1216 = vmatpush.msra.mxu0 0.0
      %1217 = vmatpush.msra.mxu0 0.0
      %1218 = vmatpush.msra.mxu0 0.0
      %1219 = vmatpush.msra.mxu0 0.0
      %1220 = vmatpush.msra.mxu0 0.0
      %1221 = vmatpush.msra.mxu0 0.0
      %1222 = vmatpush.msra.mxu0 0.0
      %1223 = vmatpush.msra.mxu0 0.0
      %1224 = vmatpush.msra.mxu0 0.0
      %1225 = vmatpush.msra.mxu0 0.0
      %1226 = vmatpush.msra.mxu0 0.0
      %1227 = vmatpush.msra.mxu0 0.0
      %1228 = vmatpush.msra.mxu0 0.0
      %1229 = vmatpush.msra.mxu0 0.0
      %1230 = vmatpush.msra.mxu0 %v255
      %1231 = vmatmul.f32.gmra.mxu0 %v1213
      %v1232 = vpop.f32.mrf.mxu0
      %v1233 = vadd.f32 0.0, %v1232
      %1234 = vdwg.mxu0
      %v1236 = vsel %vm430, %v903, 0
      %1238 = vmatpush.msra.mxu0 0.0
      %1239 = vmatpush.msra.mxu0 0.0
      %1240 = vmatpush.msra.mxu0 0.0
      %1241 = vmatpush.msra.mxu0 0.0
      %1242 = vmatpush.msra.mxu0 0.0
      %1243 = vmatpush.msra.mxu0 0.0
      %1244 = vmatpush.msra.mxu0 0.0
      %1245 = vmatpush.msra.mxu0 0.0
      %1246 = vmatpush.msra.mxu0 0.0
      %1247 = vmatpush.msra.mxu0 0.0
      %1248 = vmatpush.msra.mxu0 0.0
      %1249 = vmatpush.msra.mxu0 0.0
      %1250 = vmatpush.msra.mxu0 0.0
      %1251 = vmatpush.msra.mxu0 0.0
      %1252 = vmatpush.msra.mxu0 0.0
      %1253 = vmatpush.msra.mxu0 %v255
      %1254 = vmatmul.f32.gmra.mxu0 %v1236
      %v1255 = vpop.f32.mrf.mxu0
      %v1256 = vadd.f32 0.0, %v1255
      %1257 = vdwg.mxu0
      %v1259 = vsel %vm430, %v926, 0
      %1261 = vmatpush.msra.mxu0 0.0
      %1262 = vmatpush.msra.mxu0 0.0
      %1263 = vmatpush.msra.mxu0 0.0
      %1264 = vmatpush.msra.mxu0 0.0
      %1265 = vmatpush.msra.mxu0 0.0
      %1266 = vmatpush.msra.mxu0 0.0
      %1267 = vmatpush.msra.mxu0 0.0
      %1268 = vmatpush.msra.mxu0 0.0
      %1269 = vmatpush.msra.mxu0 0.0
      %1270 = vmatpush.msra.mxu0 0.0
      %1271 = vmatpush.msra.mxu0 0.0
      %1272 = vmatpush.msra.mxu0 0.0
      %1273 = vmatpush.msra.mxu0 0.0
      %1274 = vmatpush.msra.mxu0 0.0
      %1275 = vmatpush.msra.mxu0 0.0
      %1276 = vmatpush.msra.mxu0 %v255
      %1277 = vmatmul.f32.gmra.mxu0 %v1259
      %v1278 = vpop.f32.mrf.mxu0
      %v1279 = vadd.f32 0.0, %v1278
      %1280 = vdwg.mxu0
      %v1282 = vsel %vm430, %v946, 0
      %1284 = vmatpush.msra.mxu0 0.0
      %1285 = vmatpush.msra.mxu0 0.0
      %1286 = vmatpush.msra.mxu0 0.0
      %1287 = vmatpush.msra.mxu0 0.0
      %1288 = vmatpush.msra.mxu0 0.0
      %1289 = vmatpush.msra.mxu0 0.0
      %1290 = vmatpush.msra.mxu0 0.0
      %1291 = vmatpush.msra.mxu0 0.0
      %1292 = vmatpush.msra.mxu0 0.0
      %1293 = vmatpush.msra.mxu0 0.0
      %1294 = vmatpush.msra.mxu0 0.0
      %1295 = vmatpush.msra.mxu0 0.0
      %1296 = vmatpush.msra.mxu0 0.0
      %1297 = vmatpush.msra.mxu0 0.0
      %1298 = vmatpush.msra.mxu0 0.0
      %1299 = vmatpush.msra.mxu0 %v255
      %1300 = vmatmul.f32.gmra.mxu0 %v1282
      %v1301 = vpop.f32.mrf.mxu0
      %v1302 = vadd.f32 0.0, %v1301
      %1303 = vdwg.mxu0
      %1305 = vset.pattern.permute.xlu0 0
      %1306 = vperm.xlu0 %1305, %v265
      %v1307 = vpop.permute.xlu0 %1306
      %v1309 = vmul.f32 %v1307, %v966
      %v1310 = vmul.f32 %v1307, %v986
      %v1311 = vmul.f32 %v1307, %v1006
      %v1312 = vmul.f32 %v1307, %v1026
      %v1313 = vmul.f32 %v1307, %v1049
      %v1314 = vmul.f32 %v1307, %v1072
      %v1315 = vmul.f32 %v1307, %v1095
      %v1316 = vmul.f32 %v1307, %v1118
      %v1317 = vsel %vm430, %v1309, 0.0
      %v1318 = vrot.slane %v1317, 4
      %v1319 = vadd.f32 %v1317, %v1318
      %v1320 = vrot.slane %v1319, 2
      %v1321 = vadd.f32 %v1319, %v1320
      %v1322 = vrot.slane %v1321, 1
      %v1323 = vadd.f32 %v1321, %v1322
      %v1324 = vsel %vm430, %v1310, 0.0
      %v1325 = vrot.slane %v1324, 4
      %v1326 = vadd.f32 %v1324, %v1325
      %v1327 = vrot.slane %v1326, 2
      %v1328 = vadd.f32 %v1326, %v1327
      %v1329 = vrot.slane %v1328, 1
      %v1330 = vadd.f32 %v1328, %v1329
      %v1331 = vsel %vm430, %v1311, 0.0
      %v1332 = vrot.slane %v1331, 4
      %v1333 = vadd.f32 %v1331, %v1332
      %v1334 = vrot.slane %v1333, 2
      %v1335 = vadd.f32 %v1333, %v1334
      %v1336 = vrot.slane %v1335, 1
      %v1337 = vadd.f32 %v1335, %v1336
      %v1338 = vsel %vm430, %v1312, 0.0
      %v1339 = vrot.slane %v1338, 4
      %v1340 = vadd.f32 %v1338, %v1339
      %v1341 = vrot.slane %v1340, 2
      %v1342 = vadd.f32 %v1340, %v1341
      %v1343 = vrot.slane %v1342, 1
      %v1344 = vadd.f32 %v1342, %v1343
      %v1345 = vsel %vm430, %v1313, 0.0
      %v1346 = vrot.slane %v1345, 4
      %v1347 = vadd.f32 %v1345, %v1346
      %v1348 = vrot.slane %v1347, 2
      %v1349 = vadd.f32 %v1347, %v1348
      %v1350 = vrot.slane %v1349, 1
      %v1351 = vadd.f32 %v1349, %v1350
      %v1352 = vsel %vm430, %v1314, 0.0
      %v1353 = vrot.slane %v1352, 4
      %v1354 = vadd.f32 %v1352, %v1353
      %v1355 = vrot.slane %v1354, 2
      %v1356 = vadd.f32 %v1354, %v1355
      %v1357 = vrot.slane %v1356, 1
      %v1358 = vadd.f32 %v1356, %v1357
      %v1359 = vsel %vm430, %v1315, 0.0
      %v1360 = vrot.slane %v1359, 4
      %v1361 = vadd.f32 %v1359, %v1360
      %v1362 = vrot.slane %v1361, 2
      %v1363 = vadd.f32 %v1361, %v1362
      %v1364 = vrot.slane %v1363, 1
      %v1365 = vadd.f32 %v1363, %v1364
      %v1366 = vsel %vm430, %v1316, 0.0
      %v1367 = vrot.slane %v1366, 4
      %v1368 = vadd.f32 %v1366, %v1367
      %v1369 = vrot.slane %v1368, 2
      %v1370 = vadd.f32 %v1368, %v1369
      %v1371 = vrot.slane %v1370, 1
      %v1372 = vadd.f32 %v1370, %v1371
      %v1374 = vperm.slane %v266, 0
      %v1376 = vmul.f32 %v1141, %v1374
      %v1377 = vmul.f32 %v1164, %v1374
      %v1378 = vmul.f32 %v1187, %v1374
      %v1379 = vmul.f32 %v1210, %v1374
      %v1380 = vmul.f32 %v1233, %v1374
      %v1381 = vmul.f32 %v1256, %v1374
      %v1382 = vmul.f32 %v1279, %v1374
      %v1383 = vmul.f32 %v1302, %v1374
      %v1384 = vsel %vm430, %v1376, 0.0
      %1385 = vadd.xlane.f32.xlu0 %v1384
      %v1386 = vpop.xlane.xlu0 %1385
      %v1387 = vsel %vm430, %v1377, 0.0
      %1388 = vadd.xlane.f32.xlu0 %v1387
      %v1389 = vpop.xlane.xlu0 %1388
      %v1390 = vsel %vm430, %v1378, 0.0
      %1391 = vadd.xlane.f32.xlu0 %v1390
      %v1392 = vpop.xlane.xlu0 %1391
      %v1393 = vsel %vm430, %v1379, 0.0
      %1394 = vadd.xlane.f32.xlu0 %v1393
      %v1395 = vpop.xlane.xlu0 %1394
      %v1396 = vsel %vm430, %v1380, 0.0
      %1397 = vadd.xlane.f32.xlu0 %v1396
      %v1398 = vpop.xlane.xlu0 %1397
      %v1399 = vsel %vm430, %v1381, 0.0
      %1400 = vadd.xlane.f32.xlu0 %v1399
      %v1401 = vpop.xlane.xlu0 %1400
      %v1402 = vsel %vm430, %v1382, 0.0
      %1403 = vadd.xlane.f32.xlu0 %v1402
      %v1404 = vpop.xlane.xlu0 %1403
      %v1405 = vsel %vm430, %v1383, 0.0
      %1406 = vadd.xlane.f32.xlu0 %v1405
      %v1407 = vpop.xlane.xlu0 %1406
      %v1408 = vlaneseq
      %v1409 = vshrl.u32 %v1408, 7
      %1411 = vset.pattern.permute.xlu0 %v1409
      %1412 = vperm.xlu0 %1411, %v1323
      %v1413 = vpop.permute.xlu0 %1412
      %v1414 = vlaneseq
      %v1415 = vshrl.u32 %v1414, 7
      %1417 = vset.pattern.permute.xlu0 %v1415
      %1418 = vperm.xlu0 %1417, %v1330
      %v1419 = vpop.permute.xlu0 %1418
      %v1420 = vlaneseq
      %v1421 = vshrl.u32 %v1420, 7
      %1423 = vset.pattern.permute.xlu0 %v1421
      %1424 = vperm.xlu0 %1423, %v1337
      %v1425 = vpop.permute.xlu0 %1424
      %v1426 = vlaneseq
      %v1427 = vshrl.u32 %v1426, 7
      %1429 = vset.pattern.permute.xlu0 %v1427
      %1430 = vperm.xlu0 %1429, %v1344
      %v1431 = vpop.permute.xlu0 %1430
      %v1432 = vlaneseq
      %v1433 = vshrl.u32 %v1432, 7
      %1435 = vset.pattern.permute.xlu0 %v1433
      %1436 = vperm.xlu0 %1435, %v1351
      %v1437 = vpop.permute.xlu0 %1436
      %v1438 = vlaneseq
      %v1439 = vshrl.u32 %v1438, 7
      %1441 = vset.pattern.permute.xlu0 %v1439
      %1442 = vperm.xlu0 %1441, %v1358
      %v1443 = vpop.permute.xlu0 %1442
      %v1444 = vlaneseq
      %v1445 = vshrl.u32 %v1444, 7
      %1447 = vset.pattern.permute.xlu0 %v1445
      %1448 = vperm.xlu0 %1447, %v1365
      %v1449 = vpop.permute.xlu0 %1448
      %v1450 = vlaneseq
      %v1451 = vshrl.u32 %v1450, 7
      %1453 = vset.pattern.permute.xlu0 %v1451
      %1454 = vperm.xlu0 %1453, %v1372
      %v1455 = vpop.permute.xlu0 %1454
      %v1464 = vperm.slane %v1386, %v252
      %v1465 = vperm.slane %v1389, %v252
      %v1466 = vperm.slane %v1392, %v252
      %v1467 = vperm.slane %v1395, %v252
      %v1468 = vperm.slane %v1398, %v252
      %v1469 = vperm.slane %v1401, %v252
      %v1470 = vperm.slane %v1404, %v252
      %v1471 = vperm.slane %v1407, %v252
      %vm1472 = vcmask 1042434
      %v1473 = vsel %vm1472, %v1464, %v1464
      %vm1474 = vcmask 1043459
      %v1475 = vsel %vm1474, %v1464, %v1473
      %vm1476 = vcmask 1044484
      %v1477 = vsel %vm1476, %v1464, %v1475
      %vm1478 = vcmask 1045509
      %v1479 = vsel %vm1478, %v1464, %v1477
      %vm1480 = vcmask 1046534
      %v1481 = vsel %vm1480, %v1464, %v1479
      %vm1482 = vcmask 1047559
      %v1483 = vsel %vm1482, %v1464, %v1481
      %v1484 = vsel %vm1472, %v1465, %v1465
      %v1485 = vsel %vm1474, %v1465, %v1484
      %v1486 = vsel %vm1476, %v1465, %v1485
      %v1487 = vsel %vm1478, %v1465, %v1486
      %v1488 = vsel %vm1480, %v1465, %v1487
      %v1489 = vsel %vm1482, %v1465, %v1488
      %v1490 = vsel %vm1472, %v1466, %v1466
      %v1491 = vsel %vm1474, %v1466, %v1490
      %v1492 = vsel %vm1476, %v1466, %v1491
      %v1493 = vsel %vm1478, %v1466, %v1492
      %v1494 = vsel %vm1480, %v1466, %v1493
      %v1495 = vsel %vm1482, %v1466, %v1494
      %v1496 = vsel %vm1472, %v1467, %v1467
      %v1497 = vsel %vm1474, %v1467, %v1496
      %v1498 = vsel %vm1476, %v1467, %v1497
      %v1499 = vsel %vm1478, %v1467, %v1498
      %v1500 = vsel %vm1480, %v1467, %v1499
      %v1501 = vsel %vm1482, %v1467, %v1500
      %v1502 = vsel %vm1472, %v1468, %v1468
      %v1503 = vsel %vm1474, %v1468, %v1502
      %v1504 = vsel %vm1476, %v1468, %v1503
      %v1505 = vsel %vm1478, %v1468, %v1504
      %v1506 = vsel %vm1480, %v1468, %v1505
      %v1507 = vsel %vm1482, %v1468, %v1506
      %v1508 = vsel %vm1472, %v1469, %v1469
      %v1509 = vsel %vm1474, %v1469, %v1508
      %v1510 = vsel %vm1476, %v1469, %v1509
      %v1511 = vsel %vm1478, %v1469, %v1510
      %v1512 = vsel %vm1480, %v1469, %v1511
      %v1513 = vsel %vm1482, %v1469, %v1512
      %v1514 = vsel %vm1472, %v1470, %v1470
      %v1515 = vsel %vm1474, %v1470, %v1514
      %v1516 = vsel %vm1476, %v1470, %v1515
      %v1517 = vsel %vm1478, %v1470, %v1516
      %v1518 = vsel %vm1480, %v1470, %v1517
      %v1519 = vsel %vm1482, %v1470, %v1518
      %v1520 = vsel %vm1472, %v1471, %v1471
      %v1521 = vsel %vm1474, %v1471, %v1520
      %v1522 = vsel %vm1476, %v1471, %v1521
      %v1523 = vsel %vm1478, %v1471, %v1522
      %v1524 = vsel %vm1480, %v1471, %v1523
      %v1525 = vsel %vm1482, %v1471, %v1524
      %v1534 = vmul.f32 %v1413, %v1483
      %v1535 = vmul.f32 %v1419, %v1489
      %v1536 = vmul.f32 %v1425, %v1495
      %v1537 = vmul.f32 %v1431, %v1501
      %v1538 = vmul.f32 %v1437, %v1507
      %v1539 = vmul.f32 %v1443, %v1513
      %v1540 = vmul.f32 %v1449, %v1519
      %v1541 = vmul.f32 %v1455, %v1525
      %v1542 = vrot.slane %v1536, 4
      %v1543 = vsel %vm318, %v1542, %v1534
      %v1544 = vrot.slane %v1534, 4
      %v1545 = vsel %vm318, %v1536, %v1544
      %v1547 = vunpack.c.l.s4 1983009808
      %v1548 = vunpack.c.0.s8 %v1547
      %v1549 = vperm.slane %v1543, %v1548
      %v1551 = vunpack.c.l.s4 1983009808
      %v1552 = vunpack.c.0.s8 %v1551
      %v1553 = vperm.slane %v1545, %v1552
      %v1554 = vrot.slane %v1537, 4
      %v1555 = vsel %vm318, %v1554, %v1535
      %v1556 = vrot.slane %v1535, 4
      %v1557 = vsel %vm318, %v1537, %v1556
      %v1559 = vunpack.c.l.s4 1983009808
      %v1560 = vunpack.c.0.s8 %v1559
      %v1561 = vperm.slane %v1555, %v1560
      %v1563 = vunpack.c.l.s4 1983009808
      %v1564 = vunpack.c.0.s8 %v1563
      %v1565 = vperm.slane %v1557, %v1564
      %v1566 = vrot.slane %v1540, 4
      %v1567 = vsel %vm318, %v1566, %v1538
      %v1568 = vrot.slane %v1538, 4
      %v1569 = vsel %vm318, %v1540, %v1568
      %v1571 = vunpack.c.l.s4 1983009808
      %v1572 = vunpack.c.0.s8 %v1571
      %v1573 = vperm.slane %v1567, %v1572
      %v1575 = vunpack.c.l.s4 1983009808
      %v1576 = vunpack.c.0.s8 %v1575
      %v1577 = vperm.slane %v1569, %v1576
      %v1578 = vrot.slane %v1541, 4
      %v1579 = vsel %vm318, %v1578, %v1539
      %v1580 = vrot.slane %v1539, 4
      %v1581 = vsel %vm318, %v1541, %v1580
      %v1583 = vunpack.c.l.s4 1983009808
      %v1584 = vunpack.c.0.s8 %v1583
      %v1585 = vperm.slane %v1579, %v1584
      %v1587 = vunpack.c.l.s4 1983009808
      %v1588 = vunpack.c.0.s8 %v1587
      %v1589 = vperm.slane %v1581, %v1588
      %v1590 = vrot.slane %v1561, 4
      %v1591 = vsel %vm318, %v1590, %v1549
      %v1592 = vrot.slane %v1549, 4
      %v1593 = vsel %vm318, %v1561, %v1592
      %v1595 = vunpack.c.l.s4 1934713408
      %v1596 = vunpack.c.0.s8 %v1595
      %v1597 = vperm.slane %v1591, %v1596
      %v1599 = vunpack.c.l.s4 1934713408
      %v1600 = vunpack.c.0.s8 %v1599
      %v1601 = vperm.slane %v1593, %v1600
      %v1602 = vrot.slane %v1565, 4
      %v1603 = vsel %vm318, %v1602, %v1553
      %v1604 = vrot.slane %v1553, 4
      %v1605 = vsel %vm318, %v1565, %v1604
      %v1607 = vunpack.c.l.s4 1934713408
      %v1608 = vunpack.c.0.s8 %v1607
      %v1609 = vperm.slane %v1603, %v1608
      %v1611 = vunpack.c.l.s4 1934713408
      %v1612 = vunpack.c.0.s8 %v1611
      %v1613 = vperm.slane %v1605, %v1612
      %v1614 = vrot.slane %v1585, 4
      %v1615 = vsel %vm318, %v1614, %v1573
      %v1616 = vrot.slane %v1573, 4
      %v1617 = vsel %vm318, %v1585, %v1616
      %v1619 = vunpack.c.l.s4 1934713408
      %v1620 = vunpack.c.0.s8 %v1619
      %v1621 = vperm.slane %v1615, %v1620
      %v1623 = vunpack.c.l.s4 1934713408
      %v1624 = vunpack.c.0.s8 %v1623
      %v1625 = vperm.slane %v1617, %v1624
      %v1626 = vrot.slane %v1589, 4
      %v1627 = vsel %vm318, %v1626, %v1577
      %v1628 = vrot.slane %v1577, 4
      %v1629 = vsel %vm318, %v1589, %v1628
      %v1631 = vunpack.c.l.s4 1934713408
      %v1632 = vunpack.c.0.s8 %v1631
      %v1633 = vperm.slane %v1627, %v1632
      %v1635 = vunpack.c.l.s4 1934713408
      %v1636 = vunpack.c.0.s8 %v1635
      %v1637 = vperm.slane %v1629, %v1636
      %v1638 = vrot.slane %v1621, 4
      %v1639 = vsel %vm318, %v1638, %v1597
      %v1640 = vrot.slane %v1597, 4
      %v1641 = vsel %vm318, %v1621, %v1640
      %v1642 = vrot.slane %v1625, 4
      %v1643 = vsel %vm318, %v1642, %v1601
      %v1644 = vrot.slane %v1601, 4
      %v1645 = vsel %vm318, %v1625, %v1644
      %v1646 = vrot.slane %v1633, 4
      %v1647 = vsel %vm318, %v1646, %v1609
      %v1648 = vrot.slane %v1609, 4
      %v1649 = vsel %vm318, %v1633, %v1648
      %v1650 = vrot.slane %v1637, 4
      %v1651 = vsel %vm318, %v1650, %v1613
      %v1652 = vrot.slane %v1613, 4
      %v1653 = vsel %vm318, %v1637, %v1652
      %1655 = vrot.lane.b32.xlu0 %v1641, 8
      %v1656 = vpop.permute.xlu0 %1655
      %1659 = vrot.lane.b32.xlu0 %v1643, 16
      %v1660 = vpop.permute.xlu0 %1659
      %1663 = vrot.lane.b32.xlu0 %v1645, 24
      %v1664 = vpop.permute.xlu0 %1663
      %1667 = vrot.lane.b32.xlu0 %v1647, 32
      %v1668 = vpop.permute.xlu0 %1667
      %1671 = vrot.lane.b32.xlu0 %v1649, 40
      %v1672 = vpop.permute.xlu0 %1671
      %1675 = vrot.lane.b32.xlu0 %v1651, 48
      %v1676 = vpop.permute.xlu0 %1675
      %1679 = vrot.lane.b32.xlu0 %v1653, 56
      %v1680 = vpop.permute.xlu0 %1679
      %v1682 = vsel %vm430, %v1639, %v1656
      %vm1683 = vcmask 130048
      %v1684 = vsel %vm1683, %v1682, %v1660
      %vm1685 = vcmask 195584
      %v1686 = vsel %vm1685, %v1684, %v1664
      %vm1687 = vcmask 261120
      %v1688 = vsel %vm1687, %v1686, %v1668
      %vm1689 = vcmask 326656
      %v1690 = vsel %vm1689, %v1688, %v1672
      %vm1691 = vcmask 392192
      %v1692 = vsel %vm1691, %v1690, %v1676
      %vm1693 = vcmask 457728
      %v1694 = vsel %vm1693, %v1692, %v1680
      %vm1695 = vcmask 523264
      %v1697 = vsel %vm1695, %v1694, 0
      %1699 = vmatpush.msra.mxu0 0.0
      %1700 = vmatpush.msra.mxu0 0.0
      %1701 = vmatpush.msra.mxu0 0.0
      %1702 = vmatpush.msra.mxu0 0.0
      %1703 = vmatpush.msra.mxu0 0.0
      %1704 = vmatpush.msra.mxu0 0.0
      %1705 = vmatpush.msra.mxu0 0.0
      %1706 = vmatpush.msra.mxu0 0.0
      %1707 = vmatpush.msra.mxu0 %v264
      %1708 = vmatpush.msra.mxu0 %v263
      %1709 = vmatpush.msra.mxu0 %v262
      %1710 = vmatpush.msra.mxu0 %v261
      %1711 = vmatpush.msra.mxu0 %v260
      %1712 = vmatpush.msra.mxu0 %v259
      %1713 = vmatpush.msra.mxu0 %v258
      %1714 = vmatpush.msra.mxu0 %v257
      %1715 = vmatmul.f32.gmra.mxu0 %v1697
      %v1716 = vpop.f32.mrf.mxu0
      %v1717 = vadd.f32 0.0, %v1716
      %1718 = vdwg.mxu0
      %v1719 = vmax.f32 %v1717, 0.0
      %v1720 = vadd.f32 %v1719, %v248
      %v1721 = vmul.f32 %v1720, %v1720
      %v1722 = vsel %vm267, %v1721, 0.0
      %1723 = vadd.xlane.f32.xlu0 %v1722
      %v1724 = vpop.xlane.xlu0 %1723
      %v1725 = vadd.f32 %v1724, 1e-06
      %v1726 = vrsqrt.pop %v1725
      %v1727 = vmul.f32 %v1726, %v1725
      %v1728 = vmul.f32 %v1727, %v1726
      %v1729 = vmul.f32 0.5, %v1728
      %v1730 = vsub.f32 1.5, %v1729
      %v1731 = vmul.f32 %v1726, %v1730
      %vm1732 = vweird.f32 %v1725
      %vm1733 = vweird.f32 %v1726
      %vm1734 = vmor %vm1732, %vm1733
      %v1735 = vsel %vm1734, %v1726, %v1731
      %v1736 = vmul.f32 %v1720, %v1735
      %v1738 = vsel %vm267, %v1736, 0
      %1740 = vmatpush.msra.mxu0 0.0
      %1741 = vmatpush.msra.mxu0 0.0
      %1742 = vmatpush.msra.mxu0 0.0
      %1743 = vmatpush.msra.mxu0 0.0
      %1744 = vmatpush.msra.mxu0 0.0
      %1745 = vmatpush.msra.mxu0 0.0
      %1746 = vmatpush.msra.mxu0 0.0
      %1747 = vmatpush.msra.mxu0 0.0
      %1748 = vmatpush.msra.mxu0 0.0
      %1749 = vmatpush.msra.mxu0 0.0
      %1750 = vmatpush.msra.mxu0 0.0
      %1751 = vmatpush.msra.mxu0 0.0
      %1752 = vmatpush.msra.mxu0 0.0
      %1753 = vmatpush.msra.mxu0 0.0
      %1754 = vmatpush.msra.mxu0 0.0
      %1755 = vmatpush.msra.mxu0 %v273
      %1756 = vmatmul.f32.gmra.mxu0 %v1738
      %v1757 = vpop.f32.mrf.mxu0
      %v1758 = vadd.f32 0.0, %v1757
      %1759 = vdwg.mxu0
      %1761 = vrot.lane.b32.xlu0 %v1758, 120
      %v1762 = vpop.permute.xlu0 %1761
      %1764 = vrot.lane.b32.xlu0 %v1758, 112
      %v1765 = vpop.permute.xlu0 %1764
      %1767 = vrot.lane.b32.xlu0 %v1758, 104
      %v1768 = vpop.permute.xlu0 %1767
      %1770 = vrot.lane.b32.xlu0 %v1758, 96
      %v1771 = vpop.permute.xlu0 %1770
      %1773 = vrot.lane.b32.xlu0 %v1758, 88
      %v1774 = vpop.permute.xlu0 %1773
      %1776 = vrot.lane.b32.xlu0 %v1758, 80
      %v1777 = vpop.permute.xlu0 %1776
      %1779 = vrot.lane.b32.xlu0 %v1758, 72
      %v1780 = vpop.permute.xlu0 %1779
      %v1782 = vrot.slane %v1765, 4
      %v1783 = vsel %vm318, %v1782, %v1758
      %v1784 = vrot.slane %v1758, 4
      %v1785 = vsel %vm318, %v1765, %v1784
      %v1787 = vunpack.c.l.s4 1983009808
      %v1788 = vunpack.c.0.s8 %v1787
      %v1789 = vperm.slane %v1783, %v1788
      %v1791 = vunpack.c.l.s4 1983009808
      %v1792 = vunpack.c.0.s8 %v1791
      %v1793 = vperm.slane %v1785, %v1792
      %v1794 = vrot.slane %v1768, 4
      %v1795 = vsel %vm318, %v1794, %v1762
      %v1796 = vrot.slane %v1762, 4
      %v1797 = vsel %vm318, %v1768, %v1796
      %v1799 = vunpack.c.l.s4 1983009808
      %v1800 = vunpack.c.0.s8 %v1799
      %v1801 = vperm.slane %v1795, %v1800
      %v1803 = vunpack.c.l.s4 1983009808
      %v1804 = vunpack.c.0.s8 %v1803
      %v1805 = vperm.slane %v1797, %v1804
      %v1806 = vrot.slane %v1777, 4
      %v1807 = vsel %vm318, %v1806, %v1771
      %v1808 = vrot.slane %v1771, 4
      %v1809 = vsel %vm318, %v1777, %v1808
      %v1811 = vunpack.c.l.s4 1983009808
      %v1812 = vunpack.c.0.s8 %v1811
      %v1813 = vperm.slane %v1807, %v1812
      %v1815 = vunpack.c.l.s4 1983009808
      %v1816 = vunpack.c.0.s8 %v1815
      %v1817 = vperm.slane %v1809, %v1816
      %v1818 = vrot.slane %v1780, 4
      %v1819 = vsel %vm318, %v1818, %v1774
      %v1820 = vrot.slane %v1774, 4
      %v1821 = vsel %vm318, %v1780, %v1820
      %v1823 = vunpack.c.l.s4 1983009808
      %v1824 = vunpack.c.0.s8 %v1823
      %v1825 = vperm.slane %v1819, %v1824
      %v1827 = vunpack.c.l.s4 1983009808
      %v1828 = vunpack.c.0.s8 %v1827
      %v1829 = vperm.slane %v1821, %v1828
      %v1830 = vrot.slane %v1801, 4
      %v1831 = vsel %vm318, %v1830, %v1789
      %v1832 = vrot.slane %v1789, 4
      %v1833 = vsel %vm318, %v1801, %v1832
      %v1835 = vunpack.c.l.s4 1934713408
      %v1836 = vunpack.c.0.s8 %v1835
      %v1837 = vperm.slane %v1831, %v1836
      %v1839 = vunpack.c.l.s4 1934713408
      %v1840 = vunpack.c.0.s8 %v1839
      %v1841 = vperm.slane %v1833, %v1840
      %v1842 = vrot.slane %v1805, 4
      %v1843 = vsel %vm318, %v1842, %v1793
      %v1844 = vrot.slane %v1793, 4
      %v1845 = vsel %vm318, %v1805, %v1844
      %v1847 = vunpack.c.l.s4 1934713408
      %v1848 = vunpack.c.0.s8 %v1847
      %v1849 = vperm.slane %v1843, %v1848
      %v1851 = vunpack.c.l.s4 1934713408
      %v1852 = vunpack.c.0.s8 %v1851
      %v1853 = vperm.slane %v1845, %v1852
      %v1854 = vrot.slane %v1825, 4
      %v1855 = vsel %vm318, %v1854, %v1813
      %v1856 = vrot.slane %v1813, 4
      %v1857 = vsel %vm318, %v1825, %v1856
      %v1859 = vunpack.c.l.s4 1934713408
      %v1860 = vunpack.c.0.s8 %v1859
      %v1861 = vperm.slane %v1855, %v1860
      %v1863 = vunpack.c.l.s4 1934713408
      %v1864 = vunpack.c.0.s8 %v1863
      %v1865 = vperm.slane %v1857, %v1864
      %v1866 = vrot.slane %v1829, 4
      %v1867 = vsel %vm318, %v1866, %v1817
      %v1868 = vrot.slane %v1817, 4
      %v1869 = vsel %vm318, %v1829, %v1868
      %v1871 = vunpack.c.l.s4 1934713408
      %v1872 = vunpack.c.0.s8 %v1871
      %v1873 = vperm.slane %v1867, %v1872
      %v1875 = vunpack.c.l.s4 1934713408
      %v1876 = vunpack.c.0.s8 %v1875
      %v1877 = vperm.slane %v1869, %v1876
      %v1878 = vrot.slane %v1861, 4
      %v1879 = vsel %vm318, %v1878, %v1837
      %v1880 = vrot.slane %v1837, 4
      %v1881 = vsel %vm318, %v1861, %v1880
      %v1882 = vrot.slane %v1865, 4
      %v1883 = vsel %vm318, %v1882, %v1841
      %v1884 = vrot.slane %v1841, 4
      %v1885 = vsel %vm318, %v1865, %v1884
      %v1886 = vrot.slane %v1873, 4
      %v1887 = vsel %vm318, %v1886, %v1849
      %v1888 = vrot.slane %v1849, 4
      %v1889 = vsel %vm318, %v1873, %v1888
      %v1890 = vrot.slane %v1877, 4
      %v1891 = vsel %vm318, %v1890, %v1853
      %v1892 = vrot.slane %v1853, 4
      %v1893 = vsel %vm318, %v1877, %v1892
      %1894 = vmatpush.msra.mxu0 0.0
      %1895 = vmatpush.msra.mxu0 0.0
      %1896 = vmatpush.msra.mxu0 0.0
      %1897 = vmatpush.msra.mxu0 0.0
      %1898 = vmatpush.msra.mxu0 0.0
      %1899 = vmatpush.msra.mxu0 0.0
      %1900 = vmatpush.msra.mxu0 0.0
      %1901 = vmatpush.msra.mxu0 0.0
      %1902 = vmatpush.msra.mxu0 0.0
      %1903 = vmatpush.msra.mxu0 0.0
      %1904 = vmatpush.msra.mxu0 0.0
      %1905 = vmatpush.msra.mxu0 0.0
      %1906 = vmatpush.msra.mxu0 0.0
      %1907 = vmatpush.msra.mxu0 0.0
      %1908 = vmatpush.msra.mxu0 0.0
      %1909 = vmatpush.msra.mxu0 %v1879
      %1910 = vmatmul.f32.gmra.mxu0 %v432
      %v1911 = vpop.f32.mrf.mxu0
      %v1912 = vadd.f32 0.0, %v1911
      %1913 = vdwg.mxu0
      %v1915 = vsel %vm430, %v1879, 0
      %1917 = vmatpush.msra.mxu0 0.0
      %1918 = vmatpush.msra.mxu0 0.0
      %1919 = vmatpush.msra.mxu0 0.0
      %1920 = vmatpush.msra.mxu0 0.0
      %1921 = vmatpush.msra.mxu0 0.0
      %1922 = vmatpush.msra.mxu0 0.0
      %1923 = vmatpush.msra.mxu0 0.0
      %1924 = vmatpush.msra.mxu0 0.0
      %1925 = vmatpush.msra.mxu0 0.0
      %1926 = vmatpush.msra.mxu0 0.0
      %1927 = vmatpush.msra.mxu0 0.0
      %1928 = vmatpush.msra.mxu0 0.0
      %1929 = vmatpush.msra.mxu0 0.0
      %1930 = vmatpush.msra.mxu0 0.0
      %1931 = vmatpush.msra.mxu0 0.0
      %1932 = vmatpush.msra.mxu0 %v1881
      %1933 = vmatmul.f32.gmra.mxu0 %v1915
      %v1934 = vpop.f32.mrf.mxu0
      %v1935 = vadd.f32 0.0, %v1934
      %1936 = vdwg.mxu0
      %v1938 = vsel %vm430, %v1881, 0
      %1940 = vmatpush.msra.mxu0 0.0
      %1941 = vmatpush.msra.mxu0 0.0
      %1942 = vmatpush.msra.mxu0 0.0
      %1943 = vmatpush.msra.mxu0 0.0
      %1944 = vmatpush.msra.mxu0 0.0
      %1945 = vmatpush.msra.mxu0 0.0
      %1946 = vmatpush.msra.mxu0 0.0
      %1947 = vmatpush.msra.mxu0 0.0
      %1948 = vmatpush.msra.mxu0 0.0
      %1949 = vmatpush.msra.mxu0 0.0
      %1950 = vmatpush.msra.mxu0 0.0
      %1951 = vmatpush.msra.mxu0 0.0
      %1952 = vmatpush.msra.mxu0 0.0
      %1953 = vmatpush.msra.mxu0 0.0
      %1954 = vmatpush.msra.mxu0 0.0
      %1955 = vmatpush.msra.mxu0 %v1883
      %1956 = vmatmul.f32.gmra.mxu0 %v1938
      %v1957 = vpop.f32.mrf.mxu0
      %v1958 = vadd.f32 0.0, %v1957
      %1959 = vdwg.mxu0
      %v1961 = vsel %vm430, %v1883, 0
      %1963 = vmatpush.msra.mxu0 0.0
      %1964 = vmatpush.msra.mxu0 0.0
      %1965 = vmatpush.msra.mxu0 0.0
      %1966 = vmatpush.msra.mxu0 0.0
      %1967 = vmatpush.msra.mxu0 0.0
      %1968 = vmatpush.msra.mxu0 0.0
      %1969 = vmatpush.msra.mxu0 0.0
      %1970 = vmatpush.msra.mxu0 0.0
      %1971 = vmatpush.msra.mxu0 0.0
      %1972 = vmatpush.msra.mxu0 0.0
      %1973 = vmatpush.msra.mxu0 0.0
      %1974 = vmatpush.msra.mxu0 0.0
      %1975 = vmatpush.msra.mxu0 0.0
      %1976 = vmatpush.msra.mxu0 0.0
      %1977 = vmatpush.msra.mxu0 0.0
      %1978 = vmatpush.msra.mxu0 %v1885
      %1979 = vmatmul.f32.gmra.mxu0 %v1961
      %v1980 = vpop.f32.mrf.mxu0
      %v1981 = vadd.f32 0.0, %v1980
      %1982 = vdwg.mxu0
      %v1984 = vsel %vm430, %v1885, 0
      %1986 = vmatpush.msra.mxu0 0.0
      %1987 = vmatpush.msra.mxu0 0.0
      %1988 = vmatpush.msra.mxu0 0.0
      %1989 = vmatpush.msra.mxu0 0.0
      %1990 = vmatpush.msra.mxu0 0.0
      %1991 = vmatpush.msra.mxu0 0.0
      %1992 = vmatpush.msra.mxu0 0.0
      %1993 = vmatpush.msra.mxu0 0.0
      %1994 = vmatpush.msra.mxu0 0.0
      %1995 = vmatpush.msra.mxu0 0.0
      %1996 = vmatpush.msra.mxu0 0.0
      %1997 = vmatpush.msra.mxu0 0.0
      %1998 = vmatpush.msra.mxu0 0.0
      %1999 = vmatpush.msra.mxu0 0.0
      %2000 = vmatpush.msra.mxu0 0.0
      %2001 = vmatpush.msra.mxu0 %v1887
      %2002 = vmatmul.f32.gmra.mxu0 %v1984
      %v2003 = vpop.f32.mrf.mxu0
      %v2004 = vadd.f32 0.0, %v2003
      %2005 = vdwg.mxu0
      %v2007 = vsel %vm430, %v1887, 0
      %2009 = vmatpush.msra.mxu0 0.0
      %2010 = vmatpush.msra.mxu0 0.0
      %2011 = vmatpush.msra.mxu0 0.0
      %2012 = vmatpush.msra.mxu0 0.0
      %2013 = vmatpush.msra.mxu0 0.0
      %2014 = vmatpush.msra.mxu0 0.0
      %2015 = vmatpush.msra.mxu0 0.0
      %2016 = vmatpush.msra.mxu0 0.0
      %2017 = vmatpush.msra.mxu0 0.0
      %2018 = vmatpush.msra.mxu0 0.0
      %2019 = vmatpush.msra.mxu0 0.0
      %2020 = vmatpush.msra.mxu0 0.0
      %2021 = vmatpush.msra.mxu0 0.0
      %2022 = vmatpush.msra.mxu0 0.0
      %2023 = vmatpush.msra.mxu0 0.0
      %2024 = vmatpush.msra.mxu0 %v1889
      %2025 = vmatmul.f32.gmra.mxu0 %v2007
      %v2026 = vpop.f32.mrf.mxu0
      %v2027 = vadd.f32 0.0, %v2026
      %2028 = vdwg.mxu0
      %v2030 = vsel %vm430, %v1889, 0
      %2032 = vmatpush.msra.mxu0 0.0
      %2033 = vmatpush.msra.mxu0 0.0
      %2034 = vmatpush.msra.mxu0 0.0
      %2035 = vmatpush.msra.mxu0 0.0
      %2036 = vmatpush.msra.mxu0 0.0
      %2037 = vmatpush.msra.mxu0 0.0
      %2038 = vmatpush.msra.mxu0 0.0
      %2039 = vmatpush.msra.mxu0 0.0
      %2040 = vmatpush.msra.mxu0 0.0
      %2041 = vmatpush.msra.mxu0 0.0
      %2042 = vmatpush.msra.mxu0 0.0
      %2043 = vmatpush.msra.mxu0 0.0
      %2044 = vmatpush.msra.mxu0 0.0
      %2045 = vmatpush.msra.mxu0 0.0
      %2046 = vmatpush.msra.mxu0 0.0
      %2047 = vmatpush.msra.mxu0 %v1891
      %2048 = vmatmul.f32.gmra.mxu0 %v2030
      %v2049 = vpop.f32.mrf.mxu0
      %v2050 = vadd.f32 0.0, %v2049
      %2051 = vdwg.mxu0
      %v2053 = vsel %vm430, %v1891, 0
      %2055 = vmatpush.msra.mxu0 0.0
      %2056 = vmatpush.msra.mxu0 0.0
      %2057 = vmatpush.msra.mxu0 0.0
      %2058 = vmatpush.msra.mxu0 0.0
      %2059 = vmatpush.msra.mxu0 0.0
      %2060 = vmatpush.msra.mxu0 0.0
      %2061 = vmatpush.msra.mxu0 0.0
      %2062 = vmatpush.msra.mxu0 0.0
      %2063 = vmatpush.msra.mxu0 0.0
      %2064 = vmatpush.msra.mxu0 0.0
      %2065 = vmatpush.msra.mxu0 0.0
      %2066 = vmatpush.msra.mxu0 0.0
      %2067 = vmatpush.msra.mxu0 0.0
      %2068 = vmatpush.msra.mxu0 0.0
      %2069 = vmatpush.msra.mxu0 0.0
      %2070 = vmatpush.msra.mxu0 %v1893
      %2071 = vmatmul.f32.gmra.mxu0 %v2053
      %v2072 = vpop.f32.mrf.mxu0
      %v2073 = vadd.f32 0.0, %v2072
      %2074 = vdwg.mxu0
      %v2076 = vsel %vm430, %v1893, 0
      %2078 = vmatpush.msra.mxu0 0.0
      %2079 = vmatpush.msra.mxu0 0.0
      %2080 = vmatpush.msra.mxu0 0.0
      %2081 = vmatpush.msra.mxu0 0.0
      %2082 = vmatpush.msra.mxu0 0.0
      %2083 = vmatpush.msra.mxu0 0.0
      %2084 = vmatpush.msra.mxu0 0.0
      %2085 = vmatpush.msra.mxu0 0.0
      %2086 = vmatpush.msra.mxu0 0.0
      %2087 = vmatpush.msra.mxu0 0.0
      %2088 = vmatpush.msra.mxu0 0.0
      %2089 = vmatpush.msra.mxu0 0.0
      %2090 = vmatpush.msra.mxu0 0.0
      %2091 = vmatpush.msra.mxu0 0.0
      %2092 = vmatpush.msra.mxu0 0.0
      %2093 = vmatpush.msra.mxu0 %v255
      %2094 = vmatmul.f32.gmra.mxu0 %v2076
      %v2095 = vpop.f32.mrf.mxu0
      %v2096 = vadd.f32 0.0, %v2095
      %2097 = vdwg.mxu0
      %2098 = vmatpush.msra.mxu0 0.0
      %2099 = vmatpush.msra.mxu0 0.0
      %2100 = vmatpush.msra.mxu0 0.0
      %2101 = vmatpush.msra.mxu0 0.0
      %2102 = vmatpush.msra.mxu0 0.0
      %2103 = vmatpush.msra.mxu0 0.0
      %2104 = vmatpush.msra.mxu0 0.0
      %2105 = vmatpush.msra.mxu0 0.0
      %2106 = vmatpush.msra.mxu0 0.0
      %2107 = vmatpush.msra.mxu0 0.0
      %2108 = vmatpush.msra.mxu0 0.0
      %2109 = vmatpush.msra.mxu0 0.0
      %2110 = vmatpush.msra.mxu0 0.0
      %2111 = vmatpush.msra.mxu0 0.0
      %2112 = vmatpush.msra.mxu0 0.0
      %2113 = vmatpush.msra.mxu0 %v1912
      %2114 = vmatmul.f32.gmra.mxu0 %v432
      %v2115 = vpop.f32.mrf.mxu0
      %v2116 = vadd.f32 0.0, %v2115
      %2117 = vdwg.mxu0
      %2118 = vmatpush.msra.mxu0 0.0
      %2119 = vmatpush.msra.mxu0 0.0
      %2120 = vmatpush.msra.mxu0 0.0
      %2121 = vmatpush.msra.mxu0 0.0
      %2122 = vmatpush.msra.mxu0 0.0
      %2123 = vmatpush.msra.mxu0 0.0
      %2124 = vmatpush.msra.mxu0 0.0
      %2125 = vmatpush.msra.mxu0 0.0
      %2126 = vmatpush.msra.mxu0 0.0
      %2127 = vmatpush.msra.mxu0 0.0
      %2128 = vmatpush.msra.mxu0 0.0
      %2129 = vmatpush.msra.mxu0 0.0
      %2130 = vmatpush.msra.mxu0 0.0
      %2131 = vmatpush.msra.mxu0 0.0
      %2132 = vmatpush.msra.mxu0 0.0
      %2133 = vmatpush.msra.mxu0 %v1935
      %2134 = vmatmul.f32.gmra.mxu0 %v699
      %v2135 = vpop.f32.mrf.mxu0
      %v2136 = vadd.f32 0.0, %v2135
      %2137 = vdwg.mxu0
      %v2139 = vsel %vm430, %v1912, 0
      %2141 = vmatpush.msra.mxu0 0.0
      %2142 = vmatpush.msra.mxu0 0.0
      %2143 = vmatpush.msra.mxu0 0.0
      %2144 = vmatpush.msra.mxu0 0.0
      %2145 = vmatpush.msra.mxu0 0.0
      %2146 = vmatpush.msra.mxu0 0.0
      %2147 = vmatpush.msra.mxu0 0.0
      %2148 = vmatpush.msra.mxu0 0.0
      %2149 = vmatpush.msra.mxu0 0.0
      %2150 = vmatpush.msra.mxu0 0.0
      %2151 = vmatpush.msra.mxu0 0.0
      %2152 = vmatpush.msra.mxu0 0.0
      %2153 = vmatpush.msra.mxu0 0.0
      %2154 = vmatpush.msra.mxu0 0.0
      %2155 = vmatpush.msra.mxu0 0.0
      %2156 = vmatpush.msra.mxu0 %v1958
      %2157 = vmatmul.f32.gmra.mxu0 %v2139
      %v2158 = vpop.f32.mrf.mxu0
      %v2159 = vadd.f32 0.0, %v2158
      %2160 = vdwg.mxu0
      %v2162 = vsel %vm430, %v1935, 0
      %2164 = vmatpush.msra.mxu0 0.0
      %2165 = vmatpush.msra.mxu0 0.0
      %2166 = vmatpush.msra.mxu0 0.0
      %2167 = vmatpush.msra.mxu0 0.0
      %2168 = vmatpush.msra.mxu0 0.0
      %2169 = vmatpush.msra.mxu0 0.0
      %2170 = vmatpush.msra.mxu0 0.0
      %2171 = vmatpush.msra.mxu0 0.0
      %2172 = vmatpush.msra.mxu0 0.0
      %2173 = vmatpush.msra.mxu0 0.0
      %2174 = vmatpush.msra.mxu0 0.0
      %2175 = vmatpush.msra.mxu0 0.0
      %2176 = vmatpush.msra.mxu0 0.0
      %2177 = vmatpush.msra.mxu0 0.0
      %2178 = vmatpush.msra.mxu0 0.0
      %2179 = vmatpush.msra.mxu0 %v1981
      %2180 = vmatmul.f32.gmra.mxu0 %v2162
      %v2181 = vpop.f32.mrf.mxu0
      %v2182 = vadd.f32 0.0, %v2181
      %2183 = vdwg.mxu0
      %v2185 = vsel %vm430, %v1958, 0
      %2187 = vmatpush.msra.mxu0 0.0
      %2188 = vmatpush.msra.mxu0 0.0
      %2189 = vmatpush.msra.mxu0 0.0
      %2190 = vmatpush.msra.mxu0 0.0
      %2191 = vmatpush.msra.mxu0 0.0
      %2192 = vmatpush.msra.mxu0 0.0
      %2193 = vmatpush.msra.mxu0 0.0
      %2194 = vmatpush.msra.mxu0 0.0
      %2195 = vmatpush.msra.mxu0 0.0
      %2196 = vmatpush.msra.mxu0 0.0
      %2197 = vmatpush.msra.mxu0 0.0
      %2198 = vmatpush.msra.mxu0 0.0
      %2199 = vmatpush.msra.mxu0 0.0
      %2200 = vmatpush.msra.mxu0 0.0
      %2201 = vmatpush.msra.mxu0 0.0
      %2202 = vmatpush.msra.mxu0 %v2004
      %2203 = vmatmul.f32.gmra.mxu0 %v2185
      %v2204 = vpop.f32.mrf.mxu0
      %v2205 = vadd.f32 0.0, %v2204
      %2206 = vdwg.mxu0
      %v2208 = vsel %vm430, %v1981, 0
      %2210 = vmatpush.msra.mxu0 0.0
      %2211 = vmatpush.msra.mxu0 0.0
      %2212 = vmatpush.msra.mxu0 0.0
      %2213 = vmatpush.msra.mxu0 0.0
      %2214 = vmatpush.msra.mxu0 0.0
      %2215 = vmatpush.msra.mxu0 0.0
      %2216 = vmatpush.msra.mxu0 0.0
      %2217 = vmatpush.msra.mxu0 0.0
      %2218 = vmatpush.msra.mxu0 0.0
      %2219 = vmatpush.msra.mxu0 0.0
      %2220 = vmatpush.msra.mxu0 0.0
      %2221 = vmatpush.msra.mxu0 0.0
      %2222 = vmatpush.msra.mxu0 0.0
      %2223 = vmatpush.msra.mxu0 0.0
      %2224 = vmatpush.msra.mxu0 0.0
      %2225 = vmatpush.msra.mxu0 %v2027
      %2226 = vmatmul.f32.gmra.mxu0 %v2208
      %v2227 = vpop.f32.mrf.mxu0
      %v2228 = vadd.f32 0.0, %v2227
      %2229 = vdwg.mxu0
      %v2231 = vsel %vm430, %v2004, 0
      %2233 = vmatpush.msra.mxu0 0.0
      %2234 = vmatpush.msra.mxu0 0.0
      %2235 = vmatpush.msra.mxu0 0.0
      %2236 = vmatpush.msra.mxu0 0.0
      %2237 = vmatpush.msra.mxu0 0.0
      %2238 = vmatpush.msra.mxu0 0.0
      %2239 = vmatpush.msra.mxu0 0.0
      %2240 = vmatpush.msra.mxu0 0.0
      %2241 = vmatpush.msra.mxu0 0.0
      %2242 = vmatpush.msra.mxu0 0.0
      %2243 = vmatpush.msra.mxu0 0.0
      %2244 = vmatpush.msra.mxu0 0.0
      %2245 = vmatpush.msra.mxu0 0.0
      %2246 = vmatpush.msra.mxu0 0.0
      %2247 = vmatpush.msra.mxu0 0.0
      %2248 = vmatpush.msra.mxu0 %v2050
      %2249 = vmatmul.f32.gmra.mxu0 %v2231
      %v2250 = vpop.f32.mrf.mxu0
      %v2251 = vadd.f32 0.0, %v2250
      %2252 = vdwg.mxu0
      %v2254 = vsel %vm430, %v2027, 0
      %2256 = vmatpush.msra.mxu0 0.0
      %2257 = vmatpush.msra.mxu0 0.0
      %2258 = vmatpush.msra.mxu0 0.0
      %2259 = vmatpush.msra.mxu0 0.0
      %2260 = vmatpush.msra.mxu0 0.0
      %2261 = vmatpush.msra.mxu0 0.0
      %2262 = vmatpush.msra.mxu0 0.0
      %2263 = vmatpush.msra.mxu0 0.0
      %2264 = vmatpush.msra.mxu0 0.0
      %2265 = vmatpush.msra.mxu0 0.0
      %2266 = vmatpush.msra.mxu0 0.0
      %2267 = vmatpush.msra.mxu0 0.0
      %2268 = vmatpush.msra.mxu0 0.0
      %2269 = vmatpush.msra.mxu0 0.0
      %2270 = vmatpush.msra.mxu0 0.0
      %2271 = vmatpush.msra.mxu0 %v2073
      %2272 = vmatmul.f32.gmra.mxu0 %v2254
      %v2273 = vpop.f32.mrf.mxu0
      %v2274 = vadd.f32 0.0, %v2273
      %2275 = vdwg.mxu0
      %v2277 = vsel %vm430, %v2050, 0
      %2279 = vmatpush.msra.mxu0 0.0
      %2280 = vmatpush.msra.mxu0 0.0
      %2281 = vmatpush.msra.mxu0 0.0
      %2282 = vmatpush.msra.mxu0 0.0
      %2283 = vmatpush.msra.mxu0 0.0
      %2284 = vmatpush.msra.mxu0 0.0
      %2285 = vmatpush.msra.mxu0 0.0
      %2286 = vmatpush.msra.mxu0 0.0
      %2287 = vmatpush.msra.mxu0 0.0
      %2288 = vmatpush.msra.mxu0 0.0
      %2289 = vmatpush.msra.mxu0 0.0
      %2290 = vmatpush.msra.mxu0 0.0
      %2291 = vmatpush.msra.mxu0 0.0
      %2292 = vmatpush.msra.mxu0 0.0
      %2293 = vmatpush.msra.mxu0 0.0
      %2294 = vmatpush.msra.mxu0 %v2096
      %2295 = vmatmul.f32.gmra.mxu0 %v2277
      %v2296 = vpop.f32.mrf.mxu0
      %v2297 = vadd.f32 0.0, %v2296
      %2298 = vdwg.mxu0
      %v2300 = vsel %vm430, %v2073, 0
      %2302 = vmatpush.msra.mxu0 0.0
      %2303 = vmatpush.msra.mxu0 0.0
      %2304 = vmatpush.msra.mxu0 0.0
      %2305 = vmatpush.msra.mxu0 0.0
      %2306 = vmatpush.msra.mxu0 0.0
      %2307 = vmatpush.msra.mxu0 0.0
      %2308 = vmatpush.msra.mxu0 0.0
      %2309 = vmatpush.msra.mxu0 0.0
      %2310 = vmatpush.msra.mxu0 0.0
      %2311 = vmatpush.msra.mxu0 0.0
      %2312 = vmatpush.msra.mxu0 0.0
      %2313 = vmatpush.msra.mxu0 0.0
      %2314 = vmatpush.msra.mxu0 0.0
      %2315 = vmatpush.msra.mxu0 0.0
      %2316 = vmatpush.msra.mxu0 0.0
      %2317 = vmatpush.msra.mxu0 %v452
      %2318 = vmatmul.f32.gmra.mxu0 %v2300
      %v2319 = vpop.f32.mrf.mxu0
      %v2320 = vadd.f32 0.0, %v2319
      %2321 = vdwg.mxu0
      %v2323 = vsel %vm430, %v2096, 0
      %2325 = vmatpush.msra.mxu0 0.0
      %2326 = vmatpush.msra.mxu0 0.0
      %2327 = vmatpush.msra.mxu0 0.0
      %2328 = vmatpush.msra.mxu0 0.0
      %2329 = vmatpush.msra.mxu0 0.0
      %2330 = vmatpush.msra.mxu0 0.0
      %2331 = vmatpush.msra.mxu0 0.0
      %2332 = vmatpush.msra.mxu0 0.0
      %2333 = vmatpush.msra.mxu0 0.0
      %2334 = vmatpush.msra.mxu0 0.0
      %2335 = vmatpush.msra.mxu0 0.0
      %2336 = vmatpush.msra.mxu0 0.0
      %2337 = vmatpush.msra.mxu0 0.0
      %2338 = vmatpush.msra.mxu0 0.0
      %2339 = vmatpush.msra.mxu0 0.0
      %2340 = vmatpush.msra.mxu0 %v255
      %2341 = vmatmul.f32.gmra.mxu0 %v2323
      %v2342 = vpop.f32.mrf.mxu0
      %v2343 = vadd.f32 0.0, %v2342
      %2344 = vdwg.mxu0
      %2345 = vmatpush.msra.mxu0 0.0
      %2346 = vmatpush.msra.mxu0 0.0
      %2347 = vmatpush.msra.mxu0 0.0
      %2348 = vmatpush.msra.mxu0 0.0
      %2349 = vmatpush.msra.mxu0 0.0
      %2350 = vmatpush.msra.mxu0 0.0
      %2351 = vmatpush.msra.mxu0 0.0
      %2352 = vmatpush.msra.mxu0 0.0
      %2353 = vmatpush.msra.mxu0 0.0
      %2354 = vmatpush.msra.mxu0 0.0
      %2355 = vmatpush.msra.mxu0 0.0
      %2356 = vmatpush.msra.mxu0 0.0
      %2357 = vmatpush.msra.mxu0 0.0
      %2358 = vmatpush.msra.mxu0 0.0
      %2359 = vmatpush.msra.mxu0 0.0
      %2360 = vmatpush.msra.mxu0 %v2116
      %2361 = vmatmul.f32.gmra.mxu0 %v432
      %v2362 = vpop.f32.mrf.mxu0
      %v2363 = vadd.f32 0.0, %v2362
      %2364 = vdwg.mxu0
      %2365 = vmatpush.msra.mxu0 0.0
      %2366 = vmatpush.msra.mxu0 0.0
      %2367 = vmatpush.msra.mxu0 0.0
      %2368 = vmatpush.msra.mxu0 0.0
      %2369 = vmatpush.msra.mxu0 0.0
      %2370 = vmatpush.msra.mxu0 0.0
      %2371 = vmatpush.msra.mxu0 0.0
      %2372 = vmatpush.msra.mxu0 0.0
      %2373 = vmatpush.msra.mxu0 0.0
      %2374 = vmatpush.msra.mxu0 0.0
      %2375 = vmatpush.msra.mxu0 0.0
      %2376 = vmatpush.msra.mxu0 0.0
      %2377 = vmatpush.msra.mxu0 0.0
      %2378 = vmatpush.msra.mxu0 0.0
      %2379 = vmatpush.msra.mxu0 0.0
      %2380 = vmatpush.msra.mxu0 %v2136
      %2381 = vmatmul.f32.gmra.mxu0 %v432
      %v2382 = vpop.f32.mrf.mxu0
      %v2383 = vadd.f32 0.0, %v2382
      %2384 = vdwg.mxu0
      %2385 = vmatpush.msra.mxu0 0.0
      %2386 = vmatpush.msra.mxu0 0.0
      %2387 = vmatpush.msra.mxu0 0.0
      %2388 = vmatpush.msra.mxu0 0.0
      %2389 = vmatpush.msra.mxu0 0.0
      %2390 = vmatpush.msra.mxu0 0.0
      %2391 = vmatpush.msra.mxu0 0.0
      %2392 = vmatpush.msra.mxu0 0.0
      %2393 = vmatpush.msra.mxu0 0.0
      %2394 = vmatpush.msra.mxu0 0.0
      %2395 = vmatpush.msra.mxu0 0.0
      %2396 = vmatpush.msra.mxu0 0.0
      %2397 = vmatpush.msra.mxu0 0.0
      %2398 = vmatpush.msra.mxu0 0.0
      %2399 = vmatpush.msra.mxu0 0.0
      %2400 = vmatpush.msra.mxu0 %v2159
      %2401 = vmatmul.f32.gmra.mxu0 %v432
      %v2402 = vpop.f32.mrf.mxu0
      %v2403 = vadd.f32 0.0, %v2402
      %2404 = vdwg.mxu0
      %2405 = vmatpush.msra.mxu0 0.0
      %2406 = vmatpush.msra.mxu0 0.0
      %2407 = vmatpush.msra.mxu0 0.0
      %2408 = vmatpush.msra.mxu0 0.0
      %2409 = vmatpush.msra.mxu0 0.0
      %2410 = vmatpush.msra.mxu0 0.0
      %2411 = vmatpush.msra.mxu0 0.0
      %2412 = vmatpush.msra.mxu0 0.0
      %2413 = vmatpush.msra.mxu0 0.0
      %2414 = vmatpush.msra.mxu0 0.0
      %2415 = vmatpush.msra.mxu0 0.0
      %2416 = vmatpush.msra.mxu0 0.0
      %2417 = vmatpush.msra.mxu0 0.0
      %2418 = vmatpush.msra.mxu0 0.0
      %2419 = vmatpush.msra.mxu0 0.0
      %2420 = vmatpush.msra.mxu0 %v2182
      %2421 = vmatmul.f32.gmra.mxu0 %v1029
      %v2422 = vpop.f32.mrf.mxu0
      %v2423 = vadd.f32 0.0, %v2422
      %2424 = vdwg.mxu0
      %v2426 = vsel %vm430, %v2116, 0
      %2428 = vmatpush.msra.mxu0 0.0
      %2429 = vmatpush.msra.mxu0 0.0
      %2430 = vmatpush.msra.mxu0 0.0
      %2431 = vmatpush.msra.mxu0 0.0
      %2432 = vmatpush.msra.mxu0 0.0
      %2433 = vmatpush.msra.mxu0 0.0
      %2434 = vmatpush.msra.mxu0 0.0
      %2435 = vmatpush.msra.mxu0 0.0
      %2436 = vmatpush.msra.mxu0 0.0
      %2437 = vmatpush.msra.mxu0 0.0
      %2438 = vmatpush.msra.mxu0 0.0
      %2439 = vmatpush.msra.mxu0 0.0
      %2440 = vmatpush.msra.mxu0 0.0
      %2441 = vmatpush.msra.mxu0 0.0
      %2442 = vmatpush.msra.mxu0 0.0
      %2443 = vmatpush.msra.mxu0 %v2205
      %2444 = vmatmul.f32.gmra.mxu0 %v2426
      %v2445 = vpop.f32.mrf.mxu0
      %v2446 = vadd.f32 0.0, %v2445
      %2447 = vdwg.mxu0
      %v2449 = vsel %vm430, %v2136, 0
      %2451 = vmatpush.msra.mxu0 0.0
      %2452 = vmatpush.msra.mxu0 0.0
      %2453 = vmatpush.msra.mxu0 0.0
      %2454 = vmatpush.msra.mxu0 0.0
      %2455 = vmatpush.msra.mxu0 0.0
      %2456 = vmatpush.msra.mxu0 0.0
      %2457 = vmatpush.msra.mxu0 0.0
      %2458 = vmatpush.msra.mxu0 0.0
      %2459 = vmatpush.msra.mxu0 0.0
      %2460 = vmatpush.msra.mxu0 0.0
      %2461 = vmatpush.msra.mxu0 0.0
      %2462 = vmatpush.msra.mxu0 0.0
      %2463 = vmatpush.msra.mxu0 0.0
      %2464 = vmatpush.msra.mxu0 0.0
      %2465 = vmatpush.msra.mxu0 0.0
      %2466 = vmatpush.msra.mxu0 %v2228
      %2467 = vmatmul.f32.gmra.mxu0 %v2449
      %v2468 = vpop.f32.mrf.mxu0
      %v2469 = vadd.f32 0.0, %v2468
      %2470 = vdwg.mxu0
      %v2472 = vsel %vm430, %v2159, 0
      %2474 = vmatpush.msra.mxu0 0.0
      %2475 = vmatpush.msra.mxu0 0.0
      %2476 = vmatpush.msra.mxu0 0.0
      %2477 = vmatpush.msra.mxu0 0.0
      %2478 = vmatpush.msra.mxu0 0.0
      %2479 = vmatpush.msra.mxu0 0.0
      %2480 = vmatpush.msra.mxu0 0.0
      %2481 = vmatpush.msra.mxu0 0.0
      %2482 = vmatpush.msra.mxu0 0.0
      %2483 = vmatpush.msra.mxu0 0.0
      %2484 = vmatpush.msra.mxu0 0.0
      %2485 = vmatpush.msra.mxu0 0.0
      %2486 = vmatpush.msra.mxu0 0.0
      %2487 = vmatpush.msra.mxu0 0.0
      %2488 = vmatpush.msra.mxu0 0.0
      %2489 = vmatpush.msra.mxu0 %v2251
      %2490 = vmatmul.f32.gmra.mxu0 %v2472
      %v2491 = vpop.f32.mrf.mxu0
      %v2492 = vadd.f32 0.0, %v2491
      %2493 = vdwg.mxu0
      %v2495 = vsel %vm430, %v2205, 0
      %2497 = vmatpush.msra.mxu0 0.0
      %2498 = vmatpush.msra.mxu0 0.0
      %2499 = vmatpush.msra.mxu0 0.0
      %2500 = vmatpush.msra.mxu0 0.0
      %2501 = vmatpush.msra.mxu0 0.0
      %2502 = vmatpush.msra.mxu0 0.0
      %2503 = vmatpush.msra.mxu0 0.0
      %2504 = vmatpush.msra.mxu0 0.0
      %2505 = vmatpush.msra.mxu0 0.0
      %2506 = vmatpush.msra.mxu0 0.0
      %2507 = vmatpush.msra.mxu0 0.0
      %2508 = vmatpush.msra.mxu0 0.0
      %2509 = vmatpush.msra.mxu0 0.0
      %2510 = vmatpush.msra.mxu0 0.0
      %2511 = vmatpush.msra.mxu0 0.0
      %2512 = vmatpush.msra.mxu0 %v2297
      %2513 = vmatmul.f32.gmra.mxu0 %v2495
      %v2514 = vpop.f32.mrf.mxu0
      %v2515 = vadd.f32 0.0, %v2514
      %2516 = vdwg.mxu0
      %v2518 = vsel %vm430, %v2228, 0
      %2520 = vmatpush.msra.mxu0 0.0
      %2521 = vmatpush.msra.mxu0 0.0
      %2522 = vmatpush.msra.mxu0 0.0
      %2523 = vmatpush.msra.mxu0 0.0
      %2524 = vmatpush.msra.mxu0 0.0
      %2525 = vmatpush.msra.mxu0 0.0
      %2526 = vmatpush.msra.mxu0 0.0
      %2527 = vmatpush.msra.mxu0 0.0
      %2528 = vmatpush.msra.mxu0 0.0
      %2529 = vmatpush.msra.mxu0 0.0
      %2530 = vmatpush.msra.mxu0 0.0
      %2531 = vmatpush.msra.mxu0 0.0
      %2532 = vmatpush.msra.mxu0 0.0
      %2533 = vmatpush.msra.mxu0 0.0
      %2534 = vmatpush.msra.mxu0 0.0
      %2535 = vmatpush.msra.mxu0 %v2320
      %2536 = vmatmul.f32.gmra.mxu0 %v2518
      %v2537 = vpop.f32.mrf.mxu0
      %v2538 = vadd.f32 0.0, %v2537
      %2539 = vdwg.mxu0
      %v2541 = vsel %vm430, %v2251, 0
      %2543 = vmatpush.msra.mxu0 0.0
      %2544 = vmatpush.msra.mxu0 0.0
      %2545 = vmatpush.msra.mxu0 0.0
      %2546 = vmatpush.msra.mxu0 0.0
      %2547 = vmatpush.msra.mxu0 0.0
      %2548 = vmatpush.msra.mxu0 0.0
      %2549 = vmatpush.msra.mxu0 0.0
      %2550 = vmatpush.msra.mxu0 0.0
      %2551 = vmatpush.msra.mxu0 0.0
      %2552 = vmatpush.msra.mxu0 0.0
      %2553 = vmatpush.msra.mxu0 0.0
      %2554 = vmatpush.msra.mxu0 0.0
      %2555 = vmatpush.msra.mxu0 0.0
      %2556 = vmatpush.msra.mxu0 0.0
      %2557 = vmatpush.msra.mxu0 0.0
      %2558 = vmatpush.msra.mxu0 %v2343
      %2559 = vmatmul.f32.gmra.mxu0 %v2541
      %v2560 = vpop.f32.mrf.mxu0
      %v2561 = vadd.f32 0.0, %v2560
      %2562 = vdwg.mxu0
      %v2564 = vsel %vm430, %v2274, 0
      %2566 = vmatpush.msra.mxu0 0.0
      %2567 = vmatpush.msra.mxu0 0.0
      %2568 = vmatpush.msra.mxu0 0.0
      %2569 = vmatpush.msra.mxu0 0.0
      %2570 = vmatpush.msra.mxu0 0.0
      %2571 = vmatpush.msra.mxu0 0.0
      %2572 = vmatpush.msra.mxu0 0.0
      %2573 = vmatpush.msra.mxu0 0.0
      %2574 = vmatpush.msra.mxu0 0.0
      %2575 = vmatpush.msra.mxu0 0.0
      %2576 = vmatpush.msra.mxu0 0.0
      %2577 = vmatpush.msra.mxu0 0.0
      %2578 = vmatpush.msra.mxu0 0.0
      %2579 = vmatpush.msra.mxu0 0.0
      %2580 = vmatpush.msra.mxu0 0.0
      %2581 = vmatpush.msra.mxu0 %v946
      %2582 = vmatmul.f32.gmra.mxu0 %v2564
      %v2583 = vpop.f32.mrf.mxu0
      %v2584 = vadd.f32 0.0, %v2583
      %2585 = vdwg.mxu0
      %v2587 = vsel %vm430, %v2297, 0
      %2589 = vmatpush.msra.mxu0 0.0
      %2590 = vmatpush.msra.mxu0 0.0
      %2591 = vmatpush.msra.mxu0 0.0
      %2592 = vmatpush.msra.mxu0 0.0
      %2593 = vmatpush.msra.mxu0 0.0
      %2594 = vmatpush.msra.mxu0 0.0
      %2595 = vmatpush.msra.mxu0 0.0
      %2596 = vmatpush.msra.mxu0 0.0
      %2597 = vmatpush.msra.mxu0 0.0
      %2598 = vmatpush.msra.mxu0 0.0
      %2599 = vmatpush.msra.mxu0 0.0
      %2600 = vmatpush.msra.mxu0 0.0
      %2601 = vmatpush.msra.mxu0 0.0
      %2602 = vmatpush.msra.mxu0 0.0
      %2603 = vmatpush.msra.mxu0 0.0
      %2604 = vmatpush.msra.mxu0 %v255
      %2605 = vmatmul.f32.gmra.mxu0 %v2587
      %v2606 = vpop.f32.mrf.mxu0
      %v2607 = vadd.f32 0.0, %v2606
      %2608 = vdwg.mxu0
      %v2610 = vsel %vm430, %v2320, 0
      %2612 = vmatpush.msra.mxu0 0.0
      %2613 = vmatpush.msra.mxu0 0.0
      %2614 = vmatpush.msra.mxu0 0.0
      %2615 = vmatpush.msra.mxu0 0.0
      %2616 = vmatpush.msra.mxu0 0.0
      %2617 = vmatpush.msra.mxu0 0.0
      %2618 = vmatpush.msra.mxu0 0.0
      %2619 = vmatpush.msra.mxu0 0.0
      %2620 = vmatpush.msra.mxu0 0.0
      %2621 = vmatpush.msra.mxu0 0.0
      %2622 = vmatpush.msra.mxu0 0.0
      %2623 = vmatpush.msra.mxu0 0.0
      %2624 = vmatpush.msra.mxu0 0.0
      %2625 = vmatpush.msra.mxu0 0.0
      %2626 = vmatpush.msra.mxu0 0.0
      %2627 = vmatpush.msra.mxu0 %v255
      %2628 = vmatmul.f32.gmra.mxu0 %v2610
      %v2629 = vpop.f32.mrf.mxu0
      %v2630 = vadd.f32 0.0, %v2629
      %2631 = vdwg.mxu0
      %v2633 = vsel %vm430, %v2343, 0
      %2635 = vmatpush.msra.mxu0 0.0
      %2636 = vmatpush.msra.mxu0 0.0
      %2637 = vmatpush.msra.mxu0 0.0
      %2638 = vmatpush.msra.mxu0 0.0
      %2639 = vmatpush.msra.mxu0 0.0
      %2640 = vmatpush.msra.mxu0 0.0
      %2641 = vmatpush.msra.mxu0 0.0
      %2642 = vmatpush.msra.mxu0 0.0
      %2643 = vmatpush.msra.mxu0 0.0
      %2644 = vmatpush.msra.mxu0 0.0
      %2645 = vmatpush.msra.mxu0 0.0
      %2646 = vmatpush.msra.mxu0 0.0
      %2647 = vmatpush.msra.mxu0 0.0
      %2648 = vmatpush.msra.mxu0 0.0
      %2649 = vmatpush.msra.mxu0 0.0
      %2650 = vmatpush.msra.mxu0 %v255
      %2651 = vmatmul.f32.gmra.mxu0 %v2633
      %v2652 = vpop.f32.mrf.mxu0
      %v2653 = vadd.f32 0.0, %v2652
      %2654 = vdwg.mxu0
      %v2655 = vmul.f32 %v1307, %v2363
      %v2656 = vmul.f32 %v1307, %v2383
      %v2657 = vmul.f32 %v1307, %v2403
      %v2658 = vmul.f32 %v1307, %v2423
      %v2659 = vmul.f32 %v1307, %v2446
      %v2660 = vmul.f32 %v1307, %v2469
      %v2661 = vmul.f32 %v1307, %v2492
      %v2662 = vsel %vm430, %v2655, 0.0
      %v2663 = vrot.slane %v2662, 4
      %v2664 = vadd.f32 %v2662, %v2663
      %v2665 = vrot.slane %v2664, 2
      %v2666 = vadd.f32 %v2664, %v2665
      %v2667 = vrot.slane %v2666, 1
      %v2668 = vadd.f32 %v2666, %v2667
      %v2669 = vsel %vm430, %v2656, 0.0
      %v2670 = vrot.slane %v2669, 4
      %v2671 = vadd.f32 %v2669, %v2670
      %v2672 = vrot.slane %v2671, 2
      %v2673 = vadd.f32 %v2671, %v2672
      %v2674 = vrot.slane %v2673, 1
      %v2675 = vadd.f32 %v2673, %v2674
      %v2676 = vsel %vm430, %v2657, 0.0
      %v2677 = vrot.slane %v2676, 4
      %v2678 = vadd.f32 %v2676, %v2677
      %v2679 = vrot.slane %v2678, 2
      %v2680 = vadd.f32 %v2678, %v2679
      %v2681 = vrot.slane %v2680, 1
      %v2682 = vadd.f32 %v2680, %v2681
      %v2683 = vsel %vm430, %v2658, 0.0
      %v2684 = vrot.slane %v2683, 4
      %v2685 = vadd.f32 %v2683, %v2684
      %v2686 = vrot.slane %v2685, 2
      %v2687 = vadd.f32 %v2685, %v2686
      %v2688 = vrot.slane %v2687, 1
      %v2689 = vadd.f32 %v2687, %v2688
      %v2690 = vsel %vm430, %v2659, 0.0
      %v2691 = vrot.slane %v2690, 4
      %v2692 = vadd.f32 %v2690, %v2691
      %v2693 = vrot.slane %v2692, 2
      %v2694 = vadd.f32 %v2692, %v2693
      %v2695 = vrot.slane %v2694, 1
      %v2696 = vadd.f32 %v2694, %v2695
      %v2697 = vsel %vm430, %v2660, 0.0
      %v2698 = vrot.slane %v2697, 4
      %v2699 = vadd.f32 %v2697, %v2698
      %v2700 = vrot.slane %v2699, 2
      %v2701 = vadd.f32 %v2699, %v2700
      %v2702 = vrot.slane %v2701, 1
      %v2703 = vadd.f32 %v2701, %v2702
      %v2704 = vsel %vm430, %v2661, 0.0
      %v2705 = vrot.slane %v2704, 4
      %v2706 = vadd.f32 %v2704, %v2705
      %v2707 = vrot.slane %v2706, 2
      %v2708 = vadd.f32 %v2706, %v2707
      %v2709 = vrot.slane %v2708, 1
      %v2710 = vadd.f32 %v2708, %v2709
      %v2711 = vmul.f32 %v2515, %v1374
      %v2712 = vmul.f32 %v2538, %v1374
      %v2713 = vmul.f32 %v2561, %v1374
      %v2714 = vmul.f32 %v2584, %v1374
      %v2715 = vmul.f32 %v2607, %v1374
      %v2716 = vmul.f32 %v2630, %v1374
      %v2717 = vmul.f32 %v2653, %v1374
      %v2718 = vsel %vm430, %v2711, 0.0
      %2719 = vadd.xlane.f32.xlu0 %v2718
      %v2720 = vpop.xlane.xlu0 %2719
      %v2721 = vsel %vm430, %v2712, 0.0
      %2722 = vadd.xlane.f32.xlu0 %v2721
      %v2723 = vpop.xlane.xlu0 %2722
      %v2724 = vsel %vm430, %v2713, 0.0
      %2725 = vadd.xlane.f32.xlu0 %v2724
      %v2726 = vpop.xlane.xlu0 %2725
      %v2727 = vsel %vm430, %v2714, 0.0
      %2728 = vadd.xlane.f32.xlu0 %v2727
      %v2729 = vpop.xlane.xlu0 %2728
      %v2730 = vsel %vm430, %v2715, 0.0
      %2731 = vadd.xlane.f32.xlu0 %v2730
      %v2732 = vpop.xlane.xlu0 %2731
      %v2733 = vsel %vm430, %v2716, 0.0
      %2734 = vadd.xlane.f32.xlu0 %v2733
      %v2735 = vpop.xlane.xlu0 %2734
      %v2736 = vsel %vm430, %v2717, 0.0
      %2737 = vadd.xlane.f32.xlu0 %v2736
      %v2738 = vpop.xlane.xlu0 %2737
      %v2739 = vlaneseq
      %v2740 = vshrl.u32 %v2739, 7
      %2742 = vset.pattern.permute.xlu0 %v2740
      %2743 = vperm.xlu0 %2742, %v2668
      %v2744 = vpop.permute.xlu0 %2743
      %v2745 = vlaneseq
      %v2746 = vshrl.u32 %v2745, 7
      %2748 = vset.pattern.permute.xlu0 %v2746
      %2749 = vperm.xlu0 %2748, %v2675
      %v2750 = vpop.permute.xlu0 %2749
      %v2751 = vlaneseq
      %v2752 = vshrl.u32 %v2751, 7
      %2754 = vset.pattern.permute.xlu0 %v2752
      %2755 = vperm.xlu0 %2754, %v2682
      %v2756 = vpop.permute.xlu0 %2755
      %v2757 = vlaneseq
      %v2758 = vshrl.u32 %v2757, 7
      %2760 = vset.pattern.permute.xlu0 %v2758
      %2761 = vperm.xlu0 %2760, %v2689
      %v2762 = vpop.permute.xlu0 %2761
      %v2763 = vlaneseq
      %v2764 = vshrl.u32 %v2763, 7
      %2766 = vset.pattern.permute.xlu0 %v2764
      %2767 = vperm.xlu0 %2766, %v2696
      %v2768 = vpop.permute.xlu0 %2767
      %v2769 = vlaneseq
      %v2770 = vshrl.u32 %v2769, 7
      %2772 = vset.pattern.permute.xlu0 %v2770
      %2773 = vperm.xlu0 %2772, %v2703
      %v2774 = vpop.permute.xlu0 %2773
      %v2775 = vlaneseq
      %v2776 = vshrl.u32 %v2775, 7
      %2778 = vset.pattern.permute.xlu0 %v2776
      %2779 = vperm.xlu0 %2778, %v2710
      %v2780 = vpop.permute.xlu0 %2779
      %v2788 = vperm.slane %v2720, %v252
      %v2789 = vperm.slane %v2723, %v252
      %v2790 = vperm.slane %v2726, %v252
      %v2791 = vperm.slane %v2729, %v252
      %v2792 = vperm.slane %v2732, %v252
      %v2793 = vperm.slane %v2735, %v252
      %v2794 = vperm.slane %v2738, %v252
      %v2795 = vsel %vm1472, %v2788, %v2788
      %v2796 = vsel %vm1474, %v2788, %v2795
      %v2797 = vsel %vm1476, %v2788, %v2796
      %v2798 = vsel %vm1478, %v2788, %v2797
      %v2799 = vsel %vm1480, %v2788, %v2798
      %v2800 = vsel %vm1482, %v2788, %v2799
      %v2801 = vsel %vm1472, %v2789, %v2789
      %v2802 = vsel %vm1474, %v2789, %v2801
      %v2803 = vsel %vm1476, %v2789, %v2802
      %v2804 = vsel %vm1478, %v2789, %v2803
      %v2805 = vsel %vm1480, %v2789, %v2804
      %v2806 = vsel %vm1482, %v2789, %v2805
      %v2807 = vsel %vm1472, %v2790, %v2790
      %v2808 = vsel %vm1474, %v2790, %v2807
      %v2809 = vsel %vm1476, %v2790, %v2808
      %v2810 = vsel %vm1478, %v2790, %v2809
      %v2811 = vsel %vm1480, %v2790, %v2810
      %v2812 = vsel %vm1482, %v2790, %v2811
      %v2813 = vsel %vm1472, %v2791, %v2791
      %v2814 = vsel %vm1474, %v2791, %v2813
      %v2815 = vsel %vm1476, %v2791, %v2814
      %v2816 = vsel %vm1478, %v2791, %v2815
      %v2817 = vsel %vm1480, %v2791, %v2816
      %v2818 = vsel %vm1482, %v2791, %v2817
      %v2819 = vsel %vm1472, %v2792, %v2792
      %v2820 = vsel %vm1474, %v2792, %v2819
      %v2821 = vsel %vm1476, %v2792, %v2820
      %v2822 = vsel %vm1478, %v2792, %v2821
      %v2823 = vsel %vm1480, %v2792, %v2822
      %v2824 = vsel %vm1482, %v2792, %v2823
      %v2825 = vsel %vm1472, %v2793, %v2793
      %v2826 = vsel %vm1474, %v2793, %v2825
      %v2827 = vsel %vm1476, %v2793, %v2826
      %v2828 = vsel %vm1478, %v2793, %v2827
      %v2829 = vsel %vm1480, %v2793, %v2828
      %v2830 = vsel %vm1482, %v2793, %v2829
      %v2831 = vsel %vm1472, %v2794, %v2794
      %v2832 = vsel %vm1474, %v2794, %v2831
      %v2833 = vsel %vm1476, %v2794, %v2832
      %v2834 = vsel %vm1478, %v2794, %v2833
      %v2835 = vsel %vm1480, %v2794, %v2834
      %v2836 = vsel %vm1482, %v2794, %v2835
      %v2844 = vmul.f32 %v1413, %v2800
      %v2845 = vmul.f32 %v2744, %v2806
      %v2846 = vmul.f32 %v2750, %v2812
      %v2847 = vmul.f32 %v2756, %v2818
      %v2848 = vmul.f32 %v2762, %v2824
      %v2849 = vmul.f32 %v2768, %v2830
      %v2850 = vmul.f32 %v2774, %v2836
      %v2851 = vmul.f32 %v2780, %v1525
      %v2852 = vrot.slane %v2846, 4
      %v2853 = vsel %vm318, %v2852, %v2844
      %v2854 = vrot.slane %v2844, 4
      %v2855 = vsel %vm318, %v2846, %v2854
      %v2857 = vunpack.c.l.s4 1983009808
      %v2858 = vunpack.c.0.s8 %v2857
      %v2859 = vperm.slane %v2853, %v2858
      %v2861 = vunpack.c.l.s4 1983009808
      %v2862 = vunpack.c.0.s8 %v2861
      %v2863 = vperm.slane %v2855, %v2862
      %v2864 = vrot.slane %v2847, 4
      %v2865 = vsel %vm318, %v2864, %v2845
      %v2866 = vrot.slane %v2845, 4
      %v2867 = vsel %vm318, %v2847, %v2866
      %v2869 = vunpack.c.l.s4 1983009808
      %v2870 = vunpack.c.0.s8 %v2869
      %v2871 = vperm.slane %v2865, %v2870
      %v2873 = vunpack.c.l.s4 1983009808
      %v2874 = vunpack.c.0.s8 %v2873
      %v2875 = vperm.slane %v2867, %v2874
      %v2876 = vrot.slane %v2850, 4
      %v2877 = vsel %vm318, %v2876, %v2848
      %v2878 = vrot.slane %v2848, 4
      %v2879 = vsel %vm318, %v2850, %v2878
      %v2881 = vunpack.c.l.s4 1983009808
      %v2882 = vunpack.c.0.s8 %v2881
      %v2883 = vperm.slane %v2877, %v2882
      %v2885 = vunpack.c.l.s4 1983009808
      %v2886 = vunpack.c.0.s8 %v2885
      %v2887 = vperm.slane %v2879, %v2886
      %v2888 = vrot.slane %v2851, 4
      %v2889 = vsel %vm318, %v2888, %v2849
      %v2890 = vrot.slane %v2849, 4
      %v2891 = vsel %vm318, %v2851, %v2890
      %v2893 = vunpack.c.l.s4 1983009808
      %v2894 = vunpack.c.0.s8 %v2893
      %v2895 = vperm.slane %v2889, %v2894
      %v2897 = vunpack.c.l.s4 1983009808
      %v2898 = vunpack.c.0.s8 %v2897
      %v2899 = vperm.slane %v2891, %v2898
      %v2900 = vrot.slane %v2871, 4
      %v2901 = vsel %vm318, %v2900, %v2859
      %v2902 = vrot.slane %v2859, 4
      %v2903 = vsel %vm318, %v2871, %v2902
      %v2905 = vunpack.c.l.s4 1934713408
      %v2906 = vunpack.c.0.s8 %v2905
      %v2907 = vperm.slane %v2901, %v2906
      %v2909 = vunpack.c.l.s4 1934713408
      %v2910 = vunpack.c.0.s8 %v2909
      %v2911 = vperm.slane %v2903, %v2910
      %v2912 = vrot.slane %v2875, 4
      %v2913 = vsel %vm318, %v2912, %v2863
      %v2914 = vrot.slane %v2863, 4
      %v2915 = vsel %vm318, %v2875, %v2914
      %v2917 = vunpack.c.l.s4 1934713408
      %v2918 = vunpack.c.0.s8 %v2917
      %v2919 = vperm.slane %v2913, %v2918
      %v2921 = vunpack.c.l.s4 1934713408
      %v2922 = vunpack.c.0.s8 %v2921
      %v2923 = vperm.slane %v2915, %v2922
      %v2924 = vrot.slane %v2895, 4
      %v2925 = vsel %vm318, %v2924, %v2883
      %v2926 = vrot.slane %v2883, 4
      %v2927 = vsel %vm318, %v2895, %v2926
      %v2929 = vunpack.c.l.s4 1934713408
      %v2930 = vunpack.c.0.s8 %v2929
      %v2931 = vperm.slane %v2925, %v2930
      %v2933 = vunpack.c.l.s4 1934713408
      %v2934 = vunpack.c.0.s8 %v2933
      %v2935 = vperm.slane %v2927, %v2934
      %v2936 = vrot.slane %v2899, 4
      %v2937 = vsel %vm318, %v2936, %v2887
      %v2938 = vrot.slane %v2887, 4
      %v2939 = vsel %vm318, %v2899, %v2938
      %v2941 = vunpack.c.l.s4 1934713408
      %v2942 = vunpack.c.0.s8 %v2941
      %v2943 = vperm.slane %v2937, %v2942
      %v2945 = vunpack.c.l.s4 1934713408
      %v2946 = vunpack.c.0.s8 %v2945
      %v2947 = vperm.slane %v2939, %v2946
      %v2948 = vrot.slane %v2931, 4
      %v2949 = vsel %vm318, %v2948, %v2907
      %v2950 = vrot.slane %v2907, 4
      %v2951 = vsel %vm318, %v2931, %v2950
      %v2952 = vrot.slane %v2935, 4
      %v2953 = vsel %vm318, %v2952, %v2911
      %v2954 = vrot.slane %v2911, 4
      %v2955 = vsel %vm318, %v2935, %v2954
      %v2956 = vrot.slane %v2943, 4
      %v2957 = vsel %vm318, %v2956, %v2919
      %v2958 = vrot.slane %v2919, 4
      %v2959 = vsel %vm318, %v2943, %v2958
      %v2960 = vrot.slane %v2947, 4
      %v2961 = vsel %vm318, %v2960, %v2923
      %v2962 = vrot.slane %v2923, 4
      %v2963 = vsel %vm318, %v2947, %v2962
      %2965 = vrot.lane.b32.xlu0 %v2951, 8
      %v2966 = vpop.permute.xlu0 %2965
      %2969 = vrot.lane.b32.xlu0 %v2953, 16
      %v2970 = vpop.permute.xlu0 %2969
      %2973 = vrot.lane.b32.xlu0 %v2955, 24
      %v2974 = vpop.permute.xlu0 %2973
      %2977 = vrot.lane.b32.xlu0 %v2957, 32
      %v2978 = vpop.permute.xlu0 %2977
      %2981 = vrot.lane.b32.xlu0 %v2959, 40
      %v2982 = vpop.permute.xlu0 %2981
      %2985 = vrot.lane.b32.xlu0 %v2961, 48
      %v2986 = vpop.permute.xlu0 %2985
      %2989 = vrot.lane.b32.xlu0 %v2963, 56
      %v2990 = vpop.permute.xlu0 %2989
      %v2992 = vsel %vm430, %v2949, %v2966
      %v2993 = vsel %vm1683, %v2992, %v2970
      %v2994 = vsel %vm1685, %v2993, %v2974
      %v2995 = vsel %vm1687, %v2994, %v2978
      %v2996 = vsel %vm1689, %v2995, %v2982
      %v2997 = vsel %vm1691, %v2996, %v2986
      %v2998 = vsel %vm1693, %v2997, %v2990
      %v3000 = vsel %vm1695, %v2998, 0
      %3002 = vmatpush.msra.mxu0 0.0
      %3003 = vmatpush.msra.mxu0 0.0
      %3004 = vmatpush.msra.mxu0 0.0
      %3005 = vmatpush.msra.mxu0 0.0
      %3006 = vmatpush.msra.mxu0 0.0
      %3007 = vmatpush.msra.mxu0 0.0
      %3008 = vmatpush.msra.mxu0 0.0
      %3009 = vmatpush.msra.mxu0 0.0
      %3010 = vmatpush.msra.mxu0 %v264
      %3011 = vmatpush.msra.mxu0 %v263
      %3012 = vmatpush.msra.mxu0 %v262
      %3013 = vmatpush.msra.mxu0 %v261
      %3014 = vmatpush.msra.mxu0 %v260
      %3015 = vmatpush.msra.mxu0 %v259
      %3016 = vmatpush.msra.mxu0 %v258
      %3017 = vmatpush.msra.mxu0 %v257
      %3018 = vmatmul.f32.gmra.mxu0 %v3000
      %v3019 = vpop.f32.mrf.mxu0
      %v3020 = vadd.f32 0.0, %v3019
      %3021 = vdwg.mxu0
      %v3022 = vmax.f32 %v3020, 0.0
      %v3023 = vadd.f32 %v3022, %v1736
      %v3024 = vmul.f32 %v3023, %v3023
      %v3025 = vsel %vm267, %v3024, 0.0
      %3026 = vadd.xlane.f32.xlu0 %v3025
      %v3027 = vpop.xlane.xlu0 %3026
      %v3028 = vadd.f32 %v3027, 1e-06
      %v3029 = vrsqrt.pop %v3028
      %v3030 = vmul.f32 %v3029, %v3028
      %v3031 = vmul.f32 %v3030, %v3029
      %v3032 = vmul.f32 0.5, %v3031
      %v3033 = vsub.f32 1.5, %v3032
      %v3034 = vmul.f32 %v3029, %v3033
      %vm3035 = vweird.f32 %v3028
      %vm3036 = vweird.f32 %v3029
      %vm3037 = vmor %vm3035, %vm3036
      %v3038 = vsel %vm3037, %v3029, %v3034
      %v3039 = vmul.f32 %v3023, %v3038
      %s3040 = scalar_lea.vmem %s2, 4
      %v3041 = vld [vmem:[%s3040] sm:$0xf]
      %s3042 = scalar_lea.vmem %s3, 64
      %v3043 = vld [vmem:[%s3042] sm:$0xff]
      %v3044 = vld [vmem:[%s3042 + $0x8] sm:$0xff]
      %v3045 = vld [vmem:[%s3042 + $0x10] sm:$0xff]
      %v3046 = vld [vmem:[%s3042 + $0x18] sm:$0xff]
      %v3047 = vld [vmem:[%s3042 + $0x20] sm:$0xff]
      %v3048 = vld [vmem:[%s3042 + $0x28] sm:$0xff]
      %v3049 = vld [vmem:[%s3042 + $0x30] sm:$0xff]
      %v3050 = vld [vmem:[%s3042 + $0x38] sm:$0xff]
      %s3051 = scalar_lea.vmem %s4, 8
      %v3052 = vld [vmem:[%s3051] sm:$0xff]
      %s3053 = scalar_lea.vmem %s5, 1
      %v3054 = vld [vmem:[%s3053] sm:$0x1]
      %v3056 = vsel %vm267, %v3039, 0
      %v3059 = vsel %vm271, %v3041, 0
      %3061 = vmatpush.msra.mxu0 0.0
      %3062 = vmatpush.msra.mxu0 0.0
      %3063 = vmatpush.msra.mxu0 0.0
      %3064 = vmatpush.msra.mxu0 0.0
      %3065 = vmatpush.msra.mxu0 0.0
      %3066 = vmatpush.msra.mxu0 0.0
      %3067 = vmatpush.msra.mxu0 0.0
      %3068 = vmatpush.msra.mxu0 0.0
      %3069 = vmatpush.msra.mxu0 0.0
      %3070 = vmatpush.msra.mxu0 0.0
      %3071 = vmatpush.msra.mxu0 0.0
      %3072 = vmatpush.msra.mxu0 0.0
      %3073 = vmatpush.msra.mxu0 0.0
      %3074 = vmatpush.msra.mxu0 0.0
      %3075 = vmatpush.msra.mxu0 0.0
      %3076 = vmatpush.msra.mxu0 %v3059
      %3077 = vmatmul.f32.gmra.mxu0 %v3056
      %v3078 = vpop.f32.mrf.mxu0
      %v3079 = vadd.f32 0.0, %v3078
      %3080 = vdwg.mxu0
      %3082 = vrot.lane.b32.xlu0 %v3079, 120
      %v3083 = vpop.permute.xlu0 %3082
      %3085 = vrot.lane.b32.xlu0 %v3079, 112
      %v3086 = vpop.permute.xlu0 %3085
      %3088 = vrot.lane.b32.xlu0 %v3079, 104
      %v3089 = vpop.permute.xlu0 %3088
      %3091 = vrot.lane.b32.xlu0 %v3079, 96
      %v3092 = vpop.permute.xlu0 %3091
      %3094 = vrot.lane.b32.xlu0 %v3079, 88
      %v3095 = vpop.permute.xlu0 %3094
      %3097 = vrot.lane.b32.xlu0 %v3079, 80
      %v3098 = vpop.permute.xlu0 %3097
      %3100 = vrot.lane.b32.xlu0 %v3079, 72
      %v3101 = vpop.permute.xlu0 %3100
      %v3103 = vrot.slane %v3086, 4
      %v3104 = vsel %vm318, %v3103, %v3079
      %v3105 = vrot.slane %v3079, 4
      %v3106 = vsel %vm318, %v3086, %v3105
      %v3108 = vunpack.c.l.s4 1983009808
      %v3109 = vunpack.c.0.s8 %v3108
      %v3110 = vperm.slane %v3104, %v3109
      %v3112 = vunpack.c.l.s4 1983009808
      %v3113 = vunpack.c.0.s8 %v3112
      %v3114 = vperm.slane %v3106, %v3113
      %v3115 = vrot.slane %v3089, 4
      %v3116 = vsel %vm318, %v3115, %v3083
      %v3117 = vrot.slane %v3083, 4
      %v3118 = vsel %vm318, %v3089, %v3117
      %v3120 = vunpack.c.l.s4 1983009808
      %v3121 = vunpack.c.0.s8 %v3120
      %v3122 = vperm.slane %v3116, %v3121
      %v3124 = vunpack.c.l.s4 1983009808
      %v3125 = vunpack.c.0.s8 %v3124
      %v3126 = vperm.slane %v3118, %v3125
      %v3127 = vrot.slane %v3098, 4
      %v3128 = vsel %vm318, %v3127, %v3092
      %v3129 = vrot.slane %v3092, 4
      %v3130 = vsel %vm318, %v3098, %v3129
      %v3132 = vunpack.c.l.s4 1983009808
      %v3133 = vunpack.c.0.s8 %v3132
      %v3134 = vperm.slane %v3128, %v3133
      %v3136 = vunpack.c.l.s4 1983009808
      %v3137 = vunpack.c.0.s8 %v3136
      %v3138 = vperm.slane %v3130, %v3137
      %v3139 = vrot.slane %v3101, 4
      %v3140 = vsel %vm318, %v3139, %v3095
      %v3141 = vrot.slane %v3095, 4
      %v3142 = vsel %vm318, %v3101, %v3141
      %v3144 = vunpack.c.l.s4 1983009808
      %v3145 = vunpack.c.0.s8 %v3144
      %v3146 = vperm.slane %v3140, %v3145
      %v3148 = vunpack.c.l.s4 1983009808
      %v3149 = vunpack.c.0.s8 %v3148
      %v3150 = vperm.slane %v3142, %v3149
      %v3151 = vrot.slane %v3122, 4
      %v3152 = vsel %vm318, %v3151, %v3110
      %v3153 = vrot.slane %v3110, 4
      %v3154 = vsel %vm318, %v3122, %v3153
      %v3156 = vunpack.c.l.s4 1934713408
      %v3157 = vunpack.c.0.s8 %v3156
      %v3158 = vperm.slane %v3152, %v3157
      %v3160 = vunpack.c.l.s4 1934713408
      %v3161 = vunpack.c.0.s8 %v3160
      %v3162 = vperm.slane %v3154, %v3161
      %v3163 = vrot.slane %v3126, 4
      %v3164 = vsel %vm318, %v3163, %v3114
      %v3165 = vrot.slane %v3114, 4
      %v3166 = vsel %vm318, %v3126, %v3165
      %v3168 = vunpack.c.l.s4 1934713408
      %v3169 = vunpack.c.0.s8 %v3168
      %v3170 = vperm.slane %v3164, %v3169
      %v3172 = vunpack.c.l.s4 1934713408
      %v3173 = vunpack.c.0.s8 %v3172
      %v3174 = vperm.slane %v3166, %v3173
      %v3175 = vrot.slane %v3146, 4
      %v3176 = vsel %vm318, %v3175, %v3134
      %v3177 = vrot.slane %v3134, 4
      %v3178 = vsel %vm318, %v3146, %v3177
      %v3180 = vunpack.c.l.s4 1934713408
      %v3181 = vunpack.c.0.s8 %v3180
      %v3182 = vperm.slane %v3176, %v3181
      %v3184 = vunpack.c.l.s4 1934713408
      %v3185 = vunpack.c.0.s8 %v3184
      %v3186 = vperm.slane %v3178, %v3185
      %v3187 = vrot.slane %v3150, 4
      %v3188 = vsel %vm318, %v3187, %v3138
      %v3189 = vrot.slane %v3138, 4
      %v3190 = vsel %vm318, %v3150, %v3189
      %v3192 = vunpack.c.l.s4 1934713408
      %v3193 = vunpack.c.0.s8 %v3192
      %v3194 = vperm.slane %v3188, %v3193
      %v3196 = vunpack.c.l.s4 1934713408
      %v3197 = vunpack.c.0.s8 %v3196
      %v3198 = vperm.slane %v3190, %v3197
      %v3199 = vrot.slane %v3182, 4
      %v3200 = vsel %vm318, %v3199, %v3158
      %v3201 = vrot.slane %v3158, 4
      %v3202 = vsel %vm318, %v3182, %v3201
      %v3203 = vrot.slane %v3186, 4
      %v3204 = vsel %vm318, %v3203, %v3162
      %v3205 = vrot.slane %v3162, 4
      %v3206 = vsel %vm318, %v3186, %v3205
      %v3207 = vrot.slane %v3194, 4
      %v3208 = vsel %vm318, %v3207, %v3170
      %v3209 = vrot.slane %v3170, 4
      %v3210 = vsel %vm318, %v3194, %v3209
      %v3211 = vrot.slane %v3198, 4
      %v3212 = vsel %vm318, %v3211, %v3174
      %v3213 = vrot.slane %v3174, 4
      %v3214 = vsel %vm318, %v3198, %v3213
      %3215 = vmatpush.msra.mxu0 0.0
      %3216 = vmatpush.msra.mxu0 0.0
      %3217 = vmatpush.msra.mxu0 0.0
      %3218 = vmatpush.msra.mxu0 0.0
      %3219 = vmatpush.msra.mxu0 0.0
      %3220 = vmatpush.msra.mxu0 0.0
      %3221 = vmatpush.msra.mxu0 0.0
      %3222 = vmatpush.msra.mxu0 0.0
      %3223 = vmatpush.msra.mxu0 0.0
      %3224 = vmatpush.msra.mxu0 0.0
      %3225 = vmatpush.msra.mxu0 0.0
      %3226 = vmatpush.msra.mxu0 0.0
      %3227 = vmatpush.msra.mxu0 0.0
      %3228 = vmatpush.msra.mxu0 0.0
      %3229 = vmatpush.msra.mxu0 0.0
      %3230 = vmatpush.msra.mxu0 %v3200
      %3231 = vmatmul.f32.gmra.mxu0 %v432
      %v3232 = vpop.f32.mrf.mxu0
      %v3233 = vadd.f32 0.0, %v3232
      %3234 = vdwg.mxu0
      %v3236 = vsel %vm430, %v3200, 0
      %3238 = vmatpush.msra.mxu0 0.0
      %3239 = vmatpush.msra.mxu0 0.0
      %3240 = vmatpush.msra.mxu0 0.0
      %3241 = vmatpush.msra.mxu0 0.0
      %3242 = vmatpush.msra.mxu0 0.0
      %3243 = vmatpush.msra.mxu0 0.0
      %3244 = vmatpush.msra.mxu0 0.0
      %3245 = vmatpush.msra.mxu0 0.0
      %3246 = vmatpush.msra.mxu0 0.0
      %3247 = vmatpush.msra.mxu0 0.0
      %3248 = vmatpush.msra.mxu0 0.0
      %3249 = vmatpush.msra.mxu0 0.0
      %3250 = vmatpush.msra.mxu0 0.0
      %3251 = vmatpush.msra.mxu0 0.0
      %3252 = vmatpush.msra.mxu0 0.0
      %3253 = vmatpush.msra.mxu0 %v3202
      %3254 = vmatmul.f32.gmra.mxu0 %v3236
      %v3255 = vpop.f32.mrf.mxu0
      %v3256 = vadd.f32 0.0, %v3255
      %3257 = vdwg.mxu0
      %v3259 = vsel %vm430, %v3202, 0
      %3261 = vmatpush.msra.mxu0 0.0
      %3262 = vmatpush.msra.mxu0 0.0
      %3263 = vmatpush.msra.mxu0 0.0
      %3264 = vmatpush.msra.mxu0 0.0
      %3265 = vmatpush.msra.mxu0 0.0
      %3266 = vmatpush.msra.mxu0 0.0
      %3267 = vmatpush.msra.mxu0 0.0
      %3268 = vmatpush.msra.mxu0 0.0
      %3269 = vmatpush.msra.mxu0 0.0
      %3270 = vmatpush.msra.mxu0 0.0
      %3271 = vmatpush.msra.mxu0 0.0
      %3272 = vmatpush.msra.mxu0 0.0
      %3273 = vmatpush.msra.mxu0 0.0
      %3274 = vmatpush.msra.mxu0 0.0
      %3275 = vmatpush.msra.mxu0 0.0
      %3276 = vmatpush.msra.mxu0 %v3204
      %3277 = vmatmul.f32.gmra.mxu0 %v3259
      %v3278 = vpop.f32.mrf.mxu0
      %v3279 = vadd.f32 0.0, %v3278
      %3280 = vdwg.mxu0
      %v3282 = vsel %vm430, %v3204, 0
      %3284 = vmatpush.msra.mxu0 0.0
      %3285 = vmatpush.msra.mxu0 0.0
      %3286 = vmatpush.msra.mxu0 0.0
      %3287 = vmatpush.msra.mxu0 0.0
      %3288 = vmatpush.msra.mxu0 0.0
      %3289 = vmatpush.msra.mxu0 0.0
      %3290 = vmatpush.msra.mxu0 0.0
      %3291 = vmatpush.msra.mxu0 0.0
      %3292 = vmatpush.msra.mxu0 0.0
      %3293 = vmatpush.msra.mxu0 0.0
      %3294 = vmatpush.msra.mxu0 0.0
      %3295 = vmatpush.msra.mxu0 0.0
      %3296 = vmatpush.msra.mxu0 0.0
      %3297 = vmatpush.msra.mxu0 0.0
      %3298 = vmatpush.msra.mxu0 0.0
      %3299 = vmatpush.msra.mxu0 %v3206
      %3300 = vmatmul.f32.gmra.mxu0 %v3282
      %v3301 = vpop.f32.mrf.mxu0
      %v3302 = vadd.f32 0.0, %v3301
      %3303 = vdwg.mxu0
      %v3305 = vsel %vm430, %v3206, 0
      %3307 = vmatpush.msra.mxu0 0.0
      %3308 = vmatpush.msra.mxu0 0.0
      %3309 = vmatpush.msra.mxu0 0.0
      %3310 = vmatpush.msra.mxu0 0.0
      %3311 = vmatpush.msra.mxu0 0.0
      %3312 = vmatpush.msra.mxu0 0.0
      %3313 = vmatpush.msra.mxu0 0.0
      %3314 = vmatpush.msra.mxu0 0.0
      %3315 = vmatpush.msra.mxu0 0.0
      %3316 = vmatpush.msra.mxu0 0.0
      %3317 = vmatpush.msra.mxu0 0.0
      %3318 = vmatpush.msra.mxu0 0.0
      %3319 = vmatpush.msra.mxu0 0.0
      %3320 = vmatpush.msra.mxu0 0.0
      %3321 = vmatpush.msra.mxu0 0.0
      %3322 = vmatpush.msra.mxu0 %v3208
      %3323 = vmatmul.f32.gmra.mxu0 %v3305
      %v3324 = vpop.f32.mrf.mxu0
      %v3325 = vadd.f32 0.0, %v3324
      %3326 = vdwg.mxu0
      %v3328 = vsel %vm430, %v3208, 0
      %3330 = vmatpush.msra.mxu0 0.0
      %3331 = vmatpush.msra.mxu0 0.0
      %3332 = vmatpush.msra.mxu0 0.0
      %3333 = vmatpush.msra.mxu0 0.0
      %3334 = vmatpush.msra.mxu0 0.0
      %3335 = vmatpush.msra.mxu0 0.0
      %3336 = vmatpush.msra.mxu0 0.0
      %3337 = vmatpush.msra.mxu0 0.0
      %3338 = vmatpush.msra.mxu0 0.0
      %3339 = vmatpush.msra.mxu0 0.0
      %3340 = vmatpush.msra.mxu0 0.0
      %3341 = vmatpush.msra.mxu0 0.0
      %3342 = vmatpush.msra.mxu0 0.0
      %3343 = vmatpush.msra.mxu0 0.0
      %3344 = vmatpush.msra.mxu0 0.0
      %3345 = vmatpush.msra.mxu0 %v3210
      %3346 = vmatmul.f32.gmra.mxu0 %v3328
      %v3347 = vpop.f32.mrf.mxu0
      %v3348 = vadd.f32 0.0, %v3347
      %3349 = vdwg.mxu0
      %v3351 = vsel %vm430, %v3210, 0
      %3353 = vmatpush.msra.mxu0 0.0
      %3354 = vmatpush.msra.mxu0 0.0
      %3355 = vmatpush.msra.mxu0 0.0
      %3356 = vmatpush.msra.mxu0 0.0
      %3357 = vmatpush.msra.mxu0 0.0
      %3358 = vmatpush.msra.mxu0 0.0
      %3359 = vmatpush.msra.mxu0 0.0
      %3360 = vmatpush.msra.mxu0 0.0
      %3361 = vmatpush.msra.mxu0 0.0
      %3362 = vmatpush.msra.mxu0 0.0
      %3363 = vmatpush.msra.mxu0 0.0
      %3364 = vmatpush.msra.mxu0 0.0
      %3365 = vmatpush.msra.mxu0 0.0
      %3366 = vmatpush.msra.mxu0 0.0
      %3367 = vmatpush.msra.mxu0 0.0
      %3368 = vmatpush.msra.mxu0 %v3212
      %3369 = vmatmul.f32.gmra.mxu0 %v3351
      %v3370 = vpop.f32.mrf.mxu0
      %v3371 = vadd.f32 0.0, %v3370
      %3372 = vdwg.mxu0
      %v3374 = vsel %vm430, %v3212, 0
      %3376 = vmatpush.msra.mxu0 0.0
      %3377 = vmatpush.msra.mxu0 0.0
      %3378 = vmatpush.msra.mxu0 0.0
      %3379 = vmatpush.msra.mxu0 0.0
      %3380 = vmatpush.msra.mxu0 0.0
      %3381 = vmatpush.msra.mxu0 0.0
      %3382 = vmatpush.msra.mxu0 0.0
      %3383 = vmatpush.msra.mxu0 0.0
      %3384 = vmatpush.msra.mxu0 0.0
      %3385 = vmatpush.msra.mxu0 0.0
      %3386 = vmatpush.msra.mxu0 0.0
      %3387 = vmatpush.msra.mxu0 0.0
      %3388 = vmatpush.msra.mxu0 0.0
      %3389 = vmatpush.msra.mxu0 0.0
      %3390 = vmatpush.msra.mxu0 0.0
      %3391 = vmatpush.msra.mxu0 %v3214
      %3392 = vmatmul.f32.gmra.mxu0 %v3374
      %v3393 = vpop.f32.mrf.mxu0
      %v3394 = vadd.f32 0.0, %v3393
      %3395 = vdwg.mxu0
      %v3397 = vsel %vm430, %v3214, 0
      %3399 = vmatpush.msra.mxu0 0.0
      %3400 = vmatpush.msra.mxu0 0.0
      %3401 = vmatpush.msra.mxu0 0.0
      %3402 = vmatpush.msra.mxu0 0.0
      %3403 = vmatpush.msra.mxu0 0.0
      %3404 = vmatpush.msra.mxu0 0.0
      %3405 = vmatpush.msra.mxu0 0.0
      %3406 = vmatpush.msra.mxu0 0.0
      %3407 = vmatpush.msra.mxu0 0.0
      %3408 = vmatpush.msra.mxu0 0.0
      %3409 = vmatpush.msra.mxu0 0.0
      %3410 = vmatpush.msra.mxu0 0.0
      %3411 = vmatpush.msra.mxu0 0.0
      %3412 = vmatpush.msra.mxu0 0.0
      %3413 = vmatpush.msra.mxu0 0.0
      %3414 = vmatpush.msra.mxu0 %v255
      %3415 = vmatmul.f32.gmra.mxu0 %v3397
      %v3416 = vpop.f32.mrf.mxu0
      %v3417 = vadd.f32 0.0, %v3416
      %3418 = vdwg.mxu0
      %3419 = vmatpush.msra.mxu0 0.0
      %3420 = vmatpush.msra.mxu0 0.0
      %3421 = vmatpush.msra.mxu0 0.0
      %3422 = vmatpush.msra.mxu0 0.0
      %3423 = vmatpush.msra.mxu0 0.0
      %3424 = vmatpush.msra.mxu0 0.0
      %3425 = vmatpush.msra.mxu0 0.0
      %3426 = vmatpush.msra.mxu0 0.0
      %3427 = vmatpush.msra.mxu0 0.0
      %3428 = vmatpush.msra.mxu0 0.0
      %3429 = vmatpush.msra.mxu0 0.0
      %3430 = vmatpush.msra.mxu0 0.0
      %3431 = vmatpush.msra.mxu0 0.0
      %3432 = vmatpush.msra.mxu0 0.0
      %3433 = vmatpush.msra.mxu0 0.0
      %3434 = vmatpush.msra.mxu0 %v3233
      %3435 = vmatmul.f32.gmra.mxu0 %v432
      %v3436 = vpop.f32.mrf.mxu0
      %v3437 = vadd.f32 0.0, %v3436
      %3438 = vdwg.mxu0
      %3439 = vmatpush.msra.mxu0 0.0
      %3440 = vmatpush.msra.mxu0 0.0
      %3441 = vmatpush.msra.mxu0 0.0
      %3442 = vmatpush.msra.mxu0 0.0
      %3443 = vmatpush.msra.mxu0 0.0
      %3444 = vmatpush.msra.mxu0 0.0
      %3445 = vmatpush.msra.mxu0 0.0
      %3446 = vmatpush.msra.mxu0 0.0
      %3447 = vmatpush.msra.mxu0 0.0
      %3448 = vmatpush.msra.mxu0 0.0
      %3449 = vmatpush.msra.mxu0 0.0
      %3450 = vmatpush.msra.mxu0 0.0
      %3451 = vmatpush.msra.mxu0 0.0
      %3452 = vmatpush.msra.mxu0 0.0
      %3453 = vmatpush.msra.mxu0 0.0
      %3454 = vmatpush.msra.mxu0 %v3256
      %3455 = vmatmul.f32.gmra.mxu0 %v699
      %v3456 = vpop.f32.mrf.mxu0
      %v3457 = vadd.f32 0.0, %v3456
      %3458 = vdwg.mxu0
      %v3460 = vsel %vm430, %v3233, 0
      %3462 = vmatpush.msra.mxu0 0.0
      %3463 = vmatpush.msra.mxu0 0.0
      %3464 = vmatpush.msra.mxu0 0.0
      %3465 = vmatpush.msra.mxu0 0.0
      %3466 = vmatpush.msra.mxu0 0.0
      %3467 = vmatpush.msra.mxu0 0.0
      %3468 = vmatpush.msra.mxu0 0.0
      %3469 = vmatpush.msra.mxu0 0.0
      %3470 = vmatpush.msra.mxu0 0.0
      %3471 = vmatpush.msra.mxu0 0.0
      %3472 = vmatpush.msra.mxu0 0.0
      %3473 = vmatpush.msra.mxu0 0.0
      %3474 = vmatpush.msra.mxu0 0.0
      %3475 = vmatpush.msra.mxu0 0.0
      %3476 = vmatpush.msra.mxu0 0.0
      %3477 = vmatpush.msra.mxu0 %v3279
      %3478 = vmatmul.f32.gmra.mxu0 %v3460
      %v3479 = vpop.f32.mrf.mxu0
      %v3480 = vadd.f32 0.0, %v3479
      %3481 = vdwg.mxu0
      %v3483 = vsel %vm430, %v3256, 0
      %3485 = vmatpush.msra.mxu0 0.0
      %3486 = vmatpush.msra.mxu0 0.0
      %3487 = vmatpush.msra.mxu0 0.0
      %3488 = vmatpush.msra.mxu0 0.0
      %3489 = vmatpush.msra.mxu0 0.0
      %3490 = vmatpush.msra.mxu0 0.0
      %3491 = vmatpush.msra.mxu0 0.0
      %3492 = vmatpush.msra.mxu0 0.0
      %3493 = vmatpush.msra.mxu0 0.0
      %3494 = vmatpush.msra.mxu0 0.0
      %3495 = vmatpush.msra.mxu0 0.0
      %3496 = vmatpush.msra.mxu0 0.0
      %3497 = vmatpush.msra.mxu0 0.0
      %3498 = vmatpush.msra.mxu0 0.0
      %3499 = vmatpush.msra.mxu0 0.0
      %3500 = vmatpush.msra.mxu0 %v3302
      %3501 = vmatmul.f32.gmra.mxu0 %v3483
      %v3502 = vpop.f32.mrf.mxu0
      %v3503 = vadd.f32 0.0, %v3502
      %3504 = vdwg.mxu0
      %v3506 = vsel %vm430, %v3279, 0
      %3508 = vmatpush.msra.mxu0 0.0
      %3509 = vmatpush.msra.mxu0 0.0
      %3510 = vmatpush.msra.mxu0 0.0
      %3511 = vmatpush.msra.mxu0 0.0
      %3512 = vmatpush.msra.mxu0 0.0
      %3513 = vmatpush.msra.mxu0 0.0
      %3514 = vmatpush.msra.mxu0 0.0
      %3515 = vmatpush.msra.mxu0 0.0
      %3516 = vmatpush.msra.mxu0 0.0
      %3517 = vmatpush.msra.mxu0 0.0
      %3518 = vmatpush.msra.mxu0 0.0
      %3519 = vmatpush.msra.mxu0 0.0
      %3520 = vmatpush.msra.mxu0 0.0
      %3521 = vmatpush.msra.mxu0 0.0
      %3522 = vmatpush.msra.mxu0 0.0
      %3523 = vmatpush.msra.mxu0 %v3325
      %3524 = vmatmul.f32.gmra.mxu0 %v3506
      %v3525 = vpop.f32.mrf.mxu0
      %v3526 = vadd.f32 0.0, %v3525
      %3527 = vdwg.mxu0
      %v3529 = vsel %vm430, %v3302, 0
      %3531 = vmatpush.msra.mxu0 0.0
      %3532 = vmatpush.msra.mxu0 0.0
      %3533 = vmatpush.msra.mxu0 0.0
      %3534 = vmatpush.msra.mxu0 0.0
      %3535 = vmatpush.msra.mxu0 0.0
      %3536 = vmatpush.msra.mxu0 0.0
      %3537 = vmatpush.msra.mxu0 0.0
      %3538 = vmatpush.msra.mxu0 0.0
      %3539 = vmatpush.msra.mxu0 0.0
      %3540 = vmatpush.msra.mxu0 0.0
      %3541 = vmatpush.msra.mxu0 0.0
      %3542 = vmatpush.msra.mxu0 0.0
      %3543 = vmatpush.msra.mxu0 0.0
      %3544 = vmatpush.msra.mxu0 0.0
      %3545 = vmatpush.msra.mxu0 0.0
      %3546 = vmatpush.msra.mxu0 %v3348
      %3547 = vmatmul.f32.gmra.mxu0 %v3529
      %v3548 = vpop.f32.mrf.mxu0
      %v3549 = vadd.f32 0.0, %v3548
      %3550 = vdwg.mxu0
      %v3552 = vsel %vm430, %v3325, 0
      %3554 = vmatpush.msra.mxu0 0.0
      %3555 = vmatpush.msra.mxu0 0.0
      %3556 = vmatpush.msra.mxu0 0.0
      %3557 = vmatpush.msra.mxu0 0.0
      %3558 = vmatpush.msra.mxu0 0.0
      %3559 = vmatpush.msra.mxu0 0.0
      %3560 = vmatpush.msra.mxu0 0.0
      %3561 = vmatpush.msra.mxu0 0.0
      %3562 = vmatpush.msra.mxu0 0.0
      %3563 = vmatpush.msra.mxu0 0.0
      %3564 = vmatpush.msra.mxu0 0.0
      %3565 = vmatpush.msra.mxu0 0.0
      %3566 = vmatpush.msra.mxu0 0.0
      %3567 = vmatpush.msra.mxu0 0.0
      %3568 = vmatpush.msra.mxu0 0.0
      %3569 = vmatpush.msra.mxu0 %v3371
      %3570 = vmatmul.f32.gmra.mxu0 %v3552
      %v3571 = vpop.f32.mrf.mxu0
      %v3572 = vadd.f32 0.0, %v3571
      %3573 = vdwg.mxu0
      %v3575 = vsel %vm430, %v3348, 0
      %3577 = vmatpush.msra.mxu0 0.0
      %3578 = vmatpush.msra.mxu0 0.0
      %3579 = vmatpush.msra.mxu0 0.0
      %3580 = vmatpush.msra.mxu0 0.0
      %3581 = vmatpush.msra.mxu0 0.0
      %3582 = vmatpush.msra.mxu0 0.0
      %3583 = vmatpush.msra.mxu0 0.0
      %3584 = vmatpush.msra.mxu0 0.0
      %3585 = vmatpush.msra.mxu0 0.0
      %3586 = vmatpush.msra.mxu0 0.0
      %3587 = vmatpush.msra.mxu0 0.0
      %3588 = vmatpush.msra.mxu0 0.0
      %3589 = vmatpush.msra.mxu0 0.0
      %3590 = vmatpush.msra.mxu0 0.0
      %3591 = vmatpush.msra.mxu0 0.0
      %3592 = vmatpush.msra.mxu0 %v3394
      %3593 = vmatmul.f32.gmra.mxu0 %v3575
      %v3594 = vpop.f32.mrf.mxu0
      %v3595 = vadd.f32 0.0, %v3594
      %3596 = vdwg.mxu0
      %v3598 = vsel %vm430, %v3371, 0
      %3600 = vmatpush.msra.mxu0 0.0
      %3601 = vmatpush.msra.mxu0 0.0
      %3602 = vmatpush.msra.mxu0 0.0
      %3603 = vmatpush.msra.mxu0 0.0
      %3604 = vmatpush.msra.mxu0 0.0
      %3605 = vmatpush.msra.mxu0 0.0
      %3606 = vmatpush.msra.mxu0 0.0
      %3607 = vmatpush.msra.mxu0 0.0
      %3608 = vmatpush.msra.mxu0 0.0
      %3609 = vmatpush.msra.mxu0 0.0
      %3610 = vmatpush.msra.mxu0 0.0
      %3611 = vmatpush.msra.mxu0 0.0
      %3612 = vmatpush.msra.mxu0 0.0
      %3613 = vmatpush.msra.mxu0 0.0
      %3614 = vmatpush.msra.mxu0 0.0
      %3615 = vmatpush.msra.mxu0 %v3417
      %3616 = vmatmul.f32.gmra.mxu0 %v3598
      %v3617 = vpop.f32.mrf.mxu0
      %v3618 = vadd.f32 0.0, %v3617
      %3619 = vdwg.mxu0
      %v3621 = vsel %vm430, %v3394, 0
      %3623 = vmatpush.msra.mxu0 0.0
      %3624 = vmatpush.msra.mxu0 0.0
      %3625 = vmatpush.msra.mxu0 0.0
      %3626 = vmatpush.msra.mxu0 0.0
      %3627 = vmatpush.msra.mxu0 0.0
      %3628 = vmatpush.msra.mxu0 0.0
      %3629 = vmatpush.msra.mxu0 0.0
      %3630 = vmatpush.msra.mxu0 0.0
      %3631 = vmatpush.msra.mxu0 0.0
      %3632 = vmatpush.msra.mxu0 0.0
      %3633 = vmatpush.msra.mxu0 0.0
      %3634 = vmatpush.msra.mxu0 0.0
      %3635 = vmatpush.msra.mxu0 0.0
      %3636 = vmatpush.msra.mxu0 0.0
      %3637 = vmatpush.msra.mxu0 0.0
      %3638 = vmatpush.msra.mxu0 %v452
      %3639 = vmatmul.f32.gmra.mxu0 %v3621
      %v3640 = vpop.f32.mrf.mxu0
      %v3641 = vadd.f32 0.0, %v3640
      %3642 = vdwg.mxu0
      %v3644 = vsel %vm430, %v3417, 0
      %3646 = vmatpush.msra.mxu0 0.0
      %3647 = vmatpush.msra.mxu0 0.0
      %3648 = vmatpush.msra.mxu0 0.0
      %3649 = vmatpush.msra.mxu0 0.0
      %3650 = vmatpush.msra.mxu0 0.0
      %3651 = vmatpush.msra.mxu0 0.0
      %3652 = vmatpush.msra.mxu0 0.0
      %3653 = vmatpush.msra.mxu0 0.0
      %3654 = vmatpush.msra.mxu0 0.0
      %3655 = vmatpush.msra.mxu0 0.0
      %3656 = vmatpush.msra.mxu0 0.0
      %3657 = vmatpush.msra.mxu0 0.0
      %3658 = vmatpush.msra.mxu0 0.0
      %3659 = vmatpush.msra.mxu0 0.0
      %3660 = vmatpush.msra.mxu0 0.0
      %3661 = vmatpush.msra.mxu0 %v255
      %3662 = vmatmul.f32.gmra.mxu0 %v3644
      %v3663 = vpop.f32.mrf.mxu0
      %v3664 = vadd.f32 0.0, %v3663
      %3665 = vdwg.mxu0
      %3666 = vmatpush.msra.mxu0 0.0
      %3667 = vmatpush.msra.mxu0 0.0
      %3668 = vmatpush.msra.mxu0 0.0
      %3669 = vmatpush.msra.mxu0 0.0
      %3670 = vmatpush.msra.mxu0 0.0
      %3671 = vmatpush.msra.mxu0 0.0
      %3672 = vmatpush.msra.mxu0 0.0
      %3673 = vmatpush.msra.mxu0 0.0
      %3674 = vmatpush.msra.mxu0 0.0
      %3675 = vmatpush.msra.mxu0 0.0
      %3676 = vmatpush.msra.mxu0 0.0
      %3677 = vmatpush.msra.mxu0 0.0
      %3678 = vmatpush.msra.mxu0 0.0
      %3679 = vmatpush.msra.mxu0 0.0
      %3680 = vmatpush.msra.mxu0 0.0
      %3681 = vmatpush.msra.mxu0 %v3437
      %3682 = vmatmul.f32.gmra.mxu0 %v432
      %v3683 = vpop.f32.mrf.mxu0
      %v3684 = vadd.f32 0.0, %v3683
      %3685 = vdwg.mxu0
      %3686 = vmatpush.msra.mxu0 0.0
      %3687 = vmatpush.msra.mxu0 0.0
      %3688 = vmatpush.msra.mxu0 0.0
      %3689 = vmatpush.msra.mxu0 0.0
      %3690 = vmatpush.msra.mxu0 0.0
      %3691 = vmatpush.msra.mxu0 0.0
      %3692 = vmatpush.msra.mxu0 0.0
      %3693 = vmatpush.msra.mxu0 0.0
      %3694 = vmatpush.msra.mxu0 0.0
      %3695 = vmatpush.msra.mxu0 0.0
      %3696 = vmatpush.msra.mxu0 0.0
      %3697 = vmatpush.msra.mxu0 0.0
      %3698 = vmatpush.msra.mxu0 0.0
      %3699 = vmatpush.msra.mxu0 0.0
      %3700 = vmatpush.msra.mxu0 0.0
      %3701 = vmatpush.msra.mxu0 %v3457
      %3702 = vmatmul.f32.gmra.mxu0 %v432
      %v3703 = vpop.f32.mrf.mxu0
      %v3704 = vadd.f32 0.0, %v3703
      %3705 = vdwg.mxu0
      %3706 = vmatpush.msra.mxu0 0.0
      %3707 = vmatpush.msra.mxu0 0.0
      %3708 = vmatpush.msra.mxu0 0.0
      %3709 = vmatpush.msra.mxu0 0.0
      %3710 = vmatpush.msra.mxu0 0.0
      %3711 = vmatpush.msra.mxu0 0.0
      %3712 = vmatpush.msra.mxu0 0.0
      %3713 = vmatpush.msra.mxu0 0.0
      %3714 = vmatpush.msra.mxu0 0.0
      %3715 = vmatpush.msra.mxu0 0.0
      %3716 = vmatpush.msra.mxu0 0.0
      %3717 = vmatpush.msra.mxu0 0.0
      %3718 = vmatpush.msra.mxu0 0.0
      %3719 = vmatpush.msra.mxu0 0.0
      %3720 = vmatpush.msra.mxu0 0.0
      %3721 = vmatpush.msra.mxu0 %v3480
      %3722 = vmatmul.f32.gmra.mxu0 %v432
      %v3723 = vpop.f32.mrf.mxu0
      %v3724 = vadd.f32 0.0, %v3723
      %3725 = vdwg.mxu0
      %3726 = vmatpush.msra.mxu0 0.0
      %3727 = vmatpush.msra.mxu0 0.0
      %3728 = vmatpush.msra.mxu0 0.0
      %3729 = vmatpush.msra.mxu0 0.0
      %3730 = vmatpush.msra.mxu0 0.0
      %3731 = vmatpush.msra.mxu0 0.0
      %3732 = vmatpush.msra.mxu0 0.0
      %3733 = vmatpush.msra.mxu0 0.0
      %3734 = vmatpush.msra.mxu0 0.0
      %3735 = vmatpush.msra.mxu0 0.0
      %3736 = vmatpush.msra.mxu0 0.0
      %3737 = vmatpush.msra.mxu0 0.0
      %3738 = vmatpush.msra.mxu0 0.0
      %3739 = vmatpush.msra.mxu0 0.0
      %3740 = vmatpush.msra.mxu0 0.0
      %3741 = vmatpush.msra.mxu0 %v3503
      %3742 = vmatmul.f32.gmra.mxu0 %v1029
      %v3743 = vpop.f32.mrf.mxu0
      %v3744 = vadd.f32 0.0, %v3743
      %3745 = vdwg.mxu0
      %v3747 = vsel %vm430, %v3437, 0
      %3749 = vmatpush.msra.mxu0 0.0
      %3750 = vmatpush.msra.mxu0 0.0
      %3751 = vmatpush.msra.mxu0 0.0
      %3752 = vmatpush.msra.mxu0 0.0
      %3753 = vmatpush.msra.mxu0 0.0
      %3754 = vmatpush.msra.mxu0 0.0
      %3755 = vmatpush.msra.mxu0 0.0
      %3756 = vmatpush.msra.mxu0 0.0
      %3757 = vmatpush.msra.mxu0 0.0
      %3758 = vmatpush.msra.mxu0 0.0
      %3759 = vmatpush.msra.mxu0 0.0
      %3760 = vmatpush.msra.mxu0 0.0
      %3761 = vmatpush.msra.mxu0 0.0
      %3762 = vmatpush.msra.mxu0 0.0
      %3763 = vmatpush.msra.mxu0 0.0
      %3764 = vmatpush.msra.mxu0 %v3526
      %3765 = vmatmul.f32.gmra.mxu0 %v3747
      %v3766 = vpop.f32.mrf.mxu0
      %v3767 = vadd.f32 0.0, %v3766
      %3768 = vdwg.mxu0
      %v3770 = vsel %vm430, %v3457, 0
      %3772 = vmatpush.msra.mxu0 0.0
      %3773 = vmatpush.msra.mxu0 0.0
      %3774 = vmatpush.msra.mxu0 0.0
      %3775 = vmatpush.msra.mxu0 0.0
      %3776 = vmatpush.msra.mxu0 0.0
      %3777 = vmatpush.msra.mxu0 0.0
      %3778 = vmatpush.msra.mxu0 0.0
      %3779 = vmatpush.msra.mxu0 0.0
      %3780 = vmatpush.msra.mxu0 0.0
      %3781 = vmatpush.msra.mxu0 0.0
      %3782 = vmatpush.msra.mxu0 0.0
      %3783 = vmatpush.msra.mxu0 0.0
      %3784 = vmatpush.msra.mxu0 0.0
      %3785 = vmatpush.msra.mxu0 0.0
      %3786 = vmatpush.msra.mxu0 0.0
      %3787 = vmatpush.msra.mxu0 %v3549
      %3788 = vmatmul.f32.gmra.mxu0 %v3770
      %v3789 = vpop.f32.mrf.mxu0
      %v3790 = vadd.f32 0.0, %v3789
      %3791 = vdwg.mxu0
      %v3793 = vsel %vm430, %v3480, 0
      %3795 = vmatpush.msra.mxu0 0.0
      %3796 = vmatpush.msra.mxu0 0.0
      %3797 = vmatpush.msra.mxu0 0.0
      %3798 = vmatpush.msra.mxu0 0.0
      %3799 = vmatpush.msra.mxu0 0.0
      %3800 = vmatpush.msra.mxu0 0.0
      %3801 = vmatpush.msra.mxu0 0.0
      %3802 = vmatpush.msra.mxu0 0.0
      %3803 = vmatpush.msra.mxu0 0.0
      %3804 = vmatpush.msra.mxu0 0.0
      %3805 = vmatpush.msra.mxu0 0.0
      %3806 = vmatpush.msra.mxu0 0.0
      %3807 = vmatpush.msra.mxu0 0.0
      %3808 = vmatpush.msra.mxu0 0.0
      %3809 = vmatpush.msra.mxu0 0.0
      %3810 = vmatpush.msra.mxu0 %v3572
      %3811 = vmatmul.f32.gmra.mxu0 %v3793
      %v3812 = vpop.f32.mrf.mxu0
      %v3813 = vadd.f32 0.0, %v3812
      %3814 = vdwg.mxu0
      %v3816 = vsel %vm430, %v3526, 0
      %3818 = vmatpush.msra.mxu0 0.0
      %3819 = vmatpush.msra.mxu0 0.0
      %3820 = vmatpush.msra.mxu0 0.0
      %3821 = vmatpush.msra.mxu0 0.0
      %3822 = vmatpush.msra.mxu0 0.0
      %3823 = vmatpush.msra.mxu0 0.0
      %3824 = vmatpush.msra.mxu0 0.0
      %3825 = vmatpush.msra.mxu0 0.0
      %3826 = vmatpush.msra.mxu0 0.0
      %3827 = vmatpush.msra.mxu0 0.0
      %3828 = vmatpush.msra.mxu0 0.0
      %3829 = vmatpush.msra.mxu0 0.0
      %3830 = vmatpush.msra.mxu0 0.0
      %3831 = vmatpush.msra.mxu0 0.0
      %3832 = vmatpush.msra.mxu0 0.0
      %3833 = vmatpush.msra.mxu0 %v3618
      %3834 = vmatmul.f32.gmra.mxu0 %v3816
      %v3835 = vpop.f32.mrf.mxu0
      %v3836 = vadd.f32 0.0, %v3835
      %3837 = vdwg.mxu0
      %v3839 = vsel %vm430, %v3549, 0
      %3841 = vmatpush.msra.mxu0 0.0
      %3842 = vmatpush.msra.mxu0 0.0
      %3843 = vmatpush.msra.mxu0 0.0
      %3844 = vmatpush.msra.mxu0 0.0
      %3845 = vmatpush.msra.mxu0 0.0
      %3846 = vmatpush.msra.mxu0 0.0
      %3847 = vmatpush.msra.mxu0 0.0
      %3848 = vmatpush.msra.mxu0 0.0
      %3849 = vmatpush.msra.mxu0 0.0
      %3850 = vmatpush.msra.mxu0 0.0
      %3851 = vmatpush.msra.mxu0 0.0
      %3852 = vmatpush.msra.mxu0 0.0
      %3853 = vmatpush.msra.mxu0 0.0
      %3854 = vmatpush.msra.mxu0 0.0
      %3855 = vmatpush.msra.mxu0 0.0
      %3856 = vmatpush.msra.mxu0 %v3641
      %3857 = vmatmul.f32.gmra.mxu0 %v3839
      %v3858 = vpop.f32.mrf.mxu0
      %v3859 = vadd.f32 0.0, %v3858
      %3860 = vdwg.mxu0
      %v3862 = vsel %vm430, %v3572, 0
      %3864 = vmatpush.msra.mxu0 0.0
      %3865 = vmatpush.msra.mxu0 0.0
      %3866 = vmatpush.msra.mxu0 0.0
      %3867 = vmatpush.msra.mxu0 0.0
      %3868 = vmatpush.msra.mxu0 0.0
      %3869 = vmatpush.msra.mxu0 0.0
      %3870 = vmatpush.msra.mxu0 0.0
      %3871 = vmatpush.msra.mxu0 0.0
      %3872 = vmatpush.msra.mxu0 0.0
      %3873 = vmatpush.msra.mxu0 0.0
      %3874 = vmatpush.msra.mxu0 0.0
      %3875 = vmatpush.msra.mxu0 0.0
      %3876 = vmatpush.msra.mxu0 0.0
      %3877 = vmatpush.msra.mxu0 0.0
      %3878 = vmatpush.msra.mxu0 0.0
      %3879 = vmatpush.msra.mxu0 %v3664
      %3880 = vmatmul.f32.gmra.mxu0 %v3862
      %v3881 = vpop.f32.mrf.mxu0
      %v3882 = vadd.f32 0.0, %v3881
      %3883 = vdwg.mxu0
      %v3885 = vsel %vm430, %v3595, 0
      %3887 = vmatpush.msra.mxu0 0.0
      %3888 = vmatpush.msra.mxu0 0.0
      %3889 = vmatpush.msra.mxu0 0.0
      %3890 = vmatpush.msra.mxu0 0.0
      %3891 = vmatpush.msra.mxu0 0.0
      %3892 = vmatpush.msra.mxu0 0.0
      %3893 = vmatpush.msra.mxu0 0.0
      %3894 = vmatpush.msra.mxu0 0.0
      %3895 = vmatpush.msra.mxu0 0.0
      %3896 = vmatpush.msra.mxu0 0.0
      %3897 = vmatpush.msra.mxu0 0.0
      %3898 = vmatpush.msra.mxu0 0.0
      %3899 = vmatpush.msra.mxu0 0.0
      %3900 = vmatpush.msra.mxu0 0.0
      %3901 = vmatpush.msra.mxu0 0.0
      %3902 = vmatpush.msra.mxu0 %v946
      %3903 = vmatmul.f32.gmra.mxu0 %v3885
      %v3904 = vpop.f32.mrf.mxu0
      %v3905 = vadd.f32 0.0, %v3904
      %3906 = vdwg.mxu0
      %v3908 = vsel %vm430, %v3618, 0
      %3910 = vmatpush.msra.mxu0 0.0
      %3911 = vmatpush.msra.mxu0 0.0
      %3912 = vmatpush.msra.mxu0 0.0
      %3913 = vmatpush.msra.mxu0 0.0
      %3914 = vmatpush.msra.mxu0 0.0
      %3915 = vmatpush.msra.mxu0 0.0
      %3916 = vmatpush.msra.mxu0 0.0
      %3917 = vmatpush.msra.mxu0 0.0
      %3918 = vmatpush.msra.mxu0 0.0
      %3919 = vmatpush.msra.mxu0 0.0
      %3920 = vmatpush.msra.mxu0 0.0
      %3921 = vmatpush.msra.mxu0 0.0
      %3922 = vmatpush.msra.mxu0 0.0
      %3923 = vmatpush.msra.mxu0 0.0
      %3924 = vmatpush.msra.mxu0 0.0
      %3925 = vmatpush.msra.mxu0 %v255
      %3926 = vmatmul.f32.gmra.mxu0 %v3908
      %v3927 = vpop.f32.mrf.mxu0
      %v3928 = vadd.f32 0.0, %v3927
      %3929 = vdwg.mxu0
      %v3931 = vsel %vm430, %v3641, 0
      %3933 = vmatpush.msra.mxu0 0.0
      %3934 = vmatpush.msra.mxu0 0.0
      %3935 = vmatpush.msra.mxu0 0.0
      %3936 = vmatpush.msra.mxu0 0.0
      %3937 = vmatpush.msra.mxu0 0.0
      %3938 = vmatpush.msra.mxu0 0.0
      %3939 = vmatpush.msra.mxu0 0.0
      %3940 = vmatpush.msra.mxu0 0.0
      %3941 = vmatpush.msra.mxu0 0.0
      %3942 = vmatpush.msra.mxu0 0.0
      %3943 = vmatpush.msra.mxu0 0.0
      %3944 = vmatpush.msra.mxu0 0.0
      %3945 = vmatpush.msra.mxu0 0.0
      %3946 = vmatpush.msra.mxu0 0.0
      %3947 = vmatpush.msra.mxu0 0.0
      %3948 = vmatpush.msra.mxu0 %v255
      %3949 = vmatmul.f32.gmra.mxu0 %v3931
      %v3950 = vpop.f32.mrf.mxu0
      %v3951 = vadd.f32 0.0, %v3950
      %3952 = vdwg.mxu0
      %v3954 = vsel %vm430, %v3664, 0
      %3956 = vmatpush.msra.mxu0 0.0
      %3957 = vmatpush.msra.mxu0 0.0
      %3958 = vmatpush.msra.mxu0 0.0
      %3959 = vmatpush.msra.mxu0 0.0
      %3960 = vmatpush.msra.mxu0 0.0
      %3961 = vmatpush.msra.mxu0 0.0
      %3962 = vmatpush.msra.mxu0 0.0
      %3963 = vmatpush.msra.mxu0 0.0
      %3964 = vmatpush.msra.mxu0 0.0
      %3965 = vmatpush.msra.mxu0 0.0
      %3966 = vmatpush.msra.mxu0 0.0
      %3967 = vmatpush.msra.mxu0 0.0
      %3968 = vmatpush.msra.mxu0 0.0
      %3969 = vmatpush.msra.mxu0 0.0
      %3970 = vmatpush.msra.mxu0 0.0
      %3971 = vmatpush.msra.mxu0 %v255
      %3972 = vmatmul.f32.gmra.mxu0 %v3954
      %v3973 = vpop.f32.mrf.mxu0
      %v3974 = vadd.f32 0.0, %v3973
      %3975 = vdwg.mxu0
      %3977 = vset.pattern.permute.xlu0 0
      %3978 = vperm.xlu0 %3977, %v3052
      %v3979 = vpop.permute.xlu0 %3978
      %v3981 = vmul.f32 %v3979, %v966
      %v3982 = vmul.f32 %v3979, %v3684
      %v3983 = vmul.f32 %v3979, %v3704
      %v3984 = vmul.f32 %v3979, %v3724
      %v3985 = vmul.f32 %v3979, %v3744
      %v3986 = vmul.f32 %v3979, %v3767
      %v3987 = vmul.f32 %v3979, %v3790
      %v3988 = vmul.f32 %v3979, %v3813
      %v3989 = vsel %vm430, %v3981, 0.0
      %v3990 = vrot.slane %v3989, 4
      %v3991 = vadd.f32 %v3989, %v3990
      %v3992 = vrot.slane %v3991, 2
      %v3993 = vadd.f32 %v3991, %v3992
      %v3994 = vrot.slane %v3993, 1
      %v3995 = vadd.f32 %v3993, %v3994
      %v3996 = vsel %vm430, %v3982, 0.0
      %v3997 = vrot.slane %v3996, 4
      %v3998 = vadd.f32 %v3996, %v3997
      %v3999 = vrot.slane %v3998, 2
      %v4000 = vadd.f32 %v3998, %v3999
      %v4001 = vrot.slane %v4000, 1
      %v4002 = vadd.f32 %v4000, %v4001
      %v4003 = vsel %vm430, %v3983, 0.0
      %v4004 = vrot.slane %v4003, 4
      %v4005 = vadd.f32 %v4003, %v4004
      %v4006 = vrot.slane %v4005, 2
      %v4007 = vadd.f32 %v4005, %v4006
      %v4008 = vrot.slane %v4007, 1
      %v4009 = vadd.f32 %v4007, %v4008
      %v4010 = vsel %vm430, %v3984, 0.0
      %v4011 = vrot.slane %v4010, 4
      %v4012 = vadd.f32 %v4010, %v4011
      %v4013 = vrot.slane %v4012, 2
      %v4014 = vadd.f32 %v4012, %v4013
      %v4015 = vrot.slane %v4014, 1
      %v4016 = vadd.f32 %v4014, %v4015
      %v4017 = vsel %vm430, %v3985, 0.0
      %v4018 = vrot.slane %v4017, 4
      %v4019 = vadd.f32 %v4017, %v4018
      %v4020 = vrot.slane %v4019, 2
      %v4021 = vadd.f32 %v4019, %v4020
      %v4022 = vrot.slane %v4021, 1
      %v4023 = vadd.f32 %v4021, %v4022
      %v4024 = vsel %vm430, %v3986, 0.0
      %v4025 = vrot.slane %v4024, 4
      %v4026 = vadd.f32 %v4024, %v4025
      %v4027 = vrot.slane %v4026, 2
      %v4028 = vadd.f32 %v4026, %v4027
      %v4029 = vrot.slane %v4028, 1
      %v4030 = vadd.f32 %v4028, %v4029
      %v4031 = vsel %vm430, %v3987, 0.0
      %v4032 = vrot.slane %v4031, 4
      %v4033 = vadd.f32 %v4031, %v4032
      %v4034 = vrot.slane %v4033, 2
      %v4035 = vadd.f32 %v4033, %v4034
      %v4036 = vrot.slane %v4035, 1
      %v4037 = vadd.f32 %v4035, %v4036
      %v4038 = vsel %vm430, %v3988, 0.0
      %v4039 = vrot.slane %v4038, 4
      %v4040 = vadd.f32 %v4038, %v4039
      %v4041 = vrot.slane %v4040, 2
      %v4042 = vadd.f32 %v4040, %v4041
      %v4043 = vrot.slane %v4042, 1
      %v4044 = vadd.f32 %v4042, %v4043
      %v4046 = vperm.slane %v3054, 0
      %v4048 = vmul.f32 %v3836, %v4046
      %v4049 = vmul.f32 %v3859, %v4046
      %v4050 = vmul.f32 %v3882, %v4046
      %v4051 = vmul.f32 %v3905, %v4046
      %v4052 = vmul.f32 %v3928, %v4046
      %v4053 = vmul.f32 %v3951, %v4046
      %v4054 = vmul.f32 %v3974, %v4046
      %v4055 = vmul.f32 %v1302, %v4046
      %v4056 = vsel %vm430, %v4048, 0.0
      %4057 = vadd.xlane.f32.xlu0 %v4056
      %v4058 = vpop.xlane.xlu0 %4057
      %v4059 = vsel %vm430, %v4049, 0.0
      %4060 = vadd.xlane.f32.xlu0 %v4059
      %v4061 = vpop.xlane.xlu0 %4060
      %v4062 = vsel %vm430, %v4050, 0.0
      %4063 = vadd.xlane.f32.xlu0 %v4062
      %v4064 = vpop.xlane.xlu0 %4063
      %v4065 = vsel %vm430, %v4051, 0.0
      %4066 = vadd.xlane.f32.xlu0 %v4065
      %v4067 = vpop.xlane.xlu0 %4066
      %v4068 = vsel %vm430, %v4052, 0.0
      %4069 = vadd.xlane.f32.xlu0 %v4068
      %v4070 = vpop.xlane.xlu0 %4069
      %v4071 = vsel %vm430, %v4053, 0.0
      %4072 = vadd.xlane.f32.xlu0 %v4071
      %v4073 = vpop.xlane.xlu0 %4072
      %v4074 = vsel %vm430, %v4054, 0.0
      %4075 = vadd.xlane.f32.xlu0 %v4074
      %v4076 = vpop.xlane.xlu0 %4075
      %v4077 = vsel %vm430, %v4055, 0.0
      %4078 = vadd.xlane.f32.xlu0 %v4077
      %v4079 = vpop.xlane.xlu0 %4078
      %v4080 = vlaneseq
      %v4081 = vshrl.u32 %v4080, 7
      %4083 = vset.pattern.permute.xlu0 %v4081
      %4084 = vperm.xlu0 %4083, %v3995
      %v4085 = vpop.permute.xlu0 %4084
      %v4086 = vlaneseq
      %v4087 = vshrl.u32 %v4086, 7
      %4089 = vset.pattern.permute.xlu0 %v4087
      %4090 = vperm.xlu0 %4089, %v4002
      %v4091 = vpop.permute.xlu0 %4090
      %v4092 = vlaneseq
      %v4093 = vshrl.u32 %v4092, 7
      %4095 = vset.pattern.permute.xlu0 %v4093
      %4096 = vperm.xlu0 %4095, %v4009
      %v4097 = vpop.permute.xlu0 %4096
      %v4098 = vlaneseq
      %v4099 = vshrl.u32 %v4098, 7
      %4101 = vset.pattern.permute.xlu0 %v4099
      %4102 = vperm.xlu0 %4101, %v4016
      %v4103 = vpop.permute.xlu0 %4102
      %v4104 = vlaneseq
      %v4105 = vshrl.u32 %v4104, 7
      %4107 = vset.pattern.permute.xlu0 %v4105
      %4108 = vperm.xlu0 %4107, %v4023
      %v4109 = vpop.permute.xlu0 %4108
      %v4110 = vlaneseq
      %v4111 = vshrl.u32 %v4110, 7
      %4113 = vset.pattern.permute.xlu0 %v4111
      %4114 = vperm.xlu0 %4113, %v4030
      %v4115 = vpop.permute.xlu0 %4114
      %v4116 = vlaneseq
      %v4117 = vshrl.u32 %v4116, 7
      %4119 = vset.pattern.permute.xlu0 %v4117
      %4120 = vperm.xlu0 %4119, %v4037
      %v4121 = vpop.permute.xlu0 %4120
      %v4122 = vlaneseq
      %v4123 = vshrl.u32 %v4122, 7
      %4125 = vset.pattern.permute.xlu0 %v4123
      %4126 = vperm.xlu0 %4125, %v4044
      %v4127 = vpop.permute.xlu0 %4126
      %v4136 = vperm.slane %v4058, %v252
      %v4137 = vperm.slane %v4061, %v252
      %v4138 = vperm.slane %v4064, %v252
      %v4139 = vperm.slane %v4067, %v252
      %v4140 = vperm.slane %v4070, %v252
      %v4141 = vperm.slane %v4073, %v252
      %v4142 = vperm.slane %v4076, %v252
      %v4143 = vperm.slane %v4079, %v252
      %v4144 = vsel %vm1472, %v4136, %v4136
      %v4145 = vsel %vm1474, %v4136, %v4144
      %v4146 = vsel %vm1476, %v4136, %v4145
      %v4147 = vsel %vm1478, %v4136, %v4146
      %v4148 = vsel %vm1480, %v4136, %v4147
      %v4149 = vsel %vm1482, %v4136, %v4148
      %v4150 = vsel %vm1472, %v4137, %v4137
      %v4151 = vsel %vm1474, %v4137, %v4150
      %v4152 = vsel %vm1476, %v4137, %v4151
      %v4153 = vsel %vm1478, %v4137, %v4152
      %v4154 = vsel %vm1480, %v4137, %v4153
      %v4155 = vsel %vm1482, %v4137, %v4154
      %v4156 = vsel %vm1472, %v4138, %v4138
      %v4157 = vsel %vm1474, %v4138, %v4156
      %v4158 = vsel %vm1476, %v4138, %v4157
      %v4159 = vsel %vm1478, %v4138, %v4158
      %v4160 = vsel %vm1480, %v4138, %v4159
      %v4161 = vsel %vm1482, %v4138, %v4160
      %v4162 = vsel %vm1472, %v4139, %v4139
      %v4163 = vsel %vm1474, %v4139, %v4162
      %v4164 = vsel %vm1476, %v4139, %v4163
      %v4165 = vsel %vm1478, %v4139, %v4164
      %v4166 = vsel %vm1480, %v4139, %v4165
      %v4167 = vsel %vm1482, %v4139, %v4166
      %v4168 = vsel %vm1472, %v4140, %v4140
      %v4169 = vsel %vm1474, %v4140, %v4168
      %v4170 = vsel %vm1476, %v4140, %v4169
      %v4171 = vsel %vm1478, %v4140, %v4170
      %v4172 = vsel %vm1480, %v4140, %v4171
      %v4173 = vsel %vm1482, %v4140, %v4172
      %v4174 = vsel %vm1472, %v4141, %v4141
      %v4175 = vsel %vm1474, %v4141, %v4174
      %v4176 = vsel %vm1476, %v4141, %v4175
      %v4177 = vsel %vm1478, %v4141, %v4176
      %v4178 = vsel %vm1480, %v4141, %v4177
      %v4179 = vsel %vm1482, %v4141, %v4178
      %v4180 = vsel %vm1472, %v4142, %v4142
      %v4181 = vsel %vm1474, %v4142, %v4180
      %v4182 = vsel %vm1476, %v4142, %v4181
      %v4183 = vsel %vm1478, %v4142, %v4182
      %v4184 = vsel %vm1480, %v4142, %v4183
      %v4185 = vsel %vm1482, %v4142, %v4184
      %v4186 = vsel %vm1472, %v4143, %v4143
      %v4187 = vsel %vm1474, %v4143, %v4186
      %v4188 = vsel %vm1476, %v4143, %v4187
      %v4189 = vsel %vm1478, %v4143, %v4188
      %v4190 = vsel %vm1480, %v4143, %v4189
      %v4191 = vsel %vm1482, %v4143, %v4190
      %v4200 = vmul.f32 %v4085, %v4149
      %v4201 = vmul.f32 %v4091, %v4155
      %v4202 = vmul.f32 %v4097, %v4161
      %v4203 = vmul.f32 %v4103, %v4167
      %v4204 = vmul.f32 %v4109, %v4173
      %v4205 = vmul.f32 %v4115, %v4179
      %v4206 = vmul.f32 %v4121, %v4185
      %v4207 = vmul.f32 %v4127, %v4191
      %v4208 = vrot.slane %v4202, 4
      %v4209 = vsel %vm318, %v4208, %v4200
      %v4210 = vrot.slane %v4200, 4
      %v4211 = vsel %vm318, %v4202, %v4210
      %v4213 = vunpack.c.l.s4 1983009808
      %v4214 = vunpack.c.0.s8 %v4213
      %v4215 = vperm.slane %v4209, %v4214
      %v4217 = vunpack.c.l.s4 1983009808
      %v4218 = vunpack.c.0.s8 %v4217
      %v4219 = vperm.slane %v4211, %v4218
      %v4220 = vrot.slane %v4203, 4
      %v4221 = vsel %vm318, %v4220, %v4201
      %v4222 = vrot.slane %v4201, 4
      %v4223 = vsel %vm318, %v4203, %v4222
      %v4225 = vunpack.c.l.s4 1983009808
      %v4226 = vunpack.c.0.s8 %v4225
      %v4227 = vperm.slane %v4221, %v4226
      %v4229 = vunpack.c.l.s4 1983009808
      %v4230 = vunpack.c.0.s8 %v4229
      %v4231 = vperm.slane %v4223, %v4230
      %v4232 = vrot.slane %v4206, 4
      %v4233 = vsel %vm318, %v4232, %v4204
      %v4234 = vrot.slane %v4204, 4
      %v4235 = vsel %vm318, %v4206, %v4234
      %v4237 = vunpack.c.l.s4 1983009808
      %v4238 = vunpack.c.0.s8 %v4237
      %v4239 = vperm.slane %v4233, %v4238
      %v4241 = vunpack.c.l.s4 1983009808
      %v4242 = vunpack.c.0.s8 %v4241
      %v4243 = vperm.slane %v4235, %v4242
      %v4244 = vrot.slane %v4207, 4
      %v4245 = vsel %vm318, %v4244, %v4205
      %v4246 = vrot.slane %v4205, 4
      %v4247 = vsel %vm318, %v4207, %v4246
      %v4249 = vunpack.c.l.s4 1983009808
      %v4250 = vunpack.c.0.s8 %v4249
      %v4251 = vperm.slane %v4245, %v4250
      %v4253 = vunpack.c.l.s4 1983009808
      %v4254 = vunpack.c.0.s8 %v4253
      %v4255 = vperm.slane %v4247, %v4254
      %v4256 = vrot.slane %v4227, 4
      %v4257 = vsel %vm318, %v4256, %v4215
      %v4258 = vrot.slane %v4215, 4
      %v4259 = vsel %vm318, %v4227, %v4258
      %v4261 = vunpack.c.l.s4 1934713408
      %v4262 = vunpack.c.0.s8 %v4261
      %v4263 = vperm.slane %v4257, %v4262
      %v4265 = vunpack.c.l.s4 1934713408
      %v4266 = vunpack.c.0.s8 %v4265
      %v4267 = vperm.slane %v4259, %v4266
      %v4268 = vrot.slane %v4231, 4
      %v4269 = vsel %vm318, %v4268, %v4219
      %v4270 = vrot.slane %v4219, 4
      %v4271 = vsel %vm318, %v4231, %v4270
      %v4273 = vunpack.c.l.s4 1934713408
      %v4274 = vunpack.c.0.s8 %v4273
      %v4275 = vperm.slane %v4269, %v4274
      %v4277 = vunpack.c.l.s4 1934713408
      %v4278 = vunpack.c.0.s8 %v4277
      %v4279 = vperm.slane %v4271, %v4278
      %v4280 = vrot.slane %v4251, 4
      %v4281 = vsel %vm318, %v4280, %v4239
      %v4282 = vrot.slane %v4239, 4
      %v4283 = vsel %vm318, %v4251, %v4282
      %v4285 = vunpack.c.l.s4 1934713408
      %v4286 = vunpack.c.0.s8 %v4285
      %v4287 = vperm.slane %v4281, %v4286
      %v4289 = vunpack.c.l.s4 1934713408
      %v4290 = vunpack.c.0.s8 %v4289
      %v4291 = vperm.slane %v4283, %v4290
      %v4292 = vrot.slane %v4255, 4
      %v4293 = vsel %vm318, %v4292, %v4243
      %v4294 = vrot.slane %v4243, 4
      %v4295 = vsel %vm318, %v4255, %v4294
      %v4297 = vunpack.c.l.s4 1934713408
      %v4298 = vunpack.c.0.s8 %v4297
      %v4299 = vperm.slane %v4293, %v4298
      %v4301 = vunpack.c.l.s4 1934713408
      %v4302 = vunpack.c.0.s8 %v4301
      %v4303 = vperm.slane %v4295, %v4302
      %v4304 = vrot.slane %v4287, 4
      %v4305 = vsel %vm318, %v4304, %v4263
      %v4306 = vrot.slane %v4263, 4
      %v4307 = vsel %vm318, %v4287, %v4306
      %v4308 = vrot.slane %v4291, 4
      %v4309 = vsel %vm318, %v4308, %v4267
      %v4310 = vrot.slane %v4267, 4
      %v4311 = vsel %vm318, %v4291, %v4310
      %v4312 = vrot.slane %v4299, 4
      %v4313 = vsel %vm318, %v4312, %v4275
      %v4314 = vrot.slane %v4275, 4
      %v4315 = vsel %vm318, %v4299, %v4314
      %v4316 = vrot.slane %v4303, 4
      %v4317 = vsel %vm318, %v4316, %v4279
      %v4318 = vrot.slane %v4279, 4
      %v4319 = vsel %vm318, %v4303, %v4318
      %4321 = vrot.lane.b32.xlu0 %v4307, 8
      %v4322 = vpop.permute.xlu0 %4321
      %4325 = vrot.lane.b32.xlu0 %v4309, 16
      %v4326 = vpop.permute.xlu0 %4325
      %4329 = vrot.lane.b32.xlu0 %v4311, 24
      %v4330 = vpop.permute.xlu0 %4329
      %4333 = vrot.lane.b32.xlu0 %v4313, 32
      %v4334 = vpop.permute.xlu0 %4333
      %4337 = vrot.lane.b32.xlu0 %v4315, 40
      %v4338 = vpop.permute.xlu0 %4337
      %4341 = vrot.lane.b32.xlu0 %v4317, 48
      %v4342 = vpop.permute.xlu0 %4341
      %4345 = vrot.lane.b32.xlu0 %v4319, 56
      %v4346 = vpop.permute.xlu0 %4345
      %v4348 = vsel %vm430, %v4305, %v4322
      %v4349 = vsel %vm1683, %v4348, %v4326
      %v4350 = vsel %vm1685, %v4349, %v4330
      %v4351 = vsel %vm1687, %v4350, %v4334
      %v4352 = vsel %vm1689, %v4351, %v4338
      %v4353 = vsel %vm1691, %v4352, %v4342
      %v4354 = vsel %vm1693, %v4353, %v4346
      %v4356 = vsel %vm1695, %v4354, 0
      %4358 = vmatpush.msra.mxu0 0.0
      %4359 = vmatpush.msra.mxu0 0.0
      %4360 = vmatpush.msra.mxu0 0.0
      %4361 = vmatpush.msra.mxu0 0.0
      %4362 = vmatpush.msra.mxu0 0.0
      %4363 = vmatpush.msra.mxu0 0.0
      %4364 = vmatpush.msra.mxu0 0.0
      %4365 = vmatpush.msra.mxu0 0.0
      %4366 = vmatpush.msra.mxu0 %v3050
      %4367 = vmatpush.msra.mxu0 %v3049
      %4368 = vmatpush.msra.mxu0 %v3048
      %4369 = vmatpush.msra.mxu0 %v3047
      %4370 = vmatpush.msra.mxu0 %v3046
      %4371 = vmatpush.msra.mxu0 %v3045
      %4372 = vmatpush.msra.mxu0 %v3044
      %4373 = vmatpush.msra.mxu0 %v3043
      %4374 = vmatmul.f32.gmra.mxu0 %v4356
      %v4375 = vpop.f32.mrf.mxu0
      %v4376 = vadd.f32 0.0, %v4375
      %4377 = vdwg.mxu0
      %v4378 = vmax.f32 %v4376, 0.0
      %v4379 = vadd.f32 %v4378, %v3039
      %v4380 = vmul.f32 %v4379, %v4379
      %v4381 = vsel %vm267, %v4380, 0.0
      %4382 = vadd.xlane.f32.xlu0 %v4381
      %v4383 = vpop.xlane.xlu0 %4382
      %v4384 = vadd.f32 %v4383, 1e-06
      %v4385 = vrsqrt.pop %v4384
      %v4386 = vmul.f32 %v4385, %v4384
      %v4387 = vmul.f32 %v4386, %v4385
      %v4388 = vmul.f32 0.5, %v4387
      %v4389 = vsub.f32 1.5, %v4388
      %v4390 = vmul.f32 %v4385, %v4389
      %vm4391 = vweird.f32 %v4384
      %vm4392 = vweird.f32 %v4385
      %vm4393 = vmor %vm4391, %vm4392
      %v4394 = vsel %vm4393, %v4385, %v4390
      %v4395 = vmul.f32 %v4379, %v4394
      %v4397 = vsel %vm267, %v4395, 0
      %4399 = vmatpush.msra.mxu0 0.0
      %4400 = vmatpush.msra.mxu0 0.0
      %4401 = vmatpush.msra.mxu0 0.0
      %4402 = vmatpush.msra.mxu0 0.0
      %4403 = vmatpush.msra.mxu0 0.0
      %4404 = vmatpush.msra.mxu0 0.0
      %4405 = vmatpush.msra.mxu0 0.0
      %4406 = vmatpush.msra.mxu0 0.0
      %4407 = vmatpush.msra.mxu0 0.0
      %4408 = vmatpush.msra.mxu0 0.0
      %4409 = vmatpush.msra.mxu0 0.0
      %4410 = vmatpush.msra.mxu0 0.0
      %4411 = vmatpush.msra.mxu0 0.0
      %4412 = vmatpush.msra.mxu0 0.0
      %4413 = vmatpush.msra.mxu0 0.0
      %4414 = vmatpush.msra.mxu0 %v3059
      %4415 = vmatmul.f32.gmra.mxu0 %v4397
      %v4416 = vpop.f32.mrf.mxu0
      %v4417 = vadd.f32 0.0, %v4416
      %4418 = vdwg.mxu0
      %4420 = vrot.lane.b32.xlu0 %v4417, 120
      %v4421 = vpop.permute.xlu0 %4420
      %4423 = vrot.lane.b32.xlu0 %v4417, 112
      %v4424 = vpop.permute.xlu0 %4423
      %4426 = vrot.lane.b32.xlu0 %v4417, 104
      %v4427 = vpop.permute.xlu0 %4426
      %4429 = vrot.lane.b32.xlu0 %v4417, 96
      %v4430 = vpop.permute.xlu0 %4429
      %4432 = vrot.lane.b32.xlu0 %v4417, 88
      %v4433 = vpop.permute.xlu0 %4432
      %4435 = vrot.lane.b32.xlu0 %v4417, 80
      %v4436 = vpop.permute.xlu0 %4435
      %4438 = vrot.lane.b32.xlu0 %v4417, 72
      %v4439 = vpop.permute.xlu0 %4438
      %v4441 = vrot.slane %v4424, 4
      %v4442 = vsel %vm318, %v4441, %v4417
      %v4443 = vrot.slane %v4417, 4
      %v4444 = vsel %vm318, %v4424, %v4443
      %v4446 = vunpack.c.l.s4 1983009808
      %v4447 = vunpack.c.0.s8 %v4446
      %v4448 = vperm.slane %v4442, %v4447
      %v4450 = vunpack.c.l.s4 1983009808
      %v4451 = vunpack.c.0.s8 %v4450
      %v4452 = vperm.slane %v4444, %v4451
      %v4453 = vrot.slane %v4427, 4
      %v4454 = vsel %vm318, %v4453, %v4421
      %v4455 = vrot.slane %v4421, 4
      %v4456 = vsel %vm318, %v4427, %v4455
      %v4458 = vunpack.c.l.s4 1983009808
      %v4459 = vunpack.c.0.s8 %v4458
      %v4460 = vperm.slane %v4454, %v4459
      %v4462 = vunpack.c.l.s4 1983009808
      %v4463 = vunpack.c.0.s8 %v4462
      %v4464 = vperm.slane %v4456, %v4463
      %v4465 = vrot.slane %v4436, 4
      %v4466 = vsel %vm318, %v4465, %v4430
      %v4467 = vrot.slane %v4430, 4
      %v4468 = vsel %vm318, %v4436, %v4467
      %v4470 = vunpack.c.l.s4 1983009808
      %v4471 = vunpack.c.0.s8 %v4470
      %v4472 = vperm.slane %v4466, %v4471
      %v4474 = vunpack.c.l.s4 1983009808
      %v4475 = vunpack.c.0.s8 %v4474
      %v4476 = vperm.slane %v4468, %v4475
      %v4477 = vrot.slane %v4439, 4
      %v4478 = vsel %vm318, %v4477, %v4433
      %v4479 = vrot.slane %v4433, 4
      %v4480 = vsel %vm318, %v4439, %v4479
      %v4482 = vunpack.c.l.s4 1983009808
      %v4483 = vunpack.c.0.s8 %v4482
      %v4484 = vperm.slane %v4478, %v4483
      %v4486 = vunpack.c.l.s4 1983009808
      %v4487 = vunpack.c.0.s8 %v4486
      %v4488 = vperm.slane %v4480, %v4487
      %v4489 = vrot.slane %v4460, 4
      %v4490 = vsel %vm318, %v4489, %v4448
      %v4491 = vrot.slane %v4448, 4
      %v4492 = vsel %vm318, %v4460, %v4491
      %v4494 = vunpack.c.l.s4 1934713408
      %v4495 = vunpack.c.0.s8 %v4494
      %v4496 = vperm.slane %v4490, %v4495
      %v4498 = vunpack.c.l.s4 1934713408
      %v4499 = vunpack.c.0.s8 %v4498
      %v4500 = vperm.slane %v4492, %v4499
      %v4501 = vrot.slane %v4464, 4
      %v4502 = vsel %vm318, %v4501, %v4452
      %v4503 = vrot.slane %v4452, 4
      %v4504 = vsel %vm318, %v4464, %v4503
      %v4506 = vunpack.c.l.s4 1934713408
      %v4507 = vunpack.c.0.s8 %v4506
      %v4508 = vperm.slane %v4502, %v4507
      %v4510 = vunpack.c.l.s4 1934713408
      %v4511 = vunpack.c.0.s8 %v4510
      %v4512 = vperm.slane %v4504, %v4511
      %v4513 = vrot.slane %v4484, 4
      %v4514 = vsel %vm318, %v4513, %v4472
      %v4515 = vrot.slane %v4472, 4
      %v4516 = vsel %vm318, %v4484, %v4515
      %v4518 = vunpack.c.l.s4 1934713408
      %v4519 = vunpack.c.0.s8 %v4518
      %v4520 = vperm.slane %v4514, %v4519
      %v4522 = vunpack.c.l.s4 1934713408
      %v4523 = vunpack.c.0.s8 %v4522
      %v4524 = vperm.slane %v4516, %v4523
      %v4525 = vrot.slane %v4488, 4
      %v4526 = vsel %vm318, %v4525, %v4476
      %v4527 = vrot.slane %v4476, 4
      %v4528 = vsel %vm318, %v4488, %v4527
      %v4530 = vunpack.c.l.s4 1934713408
      %v4531 = vunpack.c.0.s8 %v4530
      %v4532 = vperm.slane %v4526, %v4531
      %v4534 = vunpack.c.l.s4 1934713408
      %v4535 = vunpack.c.0.s8 %v4534
      %v4536 = vperm.slane %v4528, %v4535
      %v4537 = vrot.slane %v4520, 4
      %v4538 = vsel %vm318, %v4537, %v4496
      %v4539 = vrot.slane %v4496, 4
      %v4540 = vsel %vm318, %v4520, %v4539
      %v4541 = vrot.slane %v4524, 4
      %v4542 = vsel %vm318, %v4541, %v4500
      %v4543 = vrot.slane %v4500, 4
      %v4544 = vsel %vm318, %v4524, %v4543
      %v4545 = vrot.slane %v4532, 4
      %v4546 = vsel %vm318, %v4545, %v4508
      %v4547 = vrot.slane %v4508, 4
      %v4548 = vsel %vm318, %v4532, %v4547
      %v4549 = vrot.slane %v4536, 4
      %v4550 = vsel %vm318, %v4549, %v4512
      %v4551 = vrot.slane %v4512, 4
      %v4552 = vsel %vm318, %v4536, %v4551
      %4553 = vmatpush.msra.mxu0 0.0
      %4554 = vmatpush.msra.mxu0 0.0
      %4555 = vmatpush.msra.mxu0 0.0
      %4556 = vmatpush.msra.mxu0 0.0
      %4557 = vmatpush.msra.mxu0 0.0
      %4558 = vmatpush.msra.mxu0 0.0
      %4559 = vmatpush.msra.mxu0 0.0
      %4560 = vmatpush.msra.mxu0 0.0
      %4561 = vmatpush.msra.mxu0 0.0
      %4562 = vmatpush.msra.mxu0 0.0
      %4563 = vmatpush.msra.mxu0 0.0
      %4564 = vmatpush.msra.mxu0 0.0
      %4565 = vmatpush.msra.mxu0 0.0
      %4566 = vmatpush.msra.mxu0 0.0
      %4567 = vmatpush.msra.mxu0 0.0
      %4568 = vmatpush.msra.mxu0 %v4538
      %4569 = vmatmul.f32.gmra.mxu0 %v432
      %v4570 = vpop.f32.mrf.mxu0
      %v4571 = vadd.f32 0.0, %v4570
      %4572 = vdwg.mxu0
      %v4574 = vsel %vm430, %v4538, 0
      %4576 = vmatpush.msra.mxu0 0.0
      %4577 = vmatpush.msra.mxu0 0.0
      %4578 = vmatpush.msra.mxu0 0.0
      %4579 = vmatpush.msra.mxu0 0.0
      %4580 = vmatpush.msra.mxu0 0.0
      %4581 = vmatpush.msra.mxu0 0.0
      %4582 = vmatpush.msra.mxu0 0.0
      %4583 = vmatpush.msra.mxu0 0.0
      %4584 = vmatpush.msra.mxu0 0.0
      %4585 = vmatpush.msra.mxu0 0.0
      %4586 = vmatpush.msra.mxu0 0.0
      %4587 = vmatpush.msra.mxu0 0.0
      %4588 = vmatpush.msra.mxu0 0.0
      %4589 = vmatpush.msra.mxu0 0.0
      %4590 = vmatpush.msra.mxu0 0.0
      %4591 = vmatpush.msra.mxu0 %v4540
      %4592 = vmatmul.f32.gmra.mxu0 %v4574
      %v4593 = vpop.f32.mrf.mxu0
      %v4594 = vadd.f32 0.0, %v4593
      %4595 = vdwg.mxu0
      %v4597 = vsel %vm430, %v4540, 0
      %4599 = vmatpush.msra.mxu0 0.0
      %4600 = vmatpush.msra.mxu0 0.0
      %4601 = vmatpush.msra.mxu0 0.0
      %4602 = vmatpush.msra.mxu0 0.0
      %4603 = vmatpush.msra.mxu0 0.0
      %4604 = vmatpush.msra.mxu0 0.0
      %4605 = vmatpush.msra.mxu0 0.0
      %4606 = vmatpush.msra.mxu0 0.0
      %4607 = vmatpush.msra.mxu0 0.0
      %4608 = vmatpush.msra.mxu0 0.0
      %4609 = vmatpush.msra.mxu0 0.0
      %4610 = vmatpush.msra.mxu0 0.0
      %4611 = vmatpush.msra.mxu0 0.0
      %4612 = vmatpush.msra.mxu0 0.0
      %4613 = vmatpush.msra.mxu0 0.0
      %4614 = vmatpush.msra.mxu0 %v4542
      %4615 = vmatmul.f32.gmra.mxu0 %v4597
      %v4616 = vpop.f32.mrf.mxu0
      %v4617 = vadd.f32 0.0, %v4616
      %4618 = vdwg.mxu0
      %v4620 = vsel %vm430, %v4542, 0
      %4622 = vmatpush.msra.mxu0 0.0
      %4623 = vmatpush.msra.mxu0 0.0
      %4624 = vmatpush.msra.mxu0 0.0
      %4625 = vmatpush.msra.mxu0 0.0
      %4626 = vmatpush.msra.mxu0 0.0
      %4627 = vmatpush.msra.mxu0 0.0
      %4628 = vmatpush.msra.mxu0 0.0
      %4629 = vmatpush.msra.mxu0 0.0
      %4630 = vmatpush.msra.mxu0 0.0
      %4631 = vmatpush.msra.mxu0 0.0
      %4632 = vmatpush.msra.mxu0 0.0
      %4633 = vmatpush.msra.mxu0 0.0
      %4634 = vmatpush.msra.mxu0 0.0
      %4635 = vmatpush.msra.mxu0 0.0
      %4636 = vmatpush.msra.mxu0 0.0
      %4637 = vmatpush.msra.mxu0 %v4544
      %4638 = vmatmul.f32.gmra.mxu0 %v4620
      %v4639 = vpop.f32.mrf.mxu0
      %v4640 = vadd.f32 0.0, %v4639
      %4641 = vdwg.mxu0
      %v4643 = vsel %vm430, %v4544, 0
      %4645 = vmatpush.msra.mxu0 0.0
      %4646 = vmatpush.msra.mxu0 0.0
      %4647 = vmatpush.msra.mxu0 0.0
      %4648 = vmatpush.msra.mxu0 0.0
      %4649 = vmatpush.msra.mxu0 0.0
      %4650 = vmatpush.msra.mxu0 0.0
      %4651 = vmatpush.msra.mxu0 0.0
      %4652 = vmatpush.msra.mxu0 0.0
      %4653 = vmatpush.msra.mxu0 0.0
      %4654 = vmatpush.msra.mxu0 0.0
      %4655 = vmatpush.msra.mxu0 0.0
      %4656 = vmatpush.msra.mxu0 0.0
      %4657 = vmatpush.msra.mxu0 0.0
      %4658 = vmatpush.msra.mxu0 0.0
      %4659 = vmatpush.msra.mxu0 0.0
      %4660 = vmatpush.msra.mxu0 %v4546
      %4661 = vmatmul.f32.gmra.mxu0 %v4643
      %v4662 = vpop.f32.mrf.mxu0
      %v4663 = vadd.f32 0.0, %v4662
      %4664 = vdwg.mxu0
      %v4666 = vsel %vm430, %v4546, 0
      %4668 = vmatpush.msra.mxu0 0.0
      %4669 = vmatpush.msra.mxu0 0.0
      %4670 = vmatpush.msra.mxu0 0.0
      %4671 = vmatpush.msra.mxu0 0.0
      %4672 = vmatpush.msra.mxu0 0.0
      %4673 = vmatpush.msra.mxu0 0.0
      %4674 = vmatpush.msra.mxu0 0.0
      %4675 = vmatpush.msra.mxu0 0.0
      %4676 = vmatpush.msra.mxu0 0.0
      %4677 = vmatpush.msra.mxu0 0.0
      %4678 = vmatpush.msra.mxu0 0.0
      %4679 = vmatpush.msra.mxu0 0.0
      %4680 = vmatpush.msra.mxu0 0.0
      %4681 = vmatpush.msra.mxu0 0.0
      %4682 = vmatpush.msra.mxu0 0.0
      %4683 = vmatpush.msra.mxu0 %v4548
      %4684 = vmatmul.f32.gmra.mxu0 %v4666
      %v4685 = vpop.f32.mrf.mxu0
      %v4686 = vadd.f32 0.0, %v4685
      %4687 = vdwg.mxu0
      %v4689 = vsel %vm430, %v4548, 0
      %4691 = vmatpush.msra.mxu0 0.0
      %4692 = vmatpush.msra.mxu0 0.0
      %4693 = vmatpush.msra.mxu0 0.0
      %4694 = vmatpush.msra.mxu0 0.0
      %4695 = vmatpush.msra.mxu0 0.0
      %4696 = vmatpush.msra.mxu0 0.0
      %4697 = vmatpush.msra.mxu0 0.0
      %4698 = vmatpush.msra.mxu0 0.0
      %4699 = vmatpush.msra.mxu0 0.0
      %4700 = vmatpush.msra.mxu0 0.0
      %4701 = vmatpush.msra.mxu0 0.0
      %4702 = vmatpush.msra.mxu0 0.0
      %4703 = vmatpush.msra.mxu0 0.0
      %4704 = vmatpush.msra.mxu0 0.0
      %4705 = vmatpush.msra.mxu0 0.0
      %4706 = vmatpush.msra.mxu0 %v4550
      %4707 = vmatmul.f32.gmra.mxu0 %v4689
      %v4708 = vpop.f32.mrf.mxu0
      %v4709 = vadd.f32 0.0, %v4708
      %4710 = vdwg.mxu0
      %v4712 = vsel %vm430, %v4550, 0
      %4714 = vmatpush.msra.mxu0 0.0
      %4715 = vmatpush.msra.mxu0 0.0
      %4716 = vmatpush.msra.mxu0 0.0
      %4717 = vmatpush.msra.mxu0 0.0
      %4718 = vmatpush.msra.mxu0 0.0
      %4719 = vmatpush.msra.mxu0 0.0
      %4720 = vmatpush.msra.mxu0 0.0
      %4721 = vmatpush.msra.mxu0 0.0
      %4722 = vmatpush.msra.mxu0 0.0
      %4723 = vmatpush.msra.mxu0 0.0
      %4724 = vmatpush.msra.mxu0 0.0
      %4725 = vmatpush.msra.mxu0 0.0
      %4726 = vmatpush.msra.mxu0 0.0
      %4727 = vmatpush.msra.mxu0 0.0
      %4728 = vmatpush.msra.mxu0 0.0
      %4729 = vmatpush.msra.mxu0 %v4552
      %4730 = vmatmul.f32.gmra.mxu0 %v4712
      %v4731 = vpop.f32.mrf.mxu0
      %v4732 = vadd.f32 0.0, %v4731
      %4733 = vdwg.mxu0
      %v4735 = vsel %vm430, %v4552, 0
      %4737 = vmatpush.msra.mxu0 0.0
      %4738 = vmatpush.msra.mxu0 0.0
      %4739 = vmatpush.msra.mxu0 0.0
      %4740 = vmatpush.msra.mxu0 0.0
      %4741 = vmatpush.msra.mxu0 0.0
      %4742 = vmatpush.msra.mxu0 0.0
      %4743 = vmatpush.msra.mxu0 0.0
      %4744 = vmatpush.msra.mxu0 0.0
      %4745 = vmatpush.msra.mxu0 0.0
      %4746 = vmatpush.msra.mxu0 0.0
      %4747 = vmatpush.msra.mxu0 0.0
      %4748 = vmatpush.msra.mxu0 0.0
      %4749 = vmatpush.msra.mxu0 0.0
      %4750 = vmatpush.msra.mxu0 0.0
      %4751 = vmatpush.msra.mxu0 0.0
      %4752 = vmatpush.msra.mxu0 %v255
      %4753 = vmatmul.f32.gmra.mxu0 %v4735
      %v4754 = vpop.f32.mrf.mxu0
      %v4755 = vadd.f32 0.0, %v4754
      %4756 = vdwg.mxu0
      %4757 = vmatpush.msra.mxu0 0.0
      %4758 = vmatpush.msra.mxu0 0.0
      %4759 = vmatpush.msra.mxu0 0.0
      %4760 = vmatpush.msra.mxu0 0.0
      %4761 = vmatpush.msra.mxu0 0.0
      %4762 = vmatpush.msra.mxu0 0.0
      %4763 = vmatpush.msra.mxu0 0.0
      %4764 = vmatpush.msra.mxu0 0.0
      %4765 = vmatpush.msra.mxu0 0.0
      %4766 = vmatpush.msra.mxu0 0.0
      %4767 = vmatpush.msra.mxu0 0.0
      %4768 = vmatpush.msra.mxu0 0.0
      %4769 = vmatpush.msra.mxu0 0.0
      %4770 = vmatpush.msra.mxu0 0.0
      %4771 = vmatpush.msra.mxu0 0.0
      %4772 = vmatpush.msra.mxu0 %v4571
      %4773 = vmatmul.f32.gmra.mxu0 %v432
      %v4774 = vpop.f32.mrf.mxu0
      %v4775 = vadd.f32 0.0, %v4774
      %4776 = vdwg.mxu0
      %4777 = vmatpush.msra.mxu0 0.0
      %4778 = vmatpush.msra.mxu0 0.0
      %4779 = vmatpush.msra.mxu0 0.0
      %4780 = vmatpush.msra.mxu0 0.0
      %4781 = vmatpush.msra.mxu0 0.0
      %4782 = vmatpush.msra.mxu0 0.0
      %4783 = vmatpush.msra.mxu0 0.0
      %4784 = vmatpush.msra.mxu0 0.0
      %4785 = vmatpush.msra.mxu0 0.0
      %4786 = vmatpush.msra.mxu0 0.0
      %4787 = vmatpush.msra.mxu0 0.0
      %4788 = vmatpush.msra.mxu0 0.0
      %4789 = vmatpush.msra.mxu0 0.0
      %4790 = vmatpush.msra.mxu0 0.0
      %4791 = vmatpush.msra.mxu0 0.0
      %4792 = vmatpush.msra.mxu0 %v4594
      %4793 = vmatmul.f32.gmra.mxu0 %v699
      %v4794 = vpop.f32.mrf.mxu0
      %v4795 = vadd.f32 0.0, %v4794
      %4796 = vdwg.mxu0
      %v4798 = vsel %vm430, %v4571, 0
      %4800 = vmatpush.msra.mxu0 0.0
      %4801 = vmatpush.msra.mxu0 0.0
      %4802 = vmatpush.msra.mxu0 0.0
      %4803 = vmatpush.msra.mxu0 0.0
      %4804 = vmatpush.msra.mxu0 0.0
      %4805 = vmatpush.msra.mxu0 0.0
      %4806 = vmatpush.msra.mxu0 0.0
      %4807 = vmatpush.msra.mxu0 0.0
      %4808 = vmatpush.msra.mxu0 0.0
      %4809 = vmatpush.msra.mxu0 0.0
      %4810 = vmatpush.msra.mxu0 0.0
      %4811 = vmatpush.msra.mxu0 0.0
      %4812 = vmatpush.msra.mxu0 0.0
      %4813 = vmatpush.msra.mxu0 0.0
      %4814 = vmatpush.msra.mxu0 0.0
      %4815 = vmatpush.msra.mxu0 %v4617
      %4816 = vmatmul.f32.gmra.mxu0 %v4798
      %v4817 = vpop.f32.mrf.mxu0
      %v4818 = vadd.f32 0.0, %v4817
      %4819 = vdwg.mxu0
      %v4821 = vsel %vm430, %v4594, 0
      %4823 = vmatpush.msra.mxu0 0.0
      %4824 = vmatpush.msra.mxu0 0.0
      %4825 = vmatpush.msra.mxu0 0.0
      %4826 = vmatpush.msra.mxu0 0.0
      %4827 = vmatpush.msra.mxu0 0.0
      %4828 = vmatpush.msra.mxu0 0.0
      %4829 = vmatpush.msra.mxu0 0.0
      %4830 = vmatpush.msra.mxu0 0.0
      %4831 = vmatpush.msra.mxu0 0.0
      %4832 = vmatpush.msra.mxu0 0.0
      %4833 = vmatpush.msra.mxu0 0.0
      %4834 = vmatpush.msra.mxu0 0.0
      %4835 = vmatpush.msra.mxu0 0.0
      %4836 = vmatpush.msra.mxu0 0.0
      %4837 = vmatpush.msra.mxu0 0.0
      %4838 = vmatpush.msra.mxu0 %v4640
      %4839 = vmatmul.f32.gmra.mxu0 %v4821
      %v4840 = vpop.f32.mrf.mxu0
      %v4841 = vadd.f32 0.0, %v4840
      %4842 = vdwg.mxu0
      %v4844 = vsel %vm430, %v4617, 0
      %4846 = vmatpush.msra.mxu0 0.0
      %4847 = vmatpush.msra.mxu0 0.0
      %4848 = vmatpush.msra.mxu0 0.0
      %4849 = vmatpush.msra.mxu0 0.0
      %4850 = vmatpush.msra.mxu0 0.0
      %4851 = vmatpush.msra.mxu0 0.0
      %4852 = vmatpush.msra.mxu0 0.0
      %4853 = vmatpush.msra.mxu0 0.0
      %4854 = vmatpush.msra.mxu0 0.0
      %4855 = vmatpush.msra.mxu0 0.0
      %4856 = vmatpush.msra.mxu0 0.0
      %4857 = vmatpush.msra.mxu0 0.0
      %4858 = vmatpush.msra.mxu0 0.0
      %4859 = vmatpush.msra.mxu0 0.0
      %4860 = vmatpush.msra.mxu0 0.0
      %4861 = vmatpush.msra.mxu0 %v4663
      %4862 = vmatmul.f32.gmra.mxu0 %v4844
      %v4863 = vpop.f32.mrf.mxu0
      %v4864 = vadd.f32 0.0, %v4863
      %4865 = vdwg.mxu0
      %v4867 = vsel %vm430, %v4640, 0
      %4869 = vmatpush.msra.mxu0 0.0
      %4870 = vmatpush.msra.mxu0 0.0
      %4871 = vmatpush.msra.mxu0 0.0
      %4872 = vmatpush.msra.mxu0 0.0
      %4873 = vmatpush.msra.mxu0 0.0
      %4874 = vmatpush.msra.mxu0 0.0
      %4875 = vmatpush.msra.mxu0 0.0
      %4876 = vmatpush.msra.mxu0 0.0
      %4877 = vmatpush.msra.mxu0 0.0
      %4878 = vmatpush.msra.mxu0 0.0
      %4879 = vmatpush.msra.mxu0 0.0
      %4880 = vmatpush.msra.mxu0 0.0
      %4881 = vmatpush.msra.mxu0 0.0
      %4882 = vmatpush.msra.mxu0 0.0
      %4883 = vmatpush.msra.mxu0 0.0
      %4884 = vmatpush.msra.mxu0 %v4686
      %4885 = vmatmul.f32.gmra.mxu0 %v4867
      %v4886 = vpop.f32.mrf.mxu0
      %v4887 = vadd.f32 0.0, %v4886
      %4888 = vdwg.mxu0
      %v4890 = vsel %vm430, %v4663, 0
      %4892 = vmatpush.msra.mxu0 0.0
      %4893 = vmatpush.msra.mxu0 0.0
      %4894 = vmatpush.msra.mxu0 0.0
      %4895 = vmatpush.msra.mxu0 0.0
      %4896 = vmatpush.msra.mxu0 0.0
      %4897 = vmatpush.msra.mxu0 0.0
      %4898 = vmatpush.msra.mxu0 0.0
      %4899 = vmatpush.msra.mxu0 0.0
      %4900 = vmatpush.msra.mxu0 0.0
      %4901 = vmatpush.msra.mxu0 0.0
      %4902 = vmatpush.msra.mxu0 0.0
      %4903 = vmatpush.msra.mxu0 0.0
      %4904 = vmatpush.msra.mxu0 0.0
      %4905 = vmatpush.msra.mxu0 0.0
      %4906 = vmatpush.msra.mxu0 0.0
      %4907 = vmatpush.msra.mxu0 %v4709
      %4908 = vmatmul.f32.gmra.mxu0 %v4890
      %v4909 = vpop.f32.mrf.mxu0
      %v4910 = vadd.f32 0.0, %v4909
      %4911 = vdwg.mxu0
      %v4913 = vsel %vm430, %v4686, 0
      %4915 = vmatpush.msra.mxu0 0.0
      %4916 = vmatpush.msra.mxu0 0.0
      %4917 = vmatpush.msra.mxu0 0.0
      %4918 = vmatpush.msra.mxu0 0.0
      %4919 = vmatpush.msra.mxu0 0.0
      %4920 = vmatpush.msra.mxu0 0.0
      %4921 = vmatpush.msra.mxu0 0.0
      %4922 = vmatpush.msra.mxu0 0.0
      %4923 = vmatpush.msra.mxu0 0.0
      %4924 = vmatpush.msra.mxu0 0.0
      %4925 = vmatpush.msra.mxu0 0.0
      %4926 = vmatpush.msra.mxu0 0.0
      %4927 = vmatpush.msra.mxu0 0.0
      %4928 = vmatpush.msra.mxu0 0.0
      %4929 = vmatpush.msra.mxu0 0.0
      %4930 = vmatpush.msra.mxu0 %v4732
      %4931 = vmatmul.f32.gmra.mxu0 %v4913
      %v4932 = vpop.f32.mrf.mxu0
      %v4933 = vadd.f32 0.0, %v4932
      %4934 = vdwg.mxu0
      %v4936 = vsel %vm430, %v4709, 0
      %4938 = vmatpush.msra.mxu0 0.0
      %4939 = vmatpush.msra.mxu0 0.0
      %4940 = vmatpush.msra.mxu0 0.0
      %4941 = vmatpush.msra.mxu0 0.0
      %4942 = vmatpush.msra.mxu0 0.0
      %4943 = vmatpush.msra.mxu0 0.0
      %4944 = vmatpush.msra.mxu0 0.0
      %4945 = vmatpush.msra.mxu0 0.0
      %4946 = vmatpush.msra.mxu0 0.0
      %4947 = vmatpush.msra.mxu0 0.0
      %4948 = vmatpush.msra.mxu0 0.0
      %4949 = vmatpush.msra.mxu0 0.0
      %4950 = vmatpush.msra.mxu0 0.0
      %4951 = vmatpush.msra.mxu0 0.0
      %4952 = vmatpush.msra.mxu0 0.0
      %4953 = vmatpush.msra.mxu0 %v4755
      %4954 = vmatmul.f32.gmra.mxu0 %v4936
      %v4955 = vpop.f32.mrf.mxu0
      %v4956 = vadd.f32 0.0, %v4955
      %4957 = vdwg.mxu0
      %v4959 = vsel %vm430, %v4732, 0
      %4961 = vmatpush.msra.mxu0 0.0
      %4962 = vmatpush.msra.mxu0 0.0
      %4963 = vmatpush.msra.mxu0 0.0
      %4964 = vmatpush.msra.mxu0 0.0
      %4965 = vmatpush.msra.mxu0 0.0
      %4966 = vmatpush.msra.mxu0 0.0
      %4967 = vmatpush.msra.mxu0 0.0
      %4968 = vmatpush.msra.mxu0 0.0
      %4969 = vmatpush.msra.mxu0 0.0
      %4970 = vmatpush.msra.mxu0 0.0
      %4971 = vmatpush.msra.mxu0 0.0
      %4972 = vmatpush.msra.mxu0 0.0
      %4973 = vmatpush.msra.mxu0 0.0
      %4974 = vmatpush.msra.mxu0 0.0
      %4975 = vmatpush.msra.mxu0 0.0
      %4976 = vmatpush.msra.mxu0 %v452
      %4977 = vmatmul.f32.gmra.mxu0 %v4959
      %v4978 = vpop.f32.mrf.mxu0
      %v4979 = vadd.f32 0.0, %v4978
      %4980 = vdwg.mxu0
      %v4982 = vsel %vm430, %v4755, 0
      %4984 = vmatpush.msra.mxu0 0.0
      %4985 = vmatpush.msra.mxu0 0.0
      %4986 = vmatpush.msra.mxu0 0.0
      %4987 = vmatpush.msra.mxu0 0.0
      %4988 = vmatpush.msra.mxu0 0.0
      %4989 = vmatpush.msra.mxu0 0.0
      %4990 = vmatpush.msra.mxu0 0.0
      %4991 = vmatpush.msra.mxu0 0.0
      %4992 = vmatpush.msra.mxu0 0.0
      %4993 = vmatpush.msra.mxu0 0.0
      %4994 = vmatpush.msra.mxu0 0.0
      %4995 = vmatpush.msra.mxu0 0.0
      %4996 = vmatpush.msra.mxu0 0.0
      %4997 = vmatpush.msra.mxu0 0.0
      %4998 = vmatpush.msra.mxu0 0.0
      %4999 = vmatpush.msra.mxu0 %v255
      %5000 = vmatmul.f32.gmra.mxu0 %v4982
      %v5001 = vpop.f32.mrf.mxu0
      %v5002 = vadd.f32 0.0, %v5001
      %5003 = vdwg.mxu0
      %5004 = vmatpush.msra.mxu0 0.0
      %5005 = vmatpush.msra.mxu0 0.0
      %5006 = vmatpush.msra.mxu0 0.0
      %5007 = vmatpush.msra.mxu0 0.0
      %5008 = vmatpush.msra.mxu0 0.0
      %5009 = vmatpush.msra.mxu0 0.0
      %5010 = vmatpush.msra.mxu0 0.0
      %5011 = vmatpush.msra.mxu0 0.0
      %5012 = vmatpush.msra.mxu0 0.0
      %5013 = vmatpush.msra.mxu0 0.0
      %5014 = vmatpush.msra.mxu0 0.0
      %5015 = vmatpush.msra.mxu0 0.0
      %5016 = vmatpush.msra.mxu0 0.0
      %5017 = vmatpush.msra.mxu0 0.0
      %5018 = vmatpush.msra.mxu0 0.0
      %5019 = vmatpush.msra.mxu0 %v4775
      %5020 = vmatmul.f32.gmra.mxu0 %v432
      %v5021 = vpop.f32.mrf.mxu0
      %v5022 = vadd.f32 0.0, %v5021
      %5023 = vdwg.mxu0
      %5024 = vmatpush.msra.mxu0 0.0
      %5025 = vmatpush.msra.mxu0 0.0
      %5026 = vmatpush.msra.mxu0 0.0
      %5027 = vmatpush.msra.mxu0 0.0
      %5028 = vmatpush.msra.mxu0 0.0
      %5029 = vmatpush.msra.mxu0 0.0
      %5030 = vmatpush.msra.mxu0 0.0
      %5031 = vmatpush.msra.mxu0 0.0
      %5032 = vmatpush.msra.mxu0 0.0
      %5033 = vmatpush.msra.mxu0 0.0
      %5034 = vmatpush.msra.mxu0 0.0
      %5035 = vmatpush.msra.mxu0 0.0
      %5036 = vmatpush.msra.mxu0 0.0
      %5037 = vmatpush.msra.mxu0 0.0
      %5038 = vmatpush.msra.mxu0 0.0
      %5039 = vmatpush.msra.mxu0 %v4795
      %5040 = vmatmul.f32.gmra.mxu0 %v432
      %v5041 = vpop.f32.mrf.mxu0
      %v5042 = vadd.f32 0.0, %v5041
      %5043 = vdwg.mxu0
      %5044 = vmatpush.msra.mxu0 0.0
      %5045 = vmatpush.msra.mxu0 0.0
      %5046 = vmatpush.msra.mxu0 0.0
      %5047 = vmatpush.msra.mxu0 0.0
      %5048 = vmatpush.msra.mxu0 0.0
      %5049 = vmatpush.msra.mxu0 0.0
      %5050 = vmatpush.msra.mxu0 0.0
      %5051 = vmatpush.msra.mxu0 0.0
      %5052 = vmatpush.msra.mxu0 0.0
      %5053 = vmatpush.msra.mxu0 0.0
      %5054 = vmatpush.msra.mxu0 0.0
      %5055 = vmatpush.msra.mxu0 0.0
      %5056 = vmatpush.msra.mxu0 0.0
      %5057 = vmatpush.msra.mxu0 0.0
      %5058 = vmatpush.msra.mxu0 0.0
      %5059 = vmatpush.msra.mxu0 %v4818
      %5060 = vmatmul.f32.gmra.mxu0 %v432
      %v5061 = vpop.f32.mrf.mxu0
      %v5062 = vadd.f32 0.0, %v5061
      %5063 = vdwg.mxu0
      %5064 = vmatpush.msra.mxu0 0.0
      %5065 = vmatpush.msra.mxu0 0.0
      %5066 = vmatpush.msra.mxu0 0.0
      %5067 = vmatpush.msra.mxu0 0.0
      %5068 = vmatpush.msra.mxu0 0.0
      %5069 = vmatpush.msra.mxu0 0.0
      %5070 = vmatpush.msra.mxu0 0.0
      %5071 = vmatpush.msra.mxu0 0.0
      %5072 = vmatpush.msra.mxu0 0.0
      %5073 = vmatpush.msra.mxu0 0.0
      %5074 = vmatpush.msra.mxu0 0.0
      %5075 = vmatpush.msra.mxu0 0.0
      %5076 = vmatpush.msra.mxu0 0.0
      %5077 = vmatpush.msra.mxu0 0.0
      %5078 = vmatpush.msra.mxu0 0.0
      %5079 = vmatpush.msra.mxu0 %v4841
      %5080 = vmatmul.f32.gmra.mxu0 %v1029
      %v5081 = vpop.f32.mrf.mxu0
      %v5082 = vadd.f32 0.0, %v5081
      %5083 = vdwg.mxu0
      %v5085 = vsel %vm430, %v4775, 0
      %5087 = vmatpush.msra.mxu0 0.0
      %5088 = vmatpush.msra.mxu0 0.0
      %5089 = vmatpush.msra.mxu0 0.0
      %5090 = vmatpush.msra.mxu0 0.0
      %5091 = vmatpush.msra.mxu0 0.0
      %5092 = vmatpush.msra.mxu0 0.0
      %5093 = vmatpush.msra.mxu0 0.0
      %5094 = vmatpush.msra.mxu0 0.0
      %5095 = vmatpush.msra.mxu0 0.0
      %5096 = vmatpush.msra.mxu0 0.0
      %5097 = vmatpush.msra.mxu0 0.0
      %5098 = vmatpush.msra.mxu0 0.0
      %5099 = vmatpush.msra.mxu0 0.0
      %5100 = vmatpush.msra.mxu0 0.0
      %5101 = vmatpush.msra.mxu0 0.0
      %5102 = vmatpush.msra.mxu0 %v4864
      %5103 = vmatmul.f32.gmra.mxu0 %v5085
      %v5104 = vpop.f32.mrf.mxu0
      %v5105 = vadd.f32 0.0, %v5104
      %5106 = vdwg.mxu0
      %v5108 = vsel %vm430, %v4795, 0
      %5110 = vmatpush.msra.mxu0 0.0
      %5111 = vmatpush.msra.mxu0 0.0
      %5112 = vmatpush.msra.mxu0 0.0
      %5113 = vmatpush.msra.mxu0 0.0
      %5114 = vmatpush.msra.mxu0 0.0
      %5115 = vmatpush.msra.mxu0 0.0
      %5116 = vmatpush.msra.mxu0 0.0
      %5117 = vmatpush.msra.mxu0 0.0
      %5118 = vmatpush.msra.mxu0 0.0
      %5119 = vmatpush.msra.mxu0 0.0
      %5120 = vmatpush.msra.mxu0 0.0
      %5121 = vmatpush.msra.mxu0 0.0
      %5122 = vmatpush.msra.mxu0 0.0
      %5123 = vmatpush.msra.mxu0 0.0
      %5124 = vmatpush.msra.mxu0 0.0
      %5125 = vmatpush.msra.mxu0 %v4887
      %5126 = vmatmul.f32.gmra.mxu0 %v5108
      %v5127 = vpop.f32.mrf.mxu0
      %v5128 = vadd.f32 0.0, %v5127
      %5129 = vdwg.mxu0
      %v5131 = vsel %vm430, %v4818, 0
      %5133 = vmatpush.msra.mxu0 0.0
      %5134 = vmatpush.msra.mxu0 0.0
      %5135 = vmatpush.msra.mxu0 0.0
      %5136 = vmatpush.msra.mxu0 0.0
      %5137 = vmatpush.msra.mxu0 0.0
      %5138 = vmatpush.msra.mxu0 0.0
      %5139 = vmatpush.msra.mxu0 0.0
      %5140 = vmatpush.msra.mxu0 0.0
      %5141 = vmatpush.msra.mxu0 0.0
      %5142 = vmatpush.msra.mxu0 0.0
      %5143 = vmatpush.msra.mxu0 0.0
      %5144 = vmatpush.msra.mxu0 0.0
      %5145 = vmatpush.msra.mxu0 0.0
      %5146 = vmatpush.msra.mxu0 0.0
      %5147 = vmatpush.msra.mxu0 0.0
      %5148 = vmatpush.msra.mxu0 %v4910
      %5149 = vmatmul.f32.gmra.mxu0 %v5131
      %v5150 = vpop.f32.mrf.mxu0
      %v5151 = vadd.f32 0.0, %v5150
      %5152 = vdwg.mxu0
      %v5154 = vsel %vm430, %v4864, 0
      %5156 = vmatpush.msra.mxu0 0.0
      %5157 = vmatpush.msra.mxu0 0.0
      %5158 = vmatpush.msra.mxu0 0.0
      %5159 = vmatpush.msra.mxu0 0.0
      %5160 = vmatpush.msra.mxu0 0.0
      %5161 = vmatpush.msra.mxu0 0.0
      %5162 = vmatpush.msra.mxu0 0.0
      %5163 = vmatpush.msra.mxu0 0.0
      %5164 = vmatpush.msra.mxu0 0.0
      %5165 = vmatpush.msra.mxu0 0.0
      %5166 = vmatpush.msra.mxu0 0.0
      %5167 = vmatpush.msra.mxu0 0.0
      %5168 = vmatpush.msra.mxu0 0.0
      %5169 = vmatpush.msra.mxu0 0.0
      %5170 = vmatpush.msra.mxu0 0.0
      %5171 = vmatpush.msra.mxu0 %v4956
      %5172 = vmatmul.f32.gmra.mxu0 %v5154
      %v5173 = vpop.f32.mrf.mxu0
      %v5174 = vadd.f32 0.0, %v5173
      %5175 = vdwg.mxu0
      %v5177 = vsel %vm430, %v4887, 0
      %5179 = vmatpush.msra.mxu0 0.0
      %5180 = vmatpush.msra.mxu0 0.0
      %5181 = vmatpush.msra.mxu0 0.0
      %5182 = vmatpush.msra.mxu0 0.0
      %5183 = vmatpush.msra.mxu0 0.0
      %5184 = vmatpush.msra.mxu0 0.0
      %5185 = vmatpush.msra.mxu0 0.0
      %5186 = vmatpush.msra.mxu0 0.0
      %5187 = vmatpush.msra.mxu0 0.0
      %5188 = vmatpush.msra.mxu0 0.0
      %5189 = vmatpush.msra.mxu0 0.0
      %5190 = vmatpush.msra.mxu0 0.0
      %5191 = vmatpush.msra.mxu0 0.0
      %5192 = vmatpush.msra.mxu0 0.0
      %5193 = vmatpush.msra.mxu0 0.0
      %5194 = vmatpush.msra.mxu0 %v4979
      %5195 = vmatmul.f32.gmra.mxu0 %v5177
      %v5196 = vpop.f32.mrf.mxu0
      %v5197 = vadd.f32 0.0, %v5196
      %5198 = vdwg.mxu0
      %v5200 = vsel %vm430, %v4910, 0
      %5202 = vmatpush.msra.mxu0 0.0
      %5203 = vmatpush.msra.mxu0 0.0
      %5204 = vmatpush.msra.mxu0 0.0
      %5205 = vmatpush.msra.mxu0 0.0
      %5206 = vmatpush.msra.mxu0 0.0
      %5207 = vmatpush.msra.mxu0 0.0
      %5208 = vmatpush.msra.mxu0 0.0
      %5209 = vmatpush.msra.mxu0 0.0
      %5210 = vmatpush.msra.mxu0 0.0
      %5211 = vmatpush.msra.mxu0 0.0
      %5212 = vmatpush.msra.mxu0 0.0
      %5213 = vmatpush.msra.mxu0 0.0
      %5214 = vmatpush.msra.mxu0 0.0
      %5215 = vmatpush.msra.mxu0 0.0
      %5216 = vmatpush.msra.mxu0 0.0
      %5217 = vmatpush.msra.mxu0 %v5002
      %5218 = vmatmul.f32.gmra.mxu0 %v5200
      %v5219 = vpop.f32.mrf.mxu0
      %v5220 = vadd.f32 0.0, %v5219
      %5221 = vdwg.mxu0
      %v5223 = vsel %vm430, %v4933, 0
      %5225 = vmatpush.msra.mxu0 0.0
      %5226 = vmatpush.msra.mxu0 0.0
      %5227 = vmatpush.msra.mxu0 0.0
      %5228 = vmatpush.msra.mxu0 0.0
      %5229 = vmatpush.msra.mxu0 0.0
      %5230 = vmatpush.msra.mxu0 0.0
      %5231 = vmatpush.msra.mxu0 0.0
      %5232 = vmatpush.msra.mxu0 0.0
      %5233 = vmatpush.msra.mxu0 0.0
      %5234 = vmatpush.msra.mxu0 0.0
      %5235 = vmatpush.msra.mxu0 0.0
      %5236 = vmatpush.msra.mxu0 0.0
      %5237 = vmatpush.msra.mxu0 0.0
      %5238 = vmatpush.msra.mxu0 0.0
      %5239 = vmatpush.msra.mxu0 0.0
      %5240 = vmatpush.msra.mxu0 %v946
      %5241 = vmatmul.f32.gmra.mxu0 %v5223
      %v5242 = vpop.f32.mrf.mxu0
      %v5243 = vadd.f32 0.0, %v5242
      %5244 = vdwg.mxu0
      %v5246 = vsel %vm430, %v4956, 0
      %5248 = vmatpush.msra.mxu0 0.0
      %5249 = vmatpush.msra.mxu0 0.0
      %5250 = vmatpush.msra.mxu0 0.0
      %5251 = vmatpush.msra.mxu0 0.0
      %5252 = vmatpush.msra.mxu0 0.0
      %5253 = vmatpush.msra.mxu0 0.0
      %5254 = vmatpush.msra.mxu0 0.0
      %5255 = vmatpush.msra.mxu0 0.0
      %5256 = vmatpush.msra.mxu0 0.0
      %5257 = vmatpush.msra.mxu0 0.0
      %5258 = vmatpush.msra.mxu0 0.0
      %5259 = vmatpush.msra.mxu0 0.0
      %5260 = vmatpush.msra.mxu0 0.0
      %5261 = vmatpush.msra.mxu0 0.0
      %5262 = vmatpush.msra.mxu0 0.0
      %5263 = vmatpush.msra.mxu0 %v255
      %5264 = vmatmul.f32.gmra.mxu0 %v5246
      %v5265 = vpop.f32.mrf.mxu0
      %v5266 = vadd.f32 0.0, %v5265
      %5267 = vdwg.mxu0
      %v5269 = vsel %vm430, %v4979, 0
      %5271 = vmatpush.msra.mxu0 0.0
      %5272 = vmatpush.msra.mxu0 0.0
      %5273 = vmatpush.msra.mxu0 0.0
      %5274 = vmatpush.msra.mxu0 0.0
      %5275 = vmatpush.msra.mxu0 0.0
      %5276 = vmatpush.msra.mxu0 0.0
      %5277 = vmatpush.msra.mxu0 0.0
      %5278 = vmatpush.msra.mxu0 0.0
      %5279 = vmatpush.msra.mxu0 0.0
      %5280 = vmatpush.msra.mxu0 0.0
      %5281 = vmatpush.msra.mxu0 0.0
      %5282 = vmatpush.msra.mxu0 0.0
      %5283 = vmatpush.msra.mxu0 0.0
      %5284 = vmatpush.msra.mxu0 0.0
      %5285 = vmatpush.msra.mxu0 0.0
      %5286 = vmatpush.msra.mxu0 %v255
      %5287 = vmatmul.f32.gmra.mxu0 %v5269
      %v5288 = vpop.f32.mrf.mxu0
      %v5289 = vadd.f32 0.0, %v5288
      %5290 = vdwg.mxu0
      %v5292 = vsel %vm430, %v5002, 0
      %5294 = vmatpush.msra.mxu0 0.0
      %5295 = vmatpush.msra.mxu0 0.0
      %5296 = vmatpush.msra.mxu0 0.0
      %5297 = vmatpush.msra.mxu0 0.0
      %5298 = vmatpush.msra.mxu0 0.0
      %5299 = vmatpush.msra.mxu0 0.0
      %5300 = vmatpush.msra.mxu0 0.0
      %5301 = vmatpush.msra.mxu0 0.0
      %5302 = vmatpush.msra.mxu0 0.0
      %5303 = vmatpush.msra.mxu0 0.0
      %5304 = vmatpush.msra.mxu0 0.0
      %5305 = vmatpush.msra.mxu0 0.0
      %5306 = vmatpush.msra.mxu0 0.0
      %5307 = vmatpush.msra.mxu0 0.0
      %5308 = vmatpush.msra.mxu0 0.0
      %5309 = vmatpush.msra.mxu0 %v255
      %5310 = vmatmul.f32.gmra.mxu0 %v5292
      %v5311 = vpop.f32.mrf.mxu0
      %v5312 = vadd.f32 0.0, %v5311
      %5313 = vdwg.mxu0
      %v5314 = vmul.f32 %v3979, %v5022
      %v5315 = vmul.f32 %v3979, %v5042
      %v5316 = vmul.f32 %v3979, %v5062
      %v5317 = vmul.f32 %v3979, %v5082
      %v5318 = vmul.f32 %v3979, %v5105
      %v5319 = vmul.f32 %v3979, %v5128
      %v5320 = vmul.f32 %v3979, %v5151
      %v5321 = vsel %vm430, %v5314, 0.0
      %v5322 = vrot.slane %v5321, 4
      %v5323 = vadd.f32 %v5321, %v5322
      %v5324 = vrot.slane %v5323, 2
      %v5325 = vadd.f32 %v5323, %v5324
      %v5326 = vrot.slane %v5325, 1
      %v5327 = vadd.f32 %v5325, %v5326
      %v5328 = vsel %vm430, %v5315, 0.0
      %v5329 = vrot.slane %v5328, 4
      %v5330 = vadd.f32 %v5328, %v5329
      %v5331 = vrot.slane %v5330, 2
      %v5332 = vadd.f32 %v5330, %v5331
      %v5333 = vrot.slane %v5332, 1
      %v5334 = vadd.f32 %v5332, %v5333
      %v5335 = vsel %vm430, %v5316, 0.0
      %v5336 = vrot.slane %v5335, 4
      %v5337 = vadd.f32 %v5335, %v5336
      %v5338 = vrot.slane %v5337, 2
      %v5339 = vadd.f32 %v5337, %v5338
      %v5340 = vrot.slane %v5339, 1
      %v5341 = vadd.f32 %v5339, %v5340
      %v5342 = vsel %vm430, %v5317, 0.0
      %v5343 = vrot.slane %v5342, 4
      %v5344 = vadd.f32 %v5342, %v5343
      %v5345 = vrot.slane %v5344, 2
      %v5346 = vadd.f32 %v5344, %v5345
      %v5347 = vrot.slane %v5346, 1
      %v5348 = vadd.f32 %v5346, %v5347
      %v5349 = vsel %vm430, %v5318, 0.0
      %v5350 = vrot.slane %v5349, 4
      %v5351 = vadd.f32 %v5349, %v5350
      %v5352 = vrot.slane %v5351, 2
      %v5353 = vadd.f32 %v5351, %v5352
      %v5354 = vrot.slane %v5353, 1
      %v5355 = vadd.f32 %v5353, %v5354
      %v5356 = vsel %vm430, %v5319, 0.0
      %v5357 = vrot.slane %v5356, 4
      %v5358 = vadd.f32 %v5356, %v5357
      %v5359 = vrot.slane %v5358, 2
      %v5360 = vadd.f32 %v5358, %v5359
      %v5361 = vrot.slane %v5360, 1
      %v5362 = vadd.f32 %v5360, %v5361
      %v5363 = vsel %vm430, %v5320, 0.0
      %v5364 = vrot.slane %v5363, 4
      %v5365 = vadd.f32 %v5363, %v5364
      %v5366 = vrot.slane %v5365, 2
      %v5367 = vadd.f32 %v5365, %v5366
      %v5368 = vrot.slane %v5367, 1
      %v5369 = vadd.f32 %v5367, %v5368
      %v5370 = vmul.f32 %v5174, %v4046
      %v5371 = vmul.f32 %v5197, %v4046
      %v5372 = vmul.f32 %v5220, %v4046
      %v5373 = vmul.f32 %v5243, %v4046
      %v5374 = vmul.f32 %v5266, %v4046
      %v5375 = vmul.f32 %v5289, %v4046
      %v5376 = vmul.f32 %v5312, %v4046
      %v5377 = vsel %vm430, %v5370, 0.0
      %5378 = vadd.xlane.f32.xlu0 %v5377
      %v5379 = vpop.xlane.xlu0 %5378
      %v5380 = vsel %vm430, %v5371, 0.0
      %5381 = vadd.xlane.f32.xlu0 %v5380
      %v5382 = vpop.xlane.xlu0 %5381
      %v5383 = vsel %vm430, %v5372, 0.0
      %5384 = vadd.xlane.f32.xlu0 %v5383
      %v5385 = vpop.xlane.xlu0 %5384
      %v5386 = vsel %vm430, %v5373, 0.0
      %5387 = vadd.xlane.f32.xlu0 %v5386
      %v5388 = vpop.xlane.xlu0 %5387
      %v5389 = vsel %vm430, %v5374, 0.0
      %5390 = vadd.xlane.f32.xlu0 %v5389
      %v5391 = vpop.xlane.xlu0 %5390
      %v5392 = vsel %vm430, %v5375, 0.0
      %5393 = vadd.xlane.f32.xlu0 %v5392
      %v5394 = vpop.xlane.xlu0 %5393
      %v5395 = vsel %vm430, %v5376, 0.0
      %5396 = vadd.xlane.f32.xlu0 %v5395
      %v5397 = vpop.xlane.xlu0 %5396
      %v5398 = vlaneseq
      %v5399 = vshrl.u32 %v5398, 7
      %5401 = vset.pattern.permute.xlu0 %v5399
      %5402 = vperm.xlu0 %5401, %v5327
      %v5403 = vpop.permute.xlu0 %5402
      %v5404 = vlaneseq
      %v5405 = vshrl.u32 %v5404, 7
      %5407 = vset.pattern.permute.xlu0 %v5405
      %5408 = vperm.xlu0 %5407, %v5334
      %v5409 = vpop.permute.xlu0 %5408
      %v5410 = vlaneseq
      %v5411 = vshrl.u32 %v5410, 7
      %5413 = vset.pattern.permute.xlu0 %v5411
      %5414 = vperm.xlu0 %5413, %v5341
      %v5415 = vpop.permute.xlu0 %5414
      %v5416 = vlaneseq
      %v5417 = vshrl.u32 %v5416, 7
      %5419 = vset.pattern.permute.xlu0 %v5417
      %5420 = vperm.xlu0 %5419, %v5348
      %v5421 = vpop.permute.xlu0 %5420
      %v5422 = vlaneseq
      %v5423 = vshrl.u32 %v5422, 7
      %5425 = vset.pattern.permute.xlu0 %v5423
      %5426 = vperm.xlu0 %5425, %v5355
      %v5427 = vpop.permute.xlu0 %5426
      %v5428 = vlaneseq
      %v5429 = vshrl.u32 %v5428, 7
      %5431 = vset.pattern.permute.xlu0 %v5429
      %5432 = vperm.xlu0 %5431, %v5362
      %v5433 = vpop.permute.xlu0 %5432
      %v5434 = vlaneseq
      %v5435 = vshrl.u32 %v5434, 7
      %5437 = vset.pattern.permute.xlu0 %v5435
      %5438 = vperm.xlu0 %5437, %v5369
      %v5439 = vpop.permute.xlu0 %5438
      %v5447 = vperm.slane %v5379, %v252
      %v5448 = vperm.slane %v5382, %v252
      %v5449 = vperm.slane %v5385, %v252
      %v5450 = vperm.slane %v5388, %v252
      %v5451 = vperm.slane %v5391, %v252
      %v5452 = vperm.slane %v5394, %v252
      %v5453 = vperm.slane %v5397, %v252
      %v5454 = vsel %vm1472, %v5447, %v5447
      %v5455 = vsel %vm1474, %v5447, %v5454
      %v5456 = vsel %vm1476, %v5447, %v5455
      %v5457 = vsel %vm1478, %v5447, %v5456
      %v5458 = vsel %vm1480, %v5447, %v5457
      %v5459 = vsel %vm1482, %v5447, %v5458
      %v5460 = vsel %vm1472, %v5448, %v5448
      %v5461 = vsel %vm1474, %v5448, %v5460
      %v5462 = vsel %vm1476, %v5448, %v5461
      %v5463 = vsel %vm1478, %v5448, %v5462
      %v5464 = vsel %vm1480, %v5448, %v5463
      %v5465 = vsel %vm1482, %v5448, %v5464
      %v5466 = vsel %vm1472, %v5449, %v5449
      %v5467 = vsel %vm1474, %v5449, %v5466
      %v5468 = vsel %vm1476, %v5449, %v5467
      %v5469 = vsel %vm1478, %v5449, %v5468
      %v5470 = vsel %vm1480, %v5449, %v5469
      %v5471 = vsel %vm1482, %v5449, %v5470
      %v5472 = vsel %vm1472, %v5450, %v5450
      %v5473 = vsel %vm1474, %v5450, %v5472
      %v5474 = vsel %vm1476, %v5450, %v5473
      %v5475 = vsel %vm1478, %v5450, %v5474
      %v5476 = vsel %vm1480, %v5450, %v5475
      %v5477 = vsel %vm1482, %v5450, %v5476
      %v5478 = vsel %vm1472, %v5451, %v5451
      %v5479 = vsel %vm1474, %v5451, %v5478
      %v5480 = vsel %vm1476, %v5451, %v5479
      %v5481 = vsel %vm1478, %v5451, %v5480
      %v5482 = vsel %vm1480, %v5451, %v5481
      %v5483 = vsel %vm1482, %v5451, %v5482
      %v5484 = vsel %vm1472, %v5452, %v5452
      %v5485 = vsel %vm1474, %v5452, %v5484
      %v5486 = vsel %vm1476, %v5452, %v5485
      %v5487 = vsel %vm1478, %v5452, %v5486
      %v5488 = vsel %vm1480, %v5452, %v5487
      %v5489 = vsel %vm1482, %v5452, %v5488
      %v5490 = vsel %vm1472, %v5453, %v5453
      %v5491 = vsel %vm1474, %v5453, %v5490
      %v5492 = vsel %vm1476, %v5453, %v5491
      %v5493 = vsel %vm1478, %v5453, %v5492
      %v5494 = vsel %vm1480, %v5453, %v5493
      %v5495 = vsel %vm1482, %v5453, %v5494
      %v5503 = vmul.f32 %v4085, %v5459
      %v5504 = vmul.f32 %v5403, %v5465
      %v5505 = vmul.f32 %v5409, %v5471
      %v5506 = vmul.f32 %v5415, %v5477
      %v5507 = vmul.f32 %v5421, %v5483
      %v5508 = vmul.f32 %v5427, %v5489
      %v5509 = vmul.f32 %v5433, %v5495
      %v5510 = vmul.f32 %v5439, %v4191
      %v5511 = vrot.slane %v5505, 4
      %v5512 = vsel %vm318, %v5511, %v5503
      %v5513 = vrot.slane %v5503, 4
      %v5514 = vsel %vm318, %v5505, %v5513
      %v5516 = vunpack.c.l.s4 1983009808
      %v5517 = vunpack.c.0.s8 %v5516
      %v5518 = vperm.slane %v5512, %v5517
      %v5520 = vunpack.c.l.s4 1983009808
      %v5521 = vunpack.c.0.s8 %v5520
      %v5522 = vperm.slane %v5514, %v5521
      %v5523 = vrot.slane %v5506, 4
      %v5524 = vsel %vm318, %v5523, %v5504
      %v5525 = vrot.slane %v5504, 4
      %v5526 = vsel %vm318, %v5506, %v5525
      %v5528 = vunpack.c.l.s4 1983009808
      %v5529 = vunpack.c.0.s8 %v5528
      %v5530 = vperm.slane %v5524, %v5529
      %v5532 = vunpack.c.l.s4 1983009808
      %v5533 = vunpack.c.0.s8 %v5532
      %v5534 = vperm.slane %v5526, %v5533
      %v5535 = vrot.slane %v5509, 4
      %v5536 = vsel %vm318, %v5535, %v5507
      %v5537 = vrot.slane %v5507, 4
      %v5538 = vsel %vm318, %v5509, %v5537
      %v5540 = vunpack.c.l.s4 1983009808
      %v5541 = vunpack.c.0.s8 %v5540
      %v5542 = vperm.slane %v5536, %v5541
      %v5544 = vunpack.c.l.s4 1983009808
      %v5545 = vunpack.c.0.s8 %v5544
      %v5546 = vperm.slane %v5538, %v5545
      %v5547 = vrot.slane %v5510, 4
      %v5548 = vsel %vm318, %v5547, %v5508
      %v5549 = vrot.slane %v5508, 4
      %v5550 = vsel %vm318, %v5510, %v5549
      %v5552 = vunpack.c.l.s4 1983009808
      %v5553 = vunpack.c.0.s8 %v5552
      %v5554 = vperm.slane %v5548, %v5553
      %v5556 = vunpack.c.l.s4 1983009808
      %v5557 = vunpack.c.0.s8 %v5556
      %v5558 = vperm.slane %v5550, %v5557
      %v5559 = vrot.slane %v5530, 4
      %v5560 = vsel %vm318, %v5559, %v5518
      %v5561 = vrot.slane %v5518, 4
      %v5562 = vsel %vm318, %v5530, %v5561
      %v5564 = vunpack.c.l.s4 1934713408
      %v5565 = vunpack.c.0.s8 %v5564
      %v5566 = vperm.slane %v5560, %v5565
      %v5568 = vunpack.c.l.s4 1934713408
      %v5569 = vunpack.c.0.s8 %v5568
      %v5570 = vperm.slane %v5562, %v5569
      %v5571 = vrot.slane %v5534, 4
      %v5572 = vsel %vm318, %v5571, %v5522
      %v5573 = vrot.slane %v5522, 4
      %v5574 = vsel %vm318, %v5534, %v5573
      %v5576 = vunpack.c.l.s4 1934713408
      %v5577 = vunpack.c.0.s8 %v5576
      %v5578 = vperm.slane %v5572, %v5577
      %v5580 = vunpack.c.l.s4 1934713408
      %v5581 = vunpack.c.0.s8 %v5580
      %v5582 = vperm.slane %v5574, %v5581
      %v5583 = vrot.slane %v5554, 4
      %v5584 = vsel %vm318, %v5583, %v5542
      %v5585 = vrot.slane %v5542, 4
      %v5586 = vsel %vm318, %v5554, %v5585
      %v5588 = vunpack.c.l.s4 1934713408
      %v5589 = vunpack.c.0.s8 %v5588
      %v5590 = vperm.slane %v5584, %v5589
      %v5592 = vunpack.c.l.s4 1934713408
      %v5593 = vunpack.c.0.s8 %v5592
      %v5594 = vperm.slane %v5586, %v5593
      %v5595 = vrot.slane %v5558, 4
      %v5596 = vsel %vm318, %v5595, %v5546
      %v5597 = vrot.slane %v5546, 4
      %v5598 = vsel %vm318, %v5558, %v5597
      %v5600 = vunpack.c.l.s4 1934713408
      %v5601 = vunpack.c.0.s8 %v5600
      %v5602 = vperm.slane %v5596, %v5601
      %v5604 = vunpack.c.l.s4 1934713408
      %v5605 = vunpack.c.0.s8 %v5604
      %v5606 = vperm.slane %v5598, %v5605
      %v5607 = vrot.slane %v5590, 4
      %v5608 = vsel %vm318, %v5607, %v5566
      %v5609 = vrot.slane %v5566, 4
      %v5610 = vsel %vm318, %v5590, %v5609
      %v5611 = vrot.slane %v5594, 4
      %v5612 = vsel %vm318, %v5611, %v5570
      %v5613 = vrot.slane %v5570, 4
      %v5614 = vsel %vm318, %v5594, %v5613
      %v5615 = vrot.slane %v5602, 4
      %v5616 = vsel %vm318, %v5615, %v5578
      %v5617 = vrot.slane %v5578, 4
      %v5618 = vsel %vm318, %v5602, %v5617
      %v5619 = vrot.slane %v5606, 4
      %v5620 = vsel %vm318, %v5619, %v5582
      %v5621 = vrot.slane %v5582, 4
      %v5622 = vsel %vm318, %v5606, %v5621
      %5624 = vrot.lane.b32.xlu0 %v5610, 8
      %v5625 = vpop.permute.xlu0 %5624
      %5628 = vrot.lane.b32.xlu0 %v5612, 16
      %v5629 = vpop.permute.xlu0 %5628
      %5632 = vrot.lane.b32.xlu0 %v5614, 24
      %v5633 = vpop.permute.xlu0 %5632
      %5636 = vrot.lane.b32.xlu0 %v5616, 32
      %v5637 = vpop.permute.xlu0 %5636
      %5640 = vrot.lane.b32.xlu0 %v5618, 40
      %v5641 = vpop.permute.xlu0 %5640
      %5644 = vrot.lane.b32.xlu0 %v5620, 48
      %v5645 = vpop.permute.xlu0 %5644
      %5648 = vrot.lane.b32.xlu0 %v5622, 56
      %v5649 = vpop.permute.xlu0 %5648
      %v5651 = vsel %vm430, %v5608, %v5625
      %v5652 = vsel %vm1683, %v5651, %v5629
      %v5653 = vsel %vm1685, %v5652, %v5633
      %v5654 = vsel %vm1687, %v5653, %v5637
      %v5655 = vsel %vm1689, %v5654, %v5641
      %v5656 = vsel %vm1691, %v5655, %v5645
      %v5657 = vsel %vm1693, %v5656, %v5649
      %v5659 = vsel %vm1695, %v5657, 0
      %5661 = vmatpush.msra.mxu0 0.0
      %5662 = vmatpush.msra.mxu0 0.0
      %5663 = vmatpush.msra.mxu0 0.0
      %5664 = vmatpush.msra.mxu0 0.0
      %5665 = vmatpush.msra.mxu0 0.0
      %5666 = vmatpush.msra.mxu0 0.0
      %5667 = vmatpush.msra.mxu0 0.0
      %5668 = vmatpush.msra.mxu0 0.0
      %5669 = vmatpush.msra.mxu0 %v3050
      %5670 = vmatpush.msra.mxu0 %v3049
      %5671 = vmatpush.msra.mxu0 %v3048
      %5672 = vmatpush.msra.mxu0 %v3047
      %5673 = vmatpush.msra.mxu0 %v3046
      %5674 = vmatpush.msra.mxu0 %v3045
      %5675 = vmatpush.msra.mxu0 %v3044
      %5676 = vmatpush.msra.mxu0 %v3043
      %5677 = vmatmul.f32.gmra.mxu0 %v5659
      %v5678 = vpop.f32.mrf.mxu0
      %v5679 = vadd.f32 0.0, %v5678
      %5680 = vdwg.mxu0
      %v5681 = vmax.f32 %v5679, 0.0
      %v5682 = vadd.f32 %v5681, %v4395
      %v5683 = vmul.f32 %v5682, %v5682
      %v5684 = vsel %vm267, %v5683, 0.0
      %5685 = vadd.xlane.f32.xlu0 %v5684
      %v5686 = vpop.xlane.xlu0 %5685
      %v5687 = vadd.f32 %v5686, 1e-06
      %v5688 = vrsqrt.pop %v5687
      %v5689 = vmul.f32 %v5688, %v5687
      %v5690 = vmul.f32 %v5689, %v5688
      %v5691 = vmul.f32 0.5, %v5690
      %v5692 = vsub.f32 1.5, %v5691
      %v5693 = vmul.f32 %v5688, %v5692
      %vm5694 = vweird.f32 %v5687
      %vm5695 = vweird.f32 %v5688
      %vm5696 = vmor %vm5694, %vm5695
      %v5697 = vsel %vm5696, %v5688, %v5693
      %v5698 = vmul.f32 %v5682, %v5697
      %s5699 = sld [smem:[#allocation2]]
      %v5700 = vstv %s5699
      %v5701 = vmul.f32 %v248, %v5700
      %v5702 = vadd.f32 %v5698, %v5701
      %v5703 = vmul.f32 %v5702, %v5702
      %v5704 = vsel %vm267, %v5703, 0.0
      %5705 = vadd.xlane.f32.xlu0 %v5704
      %v5706 = vpop.xlane.xlu0 %5705
      %v5707 = vrsqrt.pop %v5706
      %v5708 = vmul.f32 %v5707, %v5706
      %v5709 = vmul.f32 %v5708, %v5707
      %v5710 = vmul.f32 0.5, %v5709
      %v5711 = vsub.f32 1.5, %v5710
      %v5712 = vmul.f32 %v5707, %v5711
      %vm5713 = vweird.f32 %v5706
      %vm5714 = vweird.f32 %v5707
      %vm5715 = vmor %vm5713, %vm5714
      %v5716 = vsel %vm5715, %v5707, %v5712
      %v5717 = vmul.f32 %v5702, %v5716
      %5718 = vst.msk [vmem:[%s247] sm:$0xff] %vm267, %v5717
      %p5719 = scmp.lt.s32.totalorder %s18, 1
      %s5720 = scalar_select %p5719, %s18, 1
      %s5721 = smul.addr %s5720, 8
      %s5722 = scalar_lea.vmem %s6, %s5721
      // Predicated region
      $region45: #{tpu_custom_call.1} parent=43 // pred_check
        %p5723 = pneg %p167
      $region46: #{tpu_custom_call.1} parent=43 // pred_check_branch
        %5725 = sbr.rel (%p5723) target = $region48
      $region47: #{tpu_custom_call.1} parent=43 // pred_region
        _
      $region48: #{tpu_custom_call.1} parent=43 // pred_fallthru
        _
    $region44: #{tpu_custom_call.1} parent=5 // pred_fallthru
      _
    %p5726 = scmp.le.s32.totalorder 2, %s13
    // Predicated region
    $region49: #{tpu_custom_call.1} parent=5 // pred_check
      %p5727 = pneg %p5726
    $region50: #{tpu_custom_call.1} parent=5 // pred_check_branch
      %5729 = sbr.rel (%p5727) target = $region52
    $region51: #{tpu_custom_call.1} parent=5 // pred_region
      %s5730 = ssub.s32 %s13, 2
      // Predicated region
      $region53: #{tpu_custom_call.1} parent=51 // pred_check
        %p5731 = pneg %p173
      $region54: #{tpu_custom_call.1} parent=51 // pred_check_branch
        %5733 = sbr.rel (%p5731) target = $region56
      $region55: #{tpu_custom_call.1} parent=51 // pred_region
        %p5734 = scmp.lt.s32.totalorder %s19, 1
        %s5735 = scalar_select %p5734, %s19, 1
        %s5736 = smul.addr %s5735, 8
        %s5737 = scalar_lea.vmem %s6, %s5736
      $region56: #{tpu_custom_call.1} parent=51 // pred_fallthru
        _
    $region52: #{tpu_custom_call.1} parent=5 // pred_fallthru
      _
  $region6: #{tpu_custom_call.1} parent=0 // loop_footer
    %s17 = sadd.s32 1, %s13
  $region7: #{tpu_custom_call.1} parent=0 // loop_footer_branch
    %12 = sbr.rel target = $region3
  $region8: #{tpu_custom_call.1} parent=0 // loop_exit
    _

</llo_original>
